<compile_context>
chip_gen: v7x
topology: tpu7x:2x2x1
jax: 0.10.0
libtpu: 0.0.40
codegen_flags: <defaults>
</compile_context>

<pallas_src>
import math

import jax
import jax.numpy as jnp
from jax.experimental import pallas as pl
from jax.experimental.pallas import tpu as pltpu

# (in_features, out_features) of the 10 original Linear layers, forward order.
LAYER_DIMS = [
    (784, 128), (128, 96), (96, 64), (64, 24), (24, 3),      # encoder
    (3, 24), (24, 64), (64, 96), (96, 128), (128, 784),      # decoder
]
NUM_LAYERS = len(LAYER_DIMS)

# After host-side fusion of enc5 (24->3, identity) + dec1 (3->24) into one
# 24->24 layer, the kernel sees 9 layers: relu after all but the last (sigmoid).
NUM_FUSED_LAYERS = 9

IN_DIM = LAYER_DIMS[0][0]      # 784
OUT_DIM = LAYER_DIMS[-1][1]    # 784
LANE = 128
IN_PAD = 7 * LANE              # 896: zero-padded input feature dim
OUT_PAD = 7 * LANE             # 896: zero-padded output feature dim


def autoencoder_kernel(*refs):
    """refs = (x_tile, w0..w8, b0..b8, out_tile). Params are VMEM-resident."""
    x_ref = refs[0]
    w_refs = refs[1:1 + NUM_FUSED_LAYERS]
    b_refs = refs[1 + NUM_FUSED_LAYERS:1 + 2 * NUM_FUSED_LAYERS]
    o_ref = refs[1 + 2 * NUM_FUSED_LAYERS]

    h = x_ref[...]                                  # bf16 tile, fed to MXU as-is
    for i in range(NUM_FUSED_LAYERS):
        # bf16 MXU operands, f32 accumulate.
        z = jnp.dot(h, w_refs[i][...], preferred_element_type=jnp.float32)
        z = z + b_refs[i][...]                      # bias add in f32
        if i == NUM_FUSED_LAYERS - 1:               # dec5 -> sigmoid
            h = jax.nn.sigmoid(z)
        else:                                       # everything else -> relu
            h = jnp.maximum(z, 0.0)
        h = h.astype(jnp.bfloat16)                  # bf16 inter-layer activations
    o_ref[...] = h                                  # bf16 output tile


def _pick_block_b(batch, block_b):
    if block_b is not None:
        return block_b
    # Adaptive default: keep >= 4 grid steps when the batch allows (pipelining
    # depth + 2-TC balance on v7x), cap at 512 rows to amortize per-step and
    # per-layer MXU overheads while staying well inside scoped VMEM.
    return int(min(512, max(128, pl.next_power_of_2(pl.cdiv(max(batch, 1), 4)))))


def autoencoder_forward(x, fused_weights, fused_biases, *,
                        block_b=None, vmem_limit_bytes=None):
    """x: [B, 784] f32/bf16. fused_weights[i]: [in, out] bf16 (feature-padded).
    fused_biases[i]: [1, out] f32. Returns [B, 784] bf16."""
    B = x.shape[0]
    bt = _pick_block_b(B, block_b)
    n_tiles = pl.cdiv(B, bt)
    Bp = n_tiles * bt

    # Cast once on the host side (halves input DMA bytes), pad batch rows to
    # the tile and features 784 -> 896 so every lane tile is full.
    x = x.astype(jnp.bfloat16)
    x = jnp.pad(x, ((0, Bp - B), (0, IN_PAD - IN_DIM)))

    # x / out are tiled over batch; params use constant index_maps so they are
    # fetched once and stay VMEM-resident across all grid steps.
    # (pl.Buffered(1) on the param specs would shave ~0.5 MB more VMEM; skipped
    #  as it is not needed at this footprint.)
    in_specs = [pl.BlockSpec((bt, IN_PAD), lambda i: (i, 0))]
    in_specs += [pl.BlockSpec(w.shape, lambda i: (0, 0)) for w in fused_weights]
    in_specs += [pl.BlockSpec(b.shape, lambda i: (0, 0)) for b in fused_biases]
    out_spec = pl.BlockSpec((bt, OUT_PAD), lambda i: (i, 0))

    out = pl.pallas_call(
        autoencoder_kernel,
        out_shape=jax.ShapeDtypeStruct((Bp, OUT_PAD), jnp.bfloat16),
        grid=(n_tiles,),
        in_specs=in_specs,
        out_specs=out_spec,
        compiler_params=pltpu.CompilerParams(
            dimension_semantics=("parallel",),   # v7x: shard batch over 2 TCs
            vmem_limit_bytes=vmem_limit_bytes,   # only needed for block_b>=1024
        ),
    )(x, *fused_weights, *fused_biases)

    return out[:B, :OUT_DIM]


def init_params(key):
    """Deterministic PyTorch-style init: U(-1/sqrt(fan_in), 1/sqrt(fan_in))."""
    weights, biases = [], []
    for (fan_in, fan_out) in LAYER_DIMS:
        key, kw, kb = jax.random.split(key, 3)
        bound = 1.0 / math.sqrt(fan_in)
        # Stored as [in, out] (transpose of torch's [out, in]) for x @ W.
        w = jax.random.uniform(kw, (fan_in, fan_out), jnp.float32, -bound, bound)
        b = jax.random.uniform(kb, (1, fan_out), jnp.float32, -bound, bound)
        weights.append(w)
        biases.append(b)
    return weights, biases


def prepare_fused_params(weights, biases):
    """Host-side prep: fuse enc5+dec1 (no nonlinearity between), pad the 784-wide
    feature dims to 896, cast W to bf16; biases stay f32."""
    w45 = weights[4] @ weights[5]                     # [24, 3] @ [3, 24] -> [24, 24]
    b45 = biases[4] @ weights[5] + biases[5]          # [1, 24]
    ws = list(weights[:4]) + [w45] + list(weights[6:])
    bs = list(biases[:4]) + [b45] + list(biases[6:])
    # Zero-pad: extra W0 rows pair with the zero-padded x columns; extra W8
    # columns / b8 entries produce sigmoid(0) columns that are sliced off.
    ws[0] = jnp.pad(ws[0], ((0, IN_PAD - IN_DIM), (0, 0)))
    ws[-1] = jnp.pad(ws[-1], ((0, 0), (0, OUT_PAD - OUT_DIM)))
    bs[-1] = jnp.pad(bs[-1], ((0, 0), (0, OUT_PAD - OUT_DIM)))
    ws = [w.astype(jnp.bfloat16) for w in ws]         # bf16 MXU operands
    bs = [b.astype(jnp.float32) for b in bs]          # bias add stays f32
    return ws, bs


def reference_forward(x, weights, biases):
    """Pure-JAX f32 reference of the original 10-layer module."""
    h = x
    for i in range(NUM_LAYERS):
        h = h @ weights[i] + biases[i]
        if i == NUM_LAYERS - 1:
            h = jax.nn.sigmoid(h)
        elif i != 4:                                  # enc5 bottleneck: identity
            h = jnp.maximum(h, 0.0)
    return h


if __name__ == "__main__":
    key = jax.random.PRNGKey(0)
    key, kx = jax.random.split(key)
    # B=300: adaptive tiling picks block_b=128 -> a 3-step batch grid, and the
    # non-multiple batch exercises the row-padding path.
    B = 300
    x = jax.random.uniform(kx, (B, IN_DIM), jnp.float32)  # image-like inputs in [0,1)

    weights, biases = init_params(key)
    fused_w, fused_b = prepare_fused_params(weights, biases)

    out = autoencoder_forward(x, fused_w, fused_b)
    out = jax.block_until_ready(out)

    ref = reference_forward(x, weights, biases)
    assert out.shape == (B, OUT_DIM), out.shape
    # bf16 input/activations/output + enc5/dec1 fusion change rounding slightly
    # vs. the f32 reference; outputs are post-sigmoid in (0,1), so 5e-2 is ample.
    assert jnp.allclose(out.astype(jnp.float32), ref, atol=5e-2, rtol=5e-2), \
        "mismatch vs JAX reference"

    print("KERNEL_OK")
</pallas_src>

<mosaic_0001>
module attributes {stable_mosaic.version = 11 : i64} {
  func.func @autoencoder_kernel(%arg0: i32, %arg1: memref<128x896xbf16, #tpu.memory_space<vmem>>, %arg2: memref<896x128xbf16, #tpu.memory_space<vmem>>, %arg3: memref<128x96xbf16, #tpu.memory_space<vmem>>, %arg4: memref<96x64xbf16, #tpu.memory_space<vmem>>, %arg5: memref<64x24xbf16, #tpu.memory_space<vmem>>, %arg6: memref<24x24xbf16, #tpu.memory_space<vmem>>, %arg7: memref<24x64xbf16, #tpu.memory_space<vmem>>, %arg8: memref<64x96xbf16, #tpu.memory_space<vmem>>, %arg9: memref<96x128xbf16, #tpu.memory_space<vmem>>, %arg10: memref<128x896xbf16, #tpu.memory_space<vmem>>, %arg11: memref<1x128xf32, #tpu.memory_space<vmem>>, %arg12: memref<1x96xf32, #tpu.memory_space<vmem>>, %arg13: memref<1x64xf32, #tpu.memory_space<vmem>>, %arg14: memref<1x24xf32, #tpu.memory_space<vmem>>, %arg15: memref<1x24xf32, #tpu.memory_space<vmem>>, %arg16: memref<1x64xf32, #tpu.memory_space<vmem>>, %arg17: memref<1x96xf32, #tpu.memory_space<vmem>>, %arg18: memref<1x128xf32, #tpu.memory_space<vmem>>, %arg19: memref<1x896xf32, #tpu.memory_space<vmem>>, %arg20: memref<128x896xbf16, #tpu.memory_space<vmem>>) attributes {dimension_semantics = [#tpu.dimension_semantics<parallel>], iteration_bounds = array<i64: 3>, scalar_prefetch = 0 : i64, scratch_operands = 0 : i64, tpu.core_type = #tpu.core_type<tc>, window_params = [{transform_indices = @transform_0, window_bounds = array<i64: 128, 896>}, {pipeline_mode = #tpu.pipeline_mode<synchronous>, transform_indices = @transform_1, window_bounds = array<i64: 896, 128>}, {pipeline_mode = #tpu.pipeline_mode<synchronous>, transform_indices = @transform_2, window_bounds = array<i64: 128, 96>}, {pipeline_mode = #tpu.pipeline_mode<synchronous>, transform_indices = @transform_3, window_bounds = array<i64: 96, 64>}, {pipeline_mode = #tpu.pipeline_mode<synchronous>, transform_indices = @transform_4, window_bounds = array<i64: 64, 24>}, {pipeline_mode = #tpu.pipeline_mode<synchronous>, transform_indices = @transform_5, window_bounds = array<i64: 24, 24>}, {pipeline_mode = #tpu.pipeline_mode<synchronous>, transform_indices = @transform_6, window_bounds = array<i64: 24, 64>}, {pipeline_mode = #tpu.pipeline_mode<synchronous>, transform_indices = @transform_7, window_bounds = array<i64: 64, 96>}, {pipeline_mode = #tpu.pipeline_mode<synchronous>, transform_indices = @transform_8, window_bounds = array<i64: 96, 128>}, {pipeline_mode = #tpu.pipeline_mode<synchronous>, transform_indices = @transform_9, window_bounds = array<i64: 128, 896>}, {pipeline_mode = #tpu.pipeline_mode<synchronous>, transform_indices = @transform_10, window_bounds = array<i64: 1, 128>}, {pipeline_mode = #tpu.pipeline_mode<synchronous>, transform_indices = @transform_11, window_bounds = array<i64: 1, 96>}, {pipeline_mode = #tpu.pipeline_mode<synchronous>, transform_indices = @transform_12, window_bounds = array<i64: 1, 64>}, {pipeline_mode = #tpu.pipeline_mode<synchronous>, transform_indices = @transform_13, window_bounds = array<i64: 1, 24>}, {pipeline_mode = #tpu.pipeline_mode<synchronous>, transform_indices = @transform_14, window_bounds = array<i64: 1, 24>}, {pipeline_mode = #tpu.pipeline_mode<synchronous>, transform_indices = @transform_15, window_bounds = array<i64: 1, 64>}, {pipeline_mode = #tpu.pipeline_mode<synchronous>, transform_indices = @transform_16, window_bounds = array<i64: 1, 96>}, {pipeline_mode = #tpu.pipeline_mode<synchronous>, transform_indices = @transform_17, window_bounds = array<i64: 1, 128>}, {pipeline_mode = #tpu.pipeline_mode<synchronous>, transform_indices = @transform_18, window_bounds = array<i64: 1, 896>}, {transform_indices = @transform_19, window_bounds = array<i64: 128, 896>}]} {
    %c0 = arith.constant 0 : index
    %c0_0 = arith.constant 0 : index
    %0 = vector.load %arg1[%c0, %c0_0] : memref<128x896xbf16, #tpu.memory_space<vmem>>, vector<128x896xbf16>
    %c0_1 = arith.constant 0 : index
    %c0_2 = arith.constant 0 : index
    %1 = vector.load %arg2[%c0_1, %c0_2] : memref<896x128xbf16, #tpu.memory_space<vmem>>, vector<896x128xbf16>
    %cst = arith.constant dense<0.000000e+00> : vector<128x128xf32>
    %2 = tpu.matmul %0, %1, %cst {dimension_numbers = #tpu.dot_dimension_numbers<[1], [0], [0], [1], [0, 0, 1, 1], [], []>} : vector<128x896xbf16>, vector<896x128xbf16>, vector<128x128xf32> -> vector<128x128xf32>
    %c0_3 = arith.constant 0 : index
    %c0_4 = arith.constant 0 : index
    %3 = vector.load %arg11[%c0_3, %c0_4] : memref<1x128xf32, #tpu.memory_space<vmem>>, vector<1x128xf32>
    %4 = vector.broadcast %3 : vector<1x128xf32> to vector<128x128xf32>
    %5 = arith.addf %2, %4 : vector<128x128xf32>
    %cst_5 = arith.constant 0.000000e+00 : f32
    %6 = vector.broadcast %cst_5 : f32 to vector<128x128xf32>
    %7 = arith.maximumf %5, %6 : vector<128x128xf32>
    %8 = arith.truncf %7 : vector<128x128xf32> to vector<128x128xbf16>
    %c0_6 = arith.constant 0 : index
    %c0_7 = arith.constant 0 : index
    %9 = vector.load %arg3[%c0_6, %c0_7] : memref<128x96xbf16, #tpu.memory_space<vmem>>, vector<128x96xbf16>
    %cst_8 = arith.constant dense<0.000000e+00> : vector<128x96xf32>
    %10 = tpu.matmul %8, %9, %cst_8 {dimension_numbers = #tpu.dot_dimension_numbers<[1], [0], [0], [1], [0, 0, 1, 1], [], []>} : vector<128x128xbf16>, vector<128x96xbf16>, vector<128x96xf32> -> vector<128x96xf32>
    %c0_9 = arith.constant 0 : index
    %c0_10 = arith.constant 0 : index
    %11 = vector.load %arg12[%c0_9, %c0_10] : memref<1x96xf32, #tpu.memory_space<vmem>>, vector<1x96xf32>
    %12 = vector.broadcast %11 : vector<1x96xf32> to vector<128x96xf32>
    %13 = arith.addf %10, %12 : vector<128x96xf32>
    %cst_11 = arith.constant 0.000000e+00 : f32
    %14 = vector.broadcast %cst_11 : f32 to vector<128x96xf32>
    %15 = arith.maximumf %13, %14 : vector<128x96xf32>
    %16 = arith.truncf %15 : vector<128x96xf32> to vector<128x96xbf16>
    %c0_12 = arith.constant 0 : index
    %c0_13 = arith.constant 0 : index
    %17 = vector.load %arg4[%c0_12, %c0_13] : memref<96x64xbf16, #tpu.memory_space<vmem>>, vector<96x64xbf16>
    %cst_14 = arith.constant dense<0.000000e+00> : vector<128x64xf32>
    %18 = tpu.matmul %16, %17, %cst_14 {dimension_numbers = #tpu.dot_dimension_numbers<[1], [0], [0], [1], [0, 0, 1, 1], [], []>} : vector<128x96xbf16>, vector<96x64xbf16>, vector<128x64xf32> -> vector<128x64xf32>
    %c0_15 = arith.constant 0 : index
    %c0_16 = arith.constant 0 : index
    %19 = vector.load %arg13[%c0_15, %c0_16] : memref<1x64xf32, #tpu.memory_space<vmem>>, vector<1x64xf32>
    %20 = vector.broadcast %19 : vector<1x64xf32> to vector<128x64xf32>
    %21 = arith.addf %18, %20 : vector<128x64xf32>
    %cst_17 = arith.constant 0.000000e+00 : f32
    %22 = vector.broadcast %cst_17 : f32 to vector<128x64xf32>
    %23 = arith.maximumf %21, %22 : vector<128x64xf32>
    %24 = arith.truncf %23 : vector<128x64xf32> to vector<128x64xbf16>
    %c0_18 = arith.constant 0 : index
    %c0_19 = arith.constant 0 : index
    %25 = vector.load %arg5[%c0_18, %c0_19] : memref<64x24xbf16, #tpu.memory_space<vmem>>, vector<64x24xbf16>
    %cst_20 = arith.constant dense<0.000000e+00> : vector<128x24xf32>
    %26 = tpu.matmul %24, %25, %cst_20 {dimension_numbers = #tpu.dot_dimension_numbers<[1], [0], [0], [1], [0, 0, 1, 1], [], []>} : vector<128x64xbf16>, vector<64x24xbf16>, vector<128x24xf32> -> vector<128x24xf32>
    %c0_21 = arith.constant 0 : index
    %c0_22 = arith.constant 0 : index
    %27 = vector.load %arg14[%c0_21, %c0_22] : memref<1x24xf32, #tpu.memory_space<vmem>>, vector<1x24xf32>
    %28 = vector.broadcast %27 : vector<1x24xf32> to vector<128x24xf32>
    %29 = arith.addf %26, %28 : vector<128x24xf32>
    %cst_23 = arith.constant 0.000000e+00 : f32
    %30 = vector.broadcast %cst_23 : f32 to vector<128x24xf32>
    %31 = arith.maximumf %29, %30 : vector<128x24xf32>
    %32 = arith.truncf %31 : vector<128x24xf32> to vector<128x24xbf16>
    %c0_24 = arith.constant 0 : index
    %c0_25 = arith.constant 0 : index
    %33 = vector.load %arg6[%c0_24, %c0_25] : memref<24x24xbf16, #tpu.memory_space<vmem>>, vector<24x24xbf16>
    %cst_26 = arith.constant dense<0.000000e+00> : vector<128x24xf32>
    %34 = tpu.matmul %32, %33, %cst_26 {dimension_numbers = #tpu.dot_dimension_numbers<[1], [0], [0], [1], [0, 0, 1, 1], [], []>} : vector<128x24xbf16>, vector<24x24xbf16>, vector<128x24xf32> -> vector<128x24xf32>
    %c0_27 = arith.constant 0 : index
    %c0_28 = arith.constant 0 : index
    %35 = vector.load %arg15[%c0_27, %c0_28] : memref<1x24xf32, #tpu.memory_space<vmem>>, vector<1x24xf32>
    %36 = vector.broadcast %35 : vector<1x24xf32> to vector<128x24xf32>
    %37 = arith.addf %34, %36 : vector<128x24xf32>
    %cst_29 = arith.constant 0.000000e+00 : f32
    %38 = vector.broadcast %cst_29 : f32 to vector<128x24xf32>
    %39 = arith.maximumf %37, %38 : vector<128x24xf32>
    %40 = arith.truncf %39 : vector<128x24xf32> to vector<128x24xbf16>
    %c0_30 = arith.constant 0 : index
    %c0_31 = arith.constant 0 : index
    %41 = vector.load %arg7[%c0_30, %c0_31] : memref<24x64xbf16, #tpu.memory_space<vmem>>, vector<24x64xbf16>
    %cst_32 = arith.constant dense<0.000000e+00> : vector<128x64xf32>
    %42 = tpu.matmul %40, %41, %cst_32 {dimension_numbers = #tpu.dot_dimension_numbers<[1], [0], [0], [1], [0, 0, 1, 1], [], []>} : vector<128x24xbf16>, vector<24x64xbf16>, vector<128x64xf32> -> vector<128x64xf32>
    %c0_33 = arith.constant 0 : index
    %c0_34 = arith.constant 0 : index
    %43 = vector.load %arg16[%c0_33, %c0_34] : memref<1x64xf32, #tpu.memory_space<vmem>>, vector<1x64xf32>
    %44 = vector.broadcast %43 : vector<1x64xf32> to vector<128x64xf32>
    %45 = arith.addf %42, %44 : vector<128x64xf32>
    %cst_35 = arith.constant 0.000000e+00 : f32
    %46 = vector.broadcast %cst_35 : f32 to vector<128x64xf32>
    %47 = arith.maximumf %45, %46 : vector<128x64xf32>
    %48 = arith.truncf %47 : vector<128x64xf32> to vector<128x64xbf16>
    %c0_36 = arith.constant 0 : index
    %c0_37 = arith.constant 0 : index
    %49 = vector.load %arg8[%c0_36, %c0_37] : memref<64x96xbf16, #tpu.memory_space<vmem>>, vector<64x96xbf16>
    %cst_38 = arith.constant dense<0.000000e+00> : vector<128x96xf32>
    %50 = tpu.matmul %48, %49, %cst_38 {dimension_numbers = #tpu.dot_dimension_numbers<[1], [0], [0], [1], [0, 0, 1, 1], [], []>} : vector<128x64xbf16>, vector<64x96xbf16>, vector<128x96xf32> -> vector<128x96xf32>
    %c0_39 = arith.constant 0 : index
    %c0_40 = arith.constant 0 : index
    %51 = vector.load %arg17[%c0_39, %c0_40] : memref<1x96xf32, #tpu.memory_space<vmem>>, vector<1x96xf32>
    %52 = vector.broadcast %51 : vector<1x96xf32> to vector<128x96xf32>
    %53 = arith.addf %50, %52 : vector<128x96xf32>
    %cst_41 = arith.constant 0.000000e+00 : f32
    %54 = vector.broadcast %cst_41 : f32 to vector<128x96xf32>
    %55 = arith.maximumf %53, %54 : vector<128x96xf32>
    %56 = arith.truncf %55 : vector<128x96xf32> to vector<128x96xbf16>
    %c0_42 = arith.constant 0 : index
    %c0_43 = arith.constant 0 : index
    %57 = vector.load %arg9[%c0_42, %c0_43] : memref<96x128xbf16, #tpu.memory_space<vmem>>, vector<96x128xbf16>
    %cst_44 = arith.constant dense<0.000000e+00> : vector<128x128xf32>
    %58 = tpu.matmul %56, %57, %cst_44 {dimension_numbers = #tpu.dot_dimension_numbers<[1], [0], [0], [1], [0, 0, 1, 1], [], []>} : vector<128x96xbf16>, vector<96x128xbf16>, vector<128x128xf32> -> vector<128x128xf32>
    %c0_45 = arith.constant 0 : index
    %c0_46 = arith.constant 0 : index
    %59 = vector.load %arg18[%c0_45, %c0_46] : memref<1x128xf32, #tpu.memory_space<vmem>>, vector<1x128xf32>
    %60 = vector.broadcast %59 : vector<1x128xf32> to vector<128x128xf32>
    %61 = arith.addf %58, %60 : vector<128x128xf32>
    %cst_47 = arith.constant 0.000000e+00 : f32
    %62 = vector.broadcast %cst_47 : f32 to vector<128x128xf32>
    %63 = arith.maximumf %61, %62 : vector<128x128xf32>
    %64 = arith.truncf %63 : vector<128x128xf32> to vector<128x128xbf16>
    %c0_48 = arith.constant 0 : index
    %c0_49 = arith.constant 0 : index
    %65 = vector.load %arg10[%c0_48, %c0_49] : memref<128x896xbf16, #tpu.memory_space<vmem>>, vector<128x896xbf16>
    %cst_50 = arith.constant dense<0.000000e+00> : vector<128x896xf32>
    %66 = tpu.matmul %64, %65, %cst_50 {dimension_numbers = #tpu.dot_dimension_numbers<[1], [0], [0], [1], [0, 0, 1, 1], [], []>} : vector<128x128xbf16>, vector<128x896xbf16>, vector<128x896xf32> -> vector<128x896xf32>
    %c0_51 = arith.constant 0 : index
    %c0_52 = arith.constant 0 : index
    %67 = vector.load %arg19[%c0_51, %c0_52] : memref<1x896xf32, #tpu.memory_space<vmem>>, vector<1x896xf32>
    %68 = vector.broadcast %67 : vector<1x896xf32> to vector<128x896xf32>
    %69 = arith.addf %66, %68 : vector<128x896xf32>
    %70 = arith.negf %69 : vector<128x896xf32>
    %71 = math.exp %70 : vector<128x896xf32>
    %cst_53 = arith.constant 1.000000e+00 : f32
    %72 = vector.broadcast %cst_53 : f32 to vector<128x896xf32>
    %73 = arith.addf %72, %71 : vector<128x896xf32>
    %74 = arith.divf %72, %73 : vector<128x896xf32>
    %75 = arith.truncf %74 : vector<128x896xf32> to vector<128x896xbf16>
    %c0_54 = arith.constant 0 : index
    %c0_55 = arith.constant 0 : index
    %76 = vector.load %arg20[%c0_54, %c0_55] : memref<128x896xbf16, #tpu.memory_space<vmem>>, vector<128x896xbf16>
    tpu.vector_store %arg20[%c0_54, %c0_55], %75 {strides = array<i32>} : memref<128x896xbf16, #tpu.memory_space<vmem>>, vector<128x896xbf16>,
    return
  }
  func.func @transform_0(%arg0: i32) -> (i32, i32) {
    %c0_i32 = arith.constant 0 : i32
    %c0_i32_0 = arith.constant 0 : i32
    return %arg0, %c0_i32 : i32, i32
  }
  func.func @transform_1(%arg0: i32) -> (i32, i32) {
    %c0_i32 = arith.constant 0 : i32
    %c0_i32_0 = arith.constant 0 : i32
    %c0_i32_1 = arith.constant 0 : i32
    return %c0_i32, %c0_i32_0 : i32, i32
  }
  func.func @transform_2(%arg0: i32) -> (i32, i32) {
    %c0_i32 = arith.constant 0 : i32
    %c0_i32_0 = arith.constant 0 : i32
    %c0_i32_1 = arith.constant 0 : i32
    return %c0_i32, %c0_i32_0 : i32, i32
  }
  func.func @transform_3(%arg0: i32) -> (i32, i32) {
    %c0_i32 = arith.constant 0 : i32
    %c0_i32_0 = arith.constant 0 : i32
    %c0_i32_1 = arith.constant 0 : i32
    return %c0_i32, %c0_i32_0 : i32, i32
  }
  func.func @transform_4(%arg0: i32) -> (i32, i32) {
    %c0_i32 = arith.constant 0 : i32
    %c0_i32_0 = arith.constant 0 : i32
    %c0_i32_1 = arith.constant 0 : i32
    return %c0_i32, %c0_i32_0 : i32, i32
  }
  func.func @transform_5(%arg0: i32) -> (i32, i32) {
    %c0_i32 = arith.constant 0 : i32
    %c0_i32_0 = arith.constant 0 : i32
    %c0_i32_1 = arith.constant 0 : i32
    return %c0_i32, %c0_i32_0 : i32, i32
  }
  func.func @transform_6(%arg0: i32) -> (i32, i32) {
    %c0_i32 = arith.constant 0 : i32
    %c0_i32_0 = arith.constant 0 : i32
    %c0_i32_1 = arith.constant 0 : i32
    return %c0_i32, %c0_i32_0 : i32, i32
  }
  func.func @transform_7(%arg0: i32) -> (i32, i32) {
    %c0_i32 = arith.constant 0 : i32
    %c0_i32_0 = arith.constant 0 : i32
    %c0_i32_1 = arith.constant 0 : i32
    return %c0_i32, %c0_i32_0 : i32, i32
  }
  func.func @transform_8(%arg0: i32) -> (i32, i32) {
    %c0_i32 = arith.constant 0 : i32
    %c0_i32_0 = arith.constant 0 : i32
    %c0_i32_1 = arith.constant 0 : i32
    return %c0_i32, %c0_i32_0 : i32, i32
  }
  func.func @transform_9(%arg0: i32) -> (i32, i32) {
    %c0_i32 = arith.constant 0 : i32
    %c0_i32_0 = arith.constant 0 : i32
    %c0_i32_1 = arith.constant 0 : i32
    return %c0_i32, %c0_i32_0 : i32, i32
  }
  func.func @transform_10(%arg0: i32) -> (i32, i32) {
    %c0_i32 = arith.constant 0 : i32
    %c0_i32_0 = arith.constant 0 : i32
    %c0_i32_1 = arith.constant 0 : i32
    return %c0_i32, %c0_i32_0 : i32, i32
  }
  func.func @transform_11(%arg0: i32) -> (i32, i32) {
    %c0_i32 = arith.constant 0 : i32
    %c0_i32_0 = arith.constant 0 : i32
    %c0_i32_1 = arith.constant 0 : i32
    return %c0_i32, %c0_i32_0 : i32, i32
  }
  func.func @transform_12(%arg0: i32) -> (i32, i32) {
    %c0_i32 = arith.constant 0 : i32
    %c0_i32_0 = arith.constant 0 : i32
    %c0_i32_1 = arith.constant 0 : i32
    return %c0_i32, %c0_i32_0 : i32, i32
  }
  func.func @transform_13(%arg0: i32) -> (i32, i32) {
    %c0_i32 = arith.constant 0 : i32
    %c0_i32_0 = arith.constant 0 : i32
    %c0_i32_1 = arith.constant 0 : i32
    return %c0_i32, %c0_i32_0 : i32, i32
  }
  func.func @transform_14(%arg0: i32) -> (i32, i32) {
    %c0_i32 = arith.constant 0 : i32
    %c0_i32_0 = arith.constant 0 : i32
    %c0_i32_1 = arith.constant 0 : i32
    return %c0_i32, %c0_i32_0 : i32, i32
  }
  func.func @transform_15(%arg0: i32) -> (i32, i32) {
    %c0_i32 = arith.constant 0 : i32
    %c0_i32_0 = arith.constant 0 : i32
    %c0_i32_1 = arith.constant 0 : i32
    return %c0_i32, %c0_i32_0 : i32, i32
  }
  func.func @transform_16(%arg0: i32) -> (i32, i32) {
    %c0_i32 = arith.constant 0 : i32
    %c0_i32_0 = arith.constant 0 : i32
    %c0_i32_1 = arith.constant 0 : i32
    return %c0_i32, %c0_i32_0 : i32, i32
  }
  func.func @transform_17(%arg0: i32) -> (i32, i32) {
    %c0_i32 = arith.constant 0 : i32
    %c0_i32_0 = arith.constant 0 : i32
    %c0_i32_1 = arith.constant 0 : i32
    return %c0_i32, %c0_i32_0 : i32, i32
  }
  func.func @transform_18(%arg0: i32) -> (i32, i32) {
    %c0_i32 = arith.constant 0 : i32
    %c0_i32_0 = arith.constant 0 : i32
    %c0_i32_1 = arith.constant 0 : i32
    return %c0_i32, %c0_i32_0 : i32, i32
  }
  func.func @transform_19(%arg0: i32) -> (i32, i32) {
    %c0_i32 = arith.constant 0 : i32
    %c0_i32_0 = arith.constant 0 : i32
    return %arg0, %c0_i32 : i32, i32
  }
}

</mosaic_0001>

<llo_original>
// kernel: tpu_custom_call.1
$region0: #{tpu_custom_call.1}
  #allocation0 [shape = 'u32[]', space=smem, size = 0x4, offset = 0x4, fixed_abs, tag = 'smem constant byte address 0x4 - core index']
  #allocation1 [shape = 'u32[144,128]{1,0:T(1,128)}', space=vmem, size = 0x12000, scoped, tag = 'internal scratch']
  %s0 = inlined_call_operand.hbm [shape: bf16[384,896], index: 0, kind: input, shape index: {}]
  %s1 = inlined_call_operand.hbm [shape: bf16[896,128], index: 1, kind: input, shape index: {}]
  %s2 = inlined_call_operand.vmem [shape: bf16[128,96], index: 2, kind: input, shape index: {}]
  %s3 = inlined_call_operand.vmem [shape: bf16[96,64], index: 3, kind: input, shape index: {}]
  %s4 = inlined_call_operand.vmem [shape: bf16[64,24], index: 4, kind: input, shape index: {}]
  %s5 = inlined_call_operand.vmem [shape: bf16[24,24], index: 5, kind: input, shape index: {}]
  %s6 = inlined_call_operand.vmem [shape: bf16[24,64], index: 6, kind: input, shape index: {}]
  %s7 = inlined_call_operand.vmem [shape: bf16[64,96], index: 7, kind: input, shape index: {}]
  %s8 = inlined_call_operand.vmem [shape: bf16[96,128], index: 8, kind: input, shape index: {}]
  %s9 = inlined_call_operand.hbm [shape: bf16[128,896], index: 9, kind: input, shape index: {}]
  %s10 = inlined_call_operand.vmem [shape: f32[1,128], index: 10, kind: input, shape index: {}]
  %s11 = inlined_call_operand.vmem [shape: f32[1,96], index: 11, kind: input, shape index: {}]
  %s12 = inlined_call_operand.vmem [shape: f32[1,64], index: 12, kind: input, shape index: {}]
  %s13 = inlined_call_operand.vmem [shape: f32[1,24], index: 13, kind: input, shape index: {}]
  %s14 = inlined_call_operand.vmem [shape: f32[1,24], index: 14, kind: input, shape index: {}]
  %s15 = inlined_call_operand.vmem [shape: f32[1,64], index: 15, kind: input, shape index: {}]
  %s16 = inlined_call_operand.vmem [shape: f32[1,96], index: 16, kind: input, shape index: {}]
  %s17 = inlined_call_operand.vmem [shape: f32[1,128], index: 17, kind: input, shape index: {}]
  %s18 = inlined_call_operand.vmem [shape: f32[1,896], index: 18, kind: input, shape index: {}]
  %s19 = inlined_call_operand.hbm [shape: bf16[384,896], index: 19, kind: output, shape index: {}]
  %s20 = sld [smem:[#allocation0]]
  $region121: #{tpu_custom_call.1} parent=0
    _
  %s22 = ssub.s32 1, %s20
  %s23 = scalar_select 0, %s22, %s20
  $region1: #{tpu_custom_call.1} parent=0
    #allocation2 [shape = 'u8[458752]{0}', space=vmem, size = 0x70000, scoped, tag = 'input window, operand 0']
    #allocation3 [shape = 's32[2]{0}', space=sflag, size = 0x8, scoped, tag = 'scoped memory for tpu_custom_call.1']
    #allocation4 [shape = 's32[2]{0}', space=sflag, size = 0x8, scoped, tag = 'scoped memory for tpu_custom_call.1']
    #allocation5 [shape = 'u8[229376]{0}', space=vmem, size = 0x38000, scoped, tag = 'input window, operand 1, single buffered']
    #allocation6 [shape = 's32[1]{0}', space=sflag, size = 0x4, scoped, tag = 'scoped memory for tpu_custom_call.1']
    #allocation7 [shape = 'u8[229376]{0}', space=vmem, size = 0x38000, scoped, tag = 'input window, operand 9, single buffered']
    #allocation8 [shape = 'u8[458752]{0}', space=vmem, size = 0x70000, scoped, tag = 'output window, operand 0']
    %24 = vsyncpa [#allocation3], 0
    %s25 = scalar_lea.sflag [#allocation3], 1
    %26 = vsyncpa %s25, 0
    %27 = vsyncpa [#allocation6], 0
    %28 = vsyncpa [#allocation4], 0
    %s29 = scalar_lea.sflag [#allocation4], 1
    %30 = vsyncpa %s29, 0
    loop: start=0, step=1, limit=5
    $region2: #{tpu_custom_call.1} parent=1 // loop_pre_header
      _
    $region3: #{tpu_custom_call.1} parent=1 // loop_header
      %s32 = sphi 0, %s36
      %p33 = scmp.ge.s32.totalorder %s32, 5
      %s42 = sphi 0, %s44
      %s45 = sphi 0, %s42
      %s46 = sphi 0, %s45
      %s62 = sphi 0, %s46
      %s66 = sphi 0, %s66
      %s68 = sphi 0, %s66
      %s69 = sphi 0, %s68
      %s83 = sphi 0, %s69
      %s87 = sphi 0, %s87
      %s89 = sphi 0, %s87
      %s90 = sphi 0, %s89
      %s104 = sphi 0, %s90
      %s108 = sphi 0, %s108
      %s110 = sphi 0, %s108
      %s111 = sphi 0, %s110
      %s125 = sphi 0, %s111
      %s129 = sphi 0, %s129
      %s131 = sphi 0, %s129
      %s132 = sphi 0, %s131
      %s146 = sphi 0, %s132
      %s150 = sphi 0, %s150
      %s152 = sphi 0, %s150
      %s153 = sphi 0, %s152
      %s167 = sphi 0, %s153
      %s171 = sphi 0, %s171
      %s173 = sphi 0, %s171
      %s174 = sphi 0, %s173
      %s188 = sphi 0, %s174
      %s192 = sphi 0, %s192
      %s194 = sphi 0, %s192
      %s195 = sphi 0, %s194
      %s209 = sphi 0, %s195
      %s213 = sphi 0, %s213
      %s215 = sphi 0, %s213
      %s216 = sphi 0, %s215
      %s230 = sphi 0, %s216
      %s234 = sphi 0, %s234
      %s236 = sphi 0, %s234
      %s237 = sphi 0, %s236
      %s251 = sphi 0, %s237
      %s255 = sphi 0, %s255
      %s257 = sphi 0, %s255
      %s258 = sphi 0, %s257
      %s272 = sphi 0, %s258
      %s276 = sphi 0, %s276
      %s278 = sphi 0, %s276
      %s279 = sphi 0, %s278
      %s293 = sphi 0, %s279
      %s297 = sphi 0, %s297
      %s299 = sphi 0, %s297
      %s300 = sphi 0, %s299
      %s314 = sphi 0, %s300
      %s318 = sphi 0, %s318
      %s320 = sphi 0, %s318
      %s321 = sphi 0, %s320
      %s335 = sphi 0, %s321
      %s339 = sphi 0, %s339
      %s341 = sphi 0, %s339
      %s342 = sphi 0, %s341
      %s356 = sphi 0, %s342
      %s360 = sphi 0, %s360
      %s362 = sphi 0, %s360
      %s363 = sphi 0, %s362
      %s377 = sphi 0, %s363
      %s381 = sphi 0, %s381
      %s383 = sphi 0, %s381
      %s384 = sphi 0, %s383
      %s398 = sphi 0, %s384
      %s402 = sphi 0, %s402
      %s404 = sphi 0, %s402
      %s405 = sphi 0, %s404
      %s419 = sphi 0, %s405
      %s423 = sphi 0, %s423
      %s425 = sphi 0, %s423
      %s426 = sphi 0, %s425
      %s440 = sphi 0, %s426
      %s446 = sphi 0, %s448
      %s449 = sphi 0, %s446
      %s450 = sphi 0, %s449
      %s466 = sphi 0, %s450
    $region4: #{tpu_custom_call.1} parent=1 // loop_header_branch
      %35 = sbr.rel (%p33) target = $region8
    $region5: #{tpu_custom_call.1} parent=1 // loop_body
      %s37 = ssub.s32 %s32, 1
      %s38 = ssub.s32 %s32, 2
      %s39 = sadd.s32 %s32, 1
      %s40 = ssub.s32 %s32, %s39
      %p41 = scmp.eq.s32.totalorder %s40, 0
      %s43 = sadd.s32 %s42, 1
      %s44 = scalar_select %p41, %s42, %s43
      %p47 = pneg %p41
      %p48 = scmp.eq.s32.totalorder %s32, 2
      %p49 = por %p47, %p48
      %p50 = scmp.ne.s32.totalorder %s42, %s45
      %p51 = scmp.eq.s32.totalorder %s32, 0
      %p52 = por %p50, %p51
      %p53 = scmp.ne.s32.totalorder %s42, %s45
      %p54 = scmp.eq.s32.totalorder %s37, 2
      %p55 = por %p53, %p54
      %p56 = scmp.ne.s32.totalorder %s45, %s46
      %p57 = scmp.eq.s32.totalorder %s37, 0
      %p58 = por %p56, %p57
      %p59 = scmp.ne.s32.totalorder %s45, %s46
      %p60 = scmp.eq.s32.totalorder %s38, 2
      %p61 = por %p59, %p60
      %p63 = scmp.ne.s32.totalorder %s46, %s62
      %p64 = scmp.eq.s32.totalorder %s38, 0
      %p65 = por %p63, %p64
      %s67 = sadd.s32 %s66, 1
      %p70 = scmp.eq.s32.totalorder %s32, 2
      %p71 = scmp.ne.s32.totalorder %s66, %s68
      %p72 = scmp.eq.s32.totalorder %s32, 0
      %p73 = por %p71, %p72
      %p74 = scmp.ne.s32.totalorder %s66, %s68
      %p75 = scmp.eq.s32.totalorder %s37, 2
      %p76 = por %p74, %p75
      %p77 = scmp.ne.s32.totalorder %s68, %s69
      %p78 = scmp.eq.s32.totalorder %s37, 0
      %p79 = por %p77, %p78
      %p80 = scmp.ne.s32.totalorder %s68, %s69
      %p81 = scmp.eq.s32.totalorder %s38, 2
      %p82 = por %p80, %p81
      %p84 = scmp.ne.s32.totalorder %s69, %s83
      %p85 = scmp.eq.s32.totalorder %s38, 0
      %p86 = por %p84, %p85
      %s88 = sadd.s32 %s87, 1
      %p91 = scmp.eq.s32.totalorder %s32, 2
      %p92 = scmp.ne.s32.totalorder %s87, %s89
      %p93 = scmp.eq.s32.totalorder %s32, 0
      %p94 = por %p92, %p93
      %p95 = scmp.ne.s32.totalorder %s87, %s89
      %p96 = scmp.eq.s32.totalorder %s37, 2
      %p97 = por %p95, %p96
      %p98 = scmp.ne.s32.totalorder %s89, %s90
      %p99 = scmp.eq.s32.totalorder %s37, 0
      %p100 = por %p98, %p99
      %p101 = scmp.ne.s32.totalorder %s89, %s90
      %p102 = scmp.eq.s32.totalorder %s38, 2
      %p103 = por %p101, %p102
      %p105 = scmp.ne.s32.totalorder %s90, %s104
      %p106 = scmp.eq.s32.totalorder %s38, 0
      %p107 = por %p105, %p106
      %s109 = sadd.s32 %s108, 1
      %p112 = scmp.eq.s32.totalorder %s32, 2
      %p113 = scmp.ne.s32.totalorder %s108, %s110
      %p114 = scmp.eq.s32.totalorder %s32, 0
      %p115 = por %p113, %p114
      %p116 = scmp.ne.s32.totalorder %s108, %s110
      %p117 = scmp.eq.s32.totalorder %s37, 2
      %p118 = por %p116, %p117
      %p119 = scmp.ne.s32.totalorder %s110, %s111
      %p120 = scmp.eq.s32.totalorder %s37, 0
      %p121 = por %p119, %p120
      %p122 = scmp.ne.s32.totalorder %s110, %s111
      %p123 = scmp.eq.s32.totalorder %s38, 2
      %p124 = por %p122, %p123
      %p126 = scmp.ne.s32.totalorder %s111, %s125
      %p127 = scmp.eq.s32.totalorder %s38, 0
      %p128 = por %p126, %p127
      %s130 = sadd.s32 %s129, 1
      %p133 = scmp.eq.s32.totalorder %s32, 2
      %p134 = scmp.ne.s32.totalorder %s129, %s131
      %p135 = scmp.eq.s32.totalorder %s32, 0
      %p136 = por %p134, %p135
      %p137 = scmp.ne.s32.totalorder %s129, %s131
      %p138 = scmp.eq.s32.totalorder %s37, 2
      %p139 = por %p137, %p138
      %p140 = scmp.ne.s32.totalorder %s131, %s132
      %p141 = scmp.eq.s32.totalorder %s37, 0
      %p142 = por %p140, %p141
      %p143 = scmp.ne.s32.totalorder %s131, %s132
      %p144 = scmp.eq.s32.totalorder %s38, 2
      %p145 = por %p143, %p144
      %p147 = scmp.ne.s32.totalorder %s132, %s146
      %p148 = scmp.eq.s32.totalorder %s38, 0
      %p149 = por %p147, %p148
      %s151 = sadd.s32 %s150, 1
      %p154 = scmp.eq.s32.totalorder %s32, 2
      %p155 = scmp.ne.s32.totalorder %s150, %s152
      %p156 = scmp.eq.s32.totalorder %s32, 0
      %p157 = por %p155, %p156
      %p158 = scmp.ne.s32.totalorder %s150, %s152
      %p159 = scmp.eq.s32.totalorder %s37, 2
      %p160 = por %p158, %p159
      %p161 = scmp.ne.s32.totalorder %s152, %s153
      %p162 = scmp.eq.s32.totalorder %s37, 0
      %p163 = por %p161, %p162
      %p164 = scmp.ne.s32.totalorder %s152, %s153
      %p165 = scmp.eq.s32.totalorder %s38, 2
      %p166 = por %p164, %p165
      %p168 = scmp.ne.s32.totalorder %s153, %s167
      %p169 = scmp.eq.s32.totalorder %s38, 0
      %p170 = por %p168, %p169
      %s172 = sadd.s32 %s171, 1
      %p175 = scmp.eq.s32.totalorder %s32, 2
      %p176 = scmp.ne.s32.totalorder %s171, %s173
      %p177 = scmp.eq.s32.totalorder %s32, 0
      %p178 = por %p176, %p177
      %p179 = scmp.ne.s32.totalorder %s171, %s173
      %p180 = scmp.eq.s32.totalorder %s37, 2
      %p181 = por %p179, %p180
      %p182 = scmp.ne.s32.totalorder %s173, %s174
      %p183 = scmp.eq.s32.totalorder %s37, 0
      %p184 = por %p182, %p183
      %p185 = scmp.ne.s32.totalorder %s173, %s174
      %p186 = scmp.eq.s32.totalorder %s38, 2
      %p187 = por %p185, %p186
      %p189 = scmp.ne.s32.totalorder %s174, %s188
      %p190 = scmp.eq.s32.totalorder %s38, 0
      %p191 = por %p189, %p190
      %s193 = sadd.s32 %s192, 1
      %p196 = scmp.eq.s32.totalorder %s32, 2
      %p197 = scmp.ne.s32.totalorder %s192, %s194
      %p198 = scmp.eq.s32.totalorder %s32, 0
      %p199 = por %p197, %p198
      %p200 = scmp.ne.s32.totalorder %s192, %s194
      %p201 = scmp.eq.s32.totalorder %s37, 2
      %p202 = por %p200, %p201
      %p203 = scmp.ne.s32.totalorder %s194, %s195
      %p204 = scmp.eq.s32.totalorder %s37, 0
      %p205 = por %p203, %p204
      %p206 = scmp.ne.s32.totalorder %s194, %s195
      %p207 = scmp.eq.s32.totalorder %s38, 2
      %p208 = por %p206, %p207
      %p210 = scmp.ne.s32.totalorder %s195, %s209
      %p211 = scmp.eq.s32.totalorder %s38, 0
      %p212 = por %p210, %p211
      %s214 = sadd.s32 %s213, 1
      %p217 = scmp.eq.s32.totalorder %s32, 2
      %p218 = scmp.ne.s32.totalorder %s213, %s215
      %p219 = scmp.eq.s32.totalorder %s32, 0
      %p220 = por %p218, %p219
      %p221 = scmp.ne.s32.totalorder %s213, %s215
      %p222 = scmp.eq.s32.totalorder %s37, 2
      %p223 = por %p221, %p222
      %p224 = scmp.ne.s32.totalorder %s215, %s216
      %p225 = scmp.eq.s32.totalorder %s37, 0
      %p226 = por %p224, %p225
      %p227 = scmp.ne.s32.totalorder %s215, %s216
      %p228 = scmp.eq.s32.totalorder %s38, 2
      %p229 = por %p227, %p228
      %p231 = scmp.ne.s32.totalorder %s216, %s230
      %p232 = scmp.eq.s32.totalorder %s38, 0
      %p233 = por %p231, %p232
      %s235 = sadd.s32 %s234, 1
      %p238 = scmp.eq.s32.totalorder %s32, 2
      %p239 = scmp.ne.s32.totalorder %s234, %s236
      %p240 = scmp.eq.s32.totalorder %s32, 0
      %p241 = por %p239, %p240
      %p242 = scmp.ne.s32.totalorder %s234, %s236
      %p243 = scmp.eq.s32.totalorder %s37, 2
      %p244 = por %p242, %p243
      %p245 = scmp.ne.s32.totalorder %s236, %s237
      %p246 = scmp.eq.s32.totalorder %s37, 0
      %p247 = por %p245, %p246
      %p248 = scmp.ne.s32.totalorder %s236, %s237
      %p249 = scmp.eq.s32.totalorder %s38, 2
      %p250 = por %p248, %p249
      %p252 = scmp.ne.s32.totalorder %s237, %s251
      %p253 = scmp.eq.s32.totalorder %s38, 0
      %p254 = por %p252, %p253
      %s256 = sadd.s32 %s255, 1
      %p259 = scmp.eq.s32.totalorder %s32, 2
      %p260 = scmp.ne.s32.totalorder %s255, %s257
      %p261 = scmp.eq.s32.totalorder %s32, 0
      %p262 = por %p260, %p261
      %p263 = scmp.ne.s32.totalorder %s255, %s257
      %p264 = scmp.eq.s32.totalorder %s37, 2
      %p265 = por %p263, %p264
      %p266 = scmp.ne.s32.totalorder %s257, %s258
      %p267 = scmp.eq.s32.totalorder %s37, 0
      %p268 = por %p266, %p267
      %p269 = scmp.ne.s32.totalorder %s257, %s258
      %p270 = scmp.eq.s32.totalorder %s38, 2
      %p271 = por %p269, %p270
      %p273 = scmp.ne.s32.totalorder %s258, %s272
      %p274 = scmp.eq.s32.totalorder %s38, 0
      %p275 = por %p273, %p274
      %s277 = sadd.s32 %s276, 1
      %p280 = scmp.eq.s32.totalorder %s32, 2
      %p281 = scmp.ne.s32.totalorder %s276, %s278
      %p282 = scmp.eq.s32.totalorder %s32, 0
      %p283 = por %p281, %p282
      %p284 = scmp.ne.s32.totalorder %s276, %s278
      %p285 = scmp.eq.s32.totalorder %s37, 2
      %p286 = por %p284, %p285
      %p287 = scmp.ne.s32.totalorder %s278, %s279
      %p288 = scmp.eq.s32.totalorder %s37, 0
      %p289 = por %p287, %p288
      %p290 = scmp.ne.s32.totalorder %s278, %s279
      %p291 = scmp.eq.s32.totalorder %s38, 2
      %p292 = por %p290, %p291
      %p294 = scmp.ne.s32.totalorder %s279, %s293
      %p295 = scmp.eq.s32.totalorder %s38, 0
      %p296 = por %p294, %p295
      %s298 = sadd.s32 %s297, 1
      %p301 = scmp.eq.s32.totalorder %s32, 2
      %p302 = scmp.ne.s32.totalorder %s297, %s299
      %p303 = scmp.eq.s32.totalorder %s32, 0
      %p304 = por %p302, %p303
      %p305 = scmp.ne.s32.totalorder %s297, %s299
      %p306 = scmp.eq.s32.totalorder %s37, 2
      %p307 = por %p305, %p306
      %p308 = scmp.ne.s32.totalorder %s299, %s300
      %p309 = scmp.eq.s32.totalorder %s37, 0
      %p310 = por %p308, %p309
      %p311 = scmp.ne.s32.totalorder %s299, %s300
      %p312 = scmp.eq.s32.totalorder %s38, 2
      %p313 = por %p311, %p312
      %p315 = scmp.ne.s32.totalorder %s300, %s314
      %p316 = scmp.eq.s32.totalorder %s38, 0
      %p317 = por %p315, %p316
      %s319 = sadd.s32 %s318, 1
      %p322 = scmp.eq.s32.totalorder %s32, 2
      %p323 = scmp.ne.s32.totalorder %s318, %s320
      %p324 = scmp.eq.s32.totalorder %s32, 0
      %p325 = por %p323, %p324
      %p326 = scmp.ne.s32.totalorder %s318, %s320
      %p327 = scmp.eq.s32.totalorder %s37, 2
      %p328 = por %p326, %p327
      %p329 = scmp.ne.s32.totalorder %s320, %s321
      %p330 = scmp.eq.s32.totalorder %s37, 0
      %p331 = por %p329, %p330
      %p332 = scmp.ne.s32.totalorder %s320, %s321
      %p333 = scmp.eq.s32.totalorder %s38, 2
      %p334 = por %p332, %p333
      %p336 = scmp.ne.s32.totalorder %s321, %s335
      %p337 = scmp.eq.s32.totalorder %s38, 0
      %p338 = por %p336, %p337
      %s340 = sadd.s32 %s339, 1
      %p343 = scmp.eq.s32.totalorder %s32, 2
      %p344 = scmp.ne.s32.totalorder %s339, %s341
      %p345 = scmp.eq.s32.totalorder %s32, 0
      %p346 = por %p344, %p345
      %p347 = scmp.ne.s32.totalorder %s339, %s341
      %p348 = scmp.eq.s32.totalorder %s37, 2
      %p349 = por %p347, %p348
      %p350 = scmp.ne.s32.totalorder %s341, %s342
      %p351 = scmp.eq.s32.totalorder %s37, 0
      %p352 = por %p350, %p351
      %p353 = scmp.ne.s32.totalorder %s341, %s342
      %p354 = scmp.eq.s32.totalorder %s38, 2
      %p355 = por %p353, %p354
      %p357 = scmp.ne.s32.totalorder %s342, %s356
      %p358 = scmp.eq.s32.totalorder %s38, 0
      %p359 = por %p357, %p358
      %s361 = sadd.s32 %s360, 1
      %p364 = scmp.eq.s32.totalorder %s32, 2
      %p365 = scmp.ne.s32.totalorder %s360, %s362
      %p366 = scmp.eq.s32.totalorder %s32, 0
      %p367 = por %p365, %p366
      %p368 = scmp.ne.s32.totalorder %s360, %s362
      %p369 = scmp.eq.s32.totalorder %s37, 2
      %p370 = por %p368, %p369
      %p371 = scmp.ne.s32.totalorder %s362, %s363
      %p372 = scmp.eq.s32.totalorder %s37, 0
      %p373 = por %p371, %p372
      %p374 = scmp.ne.s32.totalorder %s362, %s363
      %p375 = scmp.eq.s32.totalorder %s38, 2
      %p376 = por %p374, %p375
      %p378 = scmp.ne.s32.totalorder %s363, %s377
      %p379 = scmp.eq.s32.totalorder %s38, 0
      %p380 = por %p378, %p379
      %s382 = sadd.s32 %s381, 1
      %p385 = scmp.eq.s32.totalorder %s32, 2
      %p386 = scmp.ne.s32.totalorder %s381, %s383
      %p387 = scmp.eq.s32.totalorder %s32, 0
      %p388 = por %p386, %p387
      %p389 = scmp.ne.s32.totalorder %s381, %s383
      %p390 = scmp.eq.s32.totalorder %s37, 2
      %p391 = por %p389, %p390
      %p392 = scmp.ne.s32.totalorder %s383, %s384
      %p393 = scmp.eq.s32.totalorder %s37, 0
      %p394 = por %p392, %p393
      %p395 = scmp.ne.s32.totalorder %s383, %s384
      %p396 = scmp.eq.s32.totalorder %s38, 2
      %p397 = por %p395, %p396
      %p399 = scmp.ne.s32.totalorder %s384, %s398
      %p400 = scmp.eq.s32.totalorder %s38, 0
      %p401 = por %p399, %p400
      %s403 = sadd.s32 %s402, 1
      %p406 = scmp.eq.s32.totalorder %s32, 2
      %p407 = scmp.ne.s32.totalorder %s402, %s404
      %p408 = scmp.eq.s32.totalorder %s32, 0
      %p409 = por %p407, %p408
      %p410 = scmp.ne.s32.totalorder %s402, %s404
      %p411 = scmp.eq.s32.totalorder %s37, 2
      %p412 = por %p410, %p411
      %p413 = scmp.ne.s32.totalorder %s404, %s405
      %p414 = scmp.eq.s32.totalorder %s37, 0
      %p415 = por %p413, %p414
      %p416 = scmp.ne.s32.totalorder %s404, %s405
      %p417 = scmp.eq.s32.totalorder %s38, 2
      %p418 = por %p416, %p417
      %p420 = scmp.ne.s32.totalorder %s405, %s419
      %p421 = scmp.eq.s32.totalorder %s38, 0
      %p422 = por %p420, %p421
      %s424 = sadd.s32 %s423, 1
      %p427 = scmp.eq.s32.totalorder %s32, 2
      %p428 = scmp.ne.s32.totalorder %s423, %s425
      %p429 = scmp.eq.s32.totalorder %s32, 0
      %p430 = por %p428, %p429
      %p431 = scmp.ne.s32.totalorder %s423, %s425
      %p432 = scmp.eq.s32.totalorder %s37, 2
      %p433 = por %p431, %p432
      %p434 = scmp.ne.s32.totalorder %s425, %s426
      %p435 = scmp.eq.s32.totalorder %s37, 0
      %p436 = por %p434, %p435
      %p437 = scmp.ne.s32.totalorder %s425, %s426
      %p438 = scmp.eq.s32.totalorder %s38, 2
      %p439 = por %p437, %p438
      %p441 = scmp.ne.s32.totalorder %s426, %s440
      %p442 = scmp.eq.s32.totalorder %s38, 0
      %p443 = por %p441, %p442
      %s444 = ssub.s32 %s32, %s39
      %p445 = scmp.eq.s32.totalorder %s444, 0
      %s447 = sadd.s32 %s446, 1
      %s448 = scalar_select %p445, %s446, %s447
      %p451 = pneg %p445
      %p452 = scmp.eq.s32.totalorder %s32, 2
      %p453 = por %p451, %p452
      %p454 = scmp.ne.s32.totalorder %s446, %s449
      %p455 = scmp.eq.s32.totalorder %s32, 0
      %p456 = por %p454, %p455
      %p457 = scmp.ne.s32.totalorder %s446, %s449
      %p458 = scmp.eq.s32.totalorder %s37, 2
      %p459 = por %p457, %p458
      %p460 = scmp.ne.s32.totalorder %s449, %s450
      %p461 = scmp.eq.s32.totalorder %s37, 0
      %p462 = por %p460, %p461
      %p463 = scmp.ne.s32.totalorder %s449, %s450
      %p464 = scmp.eq.s32.totalorder %s38, 2
      %p465 = por %p463, %p464
      %p467 = scmp.ne.s32.totalorder %s450, %s466
      %p468 = scmp.eq.s32.totalorder %s38, 0
      %p469 = por %p467, %p468
      %p470 = scmp.le.s32.totalorder 1, %s32
      %p471 = scmp.lt.s32.totalorder %s32, 4
      %p472 = pnand %p470, %p471
      %p473 = pneg %p472
      // Predicated region
      $region9: #{tpu_custom_call.1} parent=5 // pred_check
        _
      $region10: #{tpu_custom_call.1} parent=5 // pred_check_branch
        %475 = sbr.rel (%p472) target = $region12
      $region11: #{tpu_custom_call.1} parent=5 // pred_region
        %s476 = ssub.s32 %s32, 1
        // Predicated region
        $region13: #{tpu_custom_call.1} parent=11 // pred_check
          %p477 = pneg %p79
        $region14: #{tpu_custom_call.1} parent=11 // pred_check_branch
          %479 = sbr.rel (%p477) target = $region16
        $region15: #{tpu_custom_call.1} parent=11 // pred_region
          %s481 = ssub.s32 7168, 7168
          %482 = vsyncadd [#allocation6], %s481
          %s483 = sshll.u32 [#allocation5], 4
          %s484 = int_to_ptr.vmem [resolvable:$true] %s483
          %489 = dma.hbm_to_vmem [thread:$0]  %s1, 7168, %s484, [#allocation6], 64, 64, 4
        $region16: #{tpu_custom_call.1} parent=11 // pred_fallthru
          _
        // Predicated region
        $region17: #{tpu_custom_call.1} parent=11 // pred_check
          %p490 = pneg %p100
        $region18: #{tpu_custom_call.1} parent=11 // pred_check_branch
          %492 = sbr.rel (%p490) target = $region20
        $region19: #{tpu_custom_call.1} parent=11 // pred_region
          _
        $region20: #{tpu_custom_call.1} parent=11 // pred_fallthru
          _
        // Predicated region
        $region21: #{tpu_custom_call.1} parent=11 // pred_check
          %p493 = pneg %p121
        $region22: #{tpu_custom_call.1} parent=11 // pred_check_branch
          %495 = sbr.rel (%p493) target = $region24
        $region23: #{tpu_custom_call.1} parent=11 // pred_region
          _
        $region24: #{tpu_custom_call.1} parent=11 // pred_fallthru
          _
        // Predicated region
        $region25: #{tpu_custom_call.1} parent=11 // pred_check
          %p496 = pneg %p142
        $region26: #{tpu_custom_call.1} parent=11 // pred_check_branch
          %498 = sbr.rel (%p496) target = $region28
        $region27: #{tpu_custom_call.1} parent=11 // pred_region
          _
        $region28: #{tpu_custom_call.1} parent=11 // pred_fallthru
          _
        // Predicated region
        $region29: #{tpu_custom_call.1} parent=11 // pred_check
          %p499 = pneg %p163
        $region30: #{tpu_custom_call.1} parent=11 // pred_check_branch
          %501 = sbr.rel (%p499) target = $region32
        $region31: #{tpu_custom_call.1} parent=11 // pred_region
          _
        $region32: #{tpu_custom_call.1} parent=11 // pred_fallthru
          _
        // Predicated region
        $region33: #{tpu_custom_call.1} parent=11 // pred_check
          %p502 = pneg %p184
        $region34: #{tpu_custom_call.1} parent=11 // pred_check_branch
          %504 = sbr.rel (%p502) target = $region36
        $region35: #{tpu_custom_call.1} parent=11 // pred_region
          _
        $region36: #{tpu_custom_call.1} parent=11 // pred_fallthru
          _
        // Predicated region
        $region37: #{tpu_custom_call.1} parent=11 // pred_check
          %p505 = pneg %p205
        $region38: #{tpu_custom_call.1} parent=11 // pred_check_branch
          %507 = sbr.rel (%p505) target = $region40
        $region39: #{tpu_custom_call.1} parent=11 // pred_region
          _
        $region40: #{tpu_custom_call.1} parent=11 // pred_fallthru
          _
        // Predicated region
        $region41: #{tpu_custom_call.1} parent=11 // pred_check
          %p508 = pneg %p226
        $region42: #{tpu_custom_call.1} parent=11 // pred_check_branch
          %510 = sbr.rel (%p508) target = $region44
        $region43: #{tpu_custom_call.1} parent=11 // pred_region
          _
        $region44: #{tpu_custom_call.1} parent=11 // pred_fallthru
          _
        // Predicated region
        $region45: #{tpu_custom_call.1} parent=11 // pred_check
          %p511 = pneg %p247
        $region46: #{tpu_custom_call.1} parent=11 // pred_check_branch
          %513 = sbr.rel (%p511) target = $region48
        $region47: #{tpu_custom_call.1} parent=11 // pred_region
          %s515 = ssub.s32 7168, 7168
          %516 = vsyncadd [#allocation6], %s515
          %s517 = sshll.u32 [#allocation7], 4
          %s518 = int_to_ptr.vmem [resolvable:$true] %s517
          %523 = dma.hbm_to_vmem [thread:$0]  %s9, 7168, %s518, [#allocation6], 448, 448, 28
        $region48: #{tpu_custom_call.1} parent=11 // pred_fallthru
          _
        // Predicated region
        $region49: #{tpu_custom_call.1} parent=11 // pred_check
          %p524 = pneg %p268
        $region50: #{tpu_custom_call.1} parent=11 // pred_check_branch
          %526 = sbr.rel (%p524) target = $region52
        $region51: #{tpu_custom_call.1} parent=11 // pred_region
          _
        $region52: #{tpu_custom_call.1} parent=11 // pred_fallthru
          _
        // Predicated region
        $region53: #{tpu_custom_call.1} parent=11 // pred_check
          %p527 = pneg %p289
        $region54: #{tpu_custom_call.1} parent=11 // pred_check_branch
          %529 = sbr.rel (%p527) target = $region56
        $region55: #{tpu_custom_call.1} parent=11 // pred_region
          _
        $region56: #{tpu_custom_call.1} parent=11 // pred_fallthru
          _
        // Predicated region
        $region57: #{tpu_custom_call.1} parent=11 // pred_check
          %p530 = pneg %p310
        $region58: #{tpu_custom_call.1} parent=11 // pred_check_branch
          %532 = sbr.rel (%p530) target = $region60
        $region59: #{tpu_custom_call.1} parent=11 // pred_region
          _
        $region60: #{tpu_custom_call.1} parent=11 // pred_fallthru
          _
        // Predicated region
        $region61: #{tpu_custom_call.1} parent=11 // pred_check
          %p533 = pneg %p331
        $region62: #{tpu_custom_call.1} parent=11 // pred_check_branch
          %535 = sbr.rel (%p533) target = $region64
        $region63: #{tpu_custom_call.1} parent=11 // pred_region
          _
        $region64: #{tpu_custom_call.1} parent=11 // pred_fallthru
          _
        // Predicated region
        $region65: #{tpu_custom_call.1} parent=11 // pred_check
          %p536 = pneg %p352
        $region66: #{tpu_custom_call.1} parent=11 // pred_check_branch
          %538 = sbr.rel (%p536) target = $region68
        $region67: #{tpu_custom_call.1} parent=11 // pred_region
          _
        $region68: #{tpu_custom_call.1} parent=11 // pred_fallthru
          _
        // Predicated region
        $region69: #{tpu_custom_call.1} parent=11 // pred_check
          %p539 = pneg %p373
        $region70: #{tpu_custom_call.1} parent=11 // pred_check_branch
          %541 = sbr.rel (%p539) target = $region72
        $region71: #{tpu_custom_call.1} parent=11 // pred_region
          _
        $region72: #{tpu_custom_call.1} parent=11 // pred_fallthru
          _
        // Predicated region
        $region73: #{tpu_custom_call.1} parent=11 // pred_check
          %p542 = pneg %p394
        $region74: #{tpu_custom_call.1} parent=11 // pred_check_branch
          %544 = sbr.rel (%p542) target = $region76
        $region75: #{tpu_custom_call.1} parent=11 // pred_region
          _
        $region76: #{tpu_custom_call.1} parent=11 // pred_fallthru
          _
        // Predicated region
        $region77: #{tpu_custom_call.1} parent=11 // pred_check
          %p545 = pneg %p415
        $region78: #{tpu_custom_call.1} parent=11 // pred_check_branch
          %547 = sbr.rel (%p545) target = $region80
        $region79: #{tpu_custom_call.1} parent=11 // pred_region
          _
        $region80: #{tpu_custom_call.1} parent=11 // pred_fallthru
          _
        // Predicated region
        $region81: #{tpu_custom_call.1} parent=11 // pred_check
          %p548 = pneg %p436
        $region82: #{tpu_custom_call.1} parent=11 // pred_check_branch
          %550 = sbr.rel (%p548) target = $region84
        $region83: #{tpu_custom_call.1} parent=11 // pred_region
          _
        $region84: #{tpu_custom_call.1} parent=11 // pred_fallthru
          _
      $region12: #{tpu_custom_call.1} parent=5 // pred_fallthru
        _
      %p551 = scmp.lt.s32.totalorder %s32, 3
      // Predicated region
      $region85: #{tpu_custom_call.1} parent=5 // pred_check
        %p552 = pneg %p551
      $region86: #{tpu_custom_call.1} parent=5 // pred_check_branch
        %554 = sbr.rel (%p552) target = $region88
      $region87: #{tpu_custom_call.1} parent=5 // pred_region
        // Predicated region
        $region89: #{tpu_custom_call.1} parent=87 // pred_check
          %p555 = pneg %p52
        $region90: #{tpu_custom_call.1} parent=87 // pred_check_branch
          %557 = sbr.rel (%p555) target = $region92
        $region91: #{tpu_custom_call.1} parent=87 // pred_region
          %s558 = sand.u32 %s42, 1
          %s559 = scalar_lea.sflag [#allocation3], %s558
          %s560 = sand.u32 %s42, 1
          %s561 = smul.addr %s560, 448
          %s562 = scalar_lea.vmem [#allocation2], %s561
          %s563 = smul.u32 16, %s32
          %s565 = ssub.s32 7168, 7168
          %566 = vsyncadd %s559, %s565
          %s567 = smul.addr %s563, 7
          %s568 = smul.addr %s567, 64
          %s569 = scalar_lea.hbm %s0, %s568
          %s570 = sshll.u32 %s562, 4
          %s571 = int_to_ptr.vmem [resolvable:$true] %s570
          %576 = dma.hbm_to_vmem [thread:$0]  %s569, 7168, %s571, %s559, 448, 448, 28
        $region92: #{tpu_custom_call.1} parent=87 // pred_fallthru
          _
      $region88: #{tpu_custom_call.1} parent=5 // pred_fallthru
        _
      %p577 = scmp.le.s32.totalorder 1, %s32
      %p578 = scmp.lt.s32.totalorder %s32, 4
      %p579 = pnand %p577, %p578
      %p580 = pneg %p579
      // Predicated region
      $region93: #{tpu_custom_call.1} parent=5 // pred_check
        _
      $region94: #{tpu_custom_call.1} parent=5 // pred_check_branch
        %582 = sbr.rel (%p579) target = $region96
      $region95: #{tpu_custom_call.1} parent=5 // pred_region
        %s583 = ssub.s32 %s32, 1
        %s584 = sand.u32 %s45, 1
        %s585 = scalar_lea.sflag [#allocation3], %s584
        %s586 = sand.u32 %s45, 1
        %s587 = smul.addr %s586, 448
        %s588 = scalar_lea.vmem [#allocation2], %s587
        // Predicated region
        $region97: #{tpu_custom_call.1} parent=95 // pred_check
          %p589 = pneg %p58
        $region98: #{tpu_custom_call.1} parent=95 // pred_check_branch
          %591 = sbr.rel (%p589) target = $region100
        $region99: #{tpu_custom_call.1} parent=95 // pred_region
          %592 = dma.done %s585, 7168
        $region100: #{tpu_custom_call.1} parent=95 // pred_fallthru
          _
        // Predicated region
        $region101: #{tpu_custom_call.1} parent=95 // pred_check
          %p593 = pneg %p79
        $region102: #{tpu_custom_call.1} parent=95 // pred_check_branch
          %595 = sbr.rel (%p593) target = $region104
        $region103: #{tpu_custom_call.1} parent=95 // pred_region
          %596 = dma.done [#allocation6], 7168
        $region104: #{tpu_custom_call.1} parent=95 // pred_fallthru
          _
        // Predicated region
        $region105: #{tpu_custom_call.1} parent=95 // pred_check
          %p597 = pneg %p247
        $region106: #{tpu_custom_call.1} parent=95 // pred_check_branch
          %599 = sbr.rel (%p597) target = $region108
        $region107: #{tpu_custom_call.1} parent=95 // pred_region
          %600 = dma.done [#allocation6], 7168
        $region108: #{tpu_custom_call.1} parent=95 // pred_fallthru
          _
        %s601 = sand.u32 %s45, 1
        %s602 = scalar_lea.sflag [#allocation3], %s601
        %s603 = sand.u32 %s45, 1
        %s604 = smul.addr %s603, 448
        %s605 = scalar_lea.vmem [#allocation2], %s604
        %p606 = pneg %p58
        %p607 = pneg %p55
        %p608 = pneg %p79
        %p609 = pneg %p76
        %p610 = pneg %p100
        %p611 = pneg %p97
        %p612 = pneg %p121
        %p613 = pneg %p118
        %p614 = pneg %p142
        %p615 = pneg %p139
        %p616 = pneg %p163
        %p617 = pneg %p160
        %p618 = pneg %p184
        %p619 = pneg %p181
        %p620 = pneg %p205
        %p621 = pneg %p202
        %p622 = pneg %p226
        %p623 = pneg %p223
        %p624 = pneg %p247
        %p625 = pneg %p244
        %p626 = pneg %p268
        %p627 = pneg %p265
        %p628 = pneg %p289
        %p629 = pneg %p286
        %p630 = pneg %p310
        %p631 = pneg %p307
        %p632 = pneg %p331
        %p633 = pneg %p328
        %p634 = pneg %p352
        %p635 = pneg %p349
        %p636 = pneg %p373
        %p637 = pneg %p370
        %p638 = pneg %p394
        %p639 = pneg %p391
        %p640 = pneg %p415
        %p641 = pneg %p412
        %p642 = pneg %p436
        %p643 = pneg %p433
        %p644 = pneg %p462
        %p645 = pneg %p459
        %s646 = sand.u32 %s449, 1
        %s647 = scalar_lea.sflag [#allocation4], %s646
        %s648 = sand.u32 %s449, 1
        %s649 = smul.addr %s648, 448
        %s650 = scalar_lea.vmem [#allocation8], %s649
        %s651 = smul.u32 16, %s37
        %s652 = smul.u32 16, %s37
        %v654 = vld [vmem:[%s588] sm:$0xff]
        %v655 = vld [vmem:[%s588 + $0x8] sm:$0xff]
        %v656 = vld [vmem:[%s588 + $0x10] sm:$0xff]
        %v657 = vld [vmem:[%s588 + $0x18] sm:$0xf]
        %v658 = vld [vmem:[%s588 + $0x1c] sm:$0xff]
        %v659 = vld [vmem:[%s588 + $0x24] sm:$0xff]
        %v660 = vld [vmem:[%s588 + $0x2c] sm:$0xff]
        %v661 = vld [vmem:[%s588 + $0x34] sm:$0xf]
        %v662 = vld [vmem:[%s588 + $0x38] sm:$0xff]
        %v663 = vld [vmem:[%s588 + $0x40] sm:$0xff]
        %v664 = vld [vmem:[%s588 + $0x48] sm:$0xff]
        %v665 = vld [vmem:[%s588 + $0x50] sm:$0xf]
        %v666 = vld [vmem:[%s588 + $0x54] sm:$0xff]
        %v667 = vld [vmem:[%s588 + $0x5c] sm:$0xff]
        %v668 = vld [vmem:[%s588 + $0x64] sm:$0xff]
        %v669 = vld [vmem:[%s588 + $0x6c] sm:$0xf]
        %v670 = vld [vmem:[%s588 + $0x70] sm:$0xff]
        %v671 = vld [vmem:[%s588 + $0x78] sm:$0xff]
        %v672 = vld [vmem:[%s588 + $0x80] sm:$0xff]
        %v673 = vld [vmem:[%s588 + $0x88] sm:$0xf]
        %v674 = vld [vmem:[%s588 + $0x8c] sm:$0xff]
        %v675 = vld [vmem:[%s588 + $0x94] sm:$0xff]
        %v676 = vld [vmem:[%s588 + $0x9c] sm:$0xff]
        %v677 = vld [vmem:[%s588 + $0xa4] sm:$0xf]
        %v678 = vld [vmem:[%s588 + $0xa8] sm:$0xff]
        %v679 = vld [vmem:[%s588 + $0xb0] sm:$0xff]
        %v680 = vld [vmem:[%s588 + $0xb8] sm:$0xff]
        %v681 = vld [vmem:[%s588 + $0xc0] sm:$0xf]
        %v682 = vld [vmem:[%s588 + $0xc4] sm:$0xff]
        %v683 = vld [vmem:[%s588 + $0xcc] sm:$0xff]
        %v684 = vld [vmem:[%s588 + $0xd4] sm:$0xff]
        %v685 = vld [vmem:[%s588 + $0xdc] sm:$0xf]
        %v686 = vld [vmem:[%s588 + $0xe0] sm:$0xff]
        %v687 = vld [vmem:[%s588 + $0xe8] sm:$0xff]
        %v688 = vld [vmem:[%s588 + $0xf0] sm:$0xff]
        %v689 = vld [vmem:[%s588 + $0xf8] sm:$0xf]
        %v690 = vld [vmem:[%s588 + $0xfc] sm:$0xff]
        %v691 = vld [vmem:[%s588 + $0x104] sm:$0xff]
        %v692 = vld [vmem:[%s588 + $0x10c] sm:$0xff]
        %v693 = vld [vmem:[%s588 + $0x114] sm:$0xf]
        %v694 = vld [vmem:[%s588 + $0x118] sm:$0xff]
        %v695 = vld [vmem:[%s588 + $0x120] sm:$0xff]
        %v696 = vld [vmem:[%s588 + $0x128] sm:$0xff]
        %v697 = vld [vmem:[%s588 + $0x130] sm:$0xf]
        %v698 = vld [vmem:[%s588 + $0x134] sm:$0xff]
        %v699 = vld [vmem:[%s588 + $0x13c] sm:$0xff]
        %v700 = vld [vmem:[%s588 + $0x144] sm:$0xff]
        %v701 = vld [vmem:[%s588 + $0x14c] sm:$0xf]
        %v702 = vld [vmem:[%s588 + $0x150] sm:$0xff]
        %v703 = vld [vmem:[%s588 + $0x158] sm:$0xff]
        %v704 = vld [vmem:[%s588 + $0x160] sm:$0xff]
        %v705 = vld [vmem:[%s588 + $0x168] sm:$0xf]
        %v706 = vld [vmem:[%s588 + $0x16c] sm:$0xff]
        %v707 = vld [vmem:[%s588 + $0x174] sm:$0xff]
        %v708 = vld [vmem:[%s588 + $0x17c] sm:$0xff]
        %v709 = vld [vmem:[%s588 + $0x184] sm:$0xf]
        %v710 = vld [vmem:[%s588 + $0x188] sm:$0xff]
        %v711 = vld [vmem:[%s588 + $0x190] sm:$0xff]
        %v712 = vld [vmem:[%s588 + $0x198] sm:$0xff]
        %v713 = vld [vmem:[%s588 + $0x1a0] sm:$0xf]
        %v714 = vld [vmem:[%s588 + $0x1a4] sm:$0xff]
        %v715 = vld [vmem:[%s588 + $0x1ac] sm:$0xff]
        %v716 = vld [vmem:[%s588 + $0x1b4] sm:$0xff]
        %v717 = vld [vmem:[%s588 + $0x1bc] sm:$0xf]
        %v718 = vld [vmem:[#allocation5] sm:$0xf]
        %v719 = vld [vmem:[#allocation5 + $0x4] sm:$0xf]
        %v720 = vld [vmem:[#allocation5 + $0x8] sm:$0xf]
        %v721 = vld [vmem:[#allocation5 + $0xc] sm:$0xf]
        %v722 = vld [vmem:[#allocation5 + $0x10] sm:$0xf]
        %v723 = vld [vmem:[#allocation5 + $0x14] sm:$0xf]
        %v724 = vld [vmem:[#allocation5 + $0x18] sm:$0xf]
        %v725 = vld [vmem:[#allocation5 + $0x1c] sm:$0xf]
        %v726 = vld [vmem:[#allocation5 + $0x20] sm:$0xf]
        %v727 = vld [vmem:[#allocation5 + $0x24] sm:$0xf]
        %v728 = vld [vmem:[#allocation5 + $0x28] sm:$0xf]
        %v729 = vld [vmem:[#allocation5 + $0x2c] sm:$0xf]
        %v730 = vld [vmem:[#allocation5 + $0x30] sm:$0xf]
        %v731 = vld [vmem:[#allocation5 + $0x34] sm:$0xf]
        %v732 = vld [vmem:[#allocation5 + $0x38] sm:$0xf]
        %v733 = vld [vmem:[#allocation5 + $0x3c] sm:$0xf]
        %v734 = vld [vmem:[#allocation5 + $0x40] sm:$0xf]
        %v735 = vld [vmem:[#allocation5 + $0x44] sm:$0xf]
        %v736 = vld [vmem:[#allocation5 + $0x48] sm:$0xf]
        %v737 = vld [vmem:[#allocation5 + $0x4c] sm:$0xf]
        %v738 = vld [vmem:[#allocation5 + $0x50] sm:$0xf]
        %v739 = vld [vmem:[#allocation5 + $0x54] sm:$0xf]
        %v740 = vld [vmem:[#allocation5 + $0x58] sm:$0xf]
        %v741 = vld [vmem:[#allocation5 + $0x5c] sm:$0xf]
        %v742 = vld [vmem:[#allocation5 + $0x60] sm:$0xf]
        %v743 = vld [vmem:[#allocation5 + $0x64] sm:$0xf]
        %v744 = vld [vmem:[#allocation5 + $0x68] sm:$0xf]
        %v745 = vld [vmem:[#allocation5 + $0x6c] sm:$0xf]
        %v746 = vld [vmem:[#allocation5 + $0x70] sm:$0xf]
        %v747 = vld [vmem:[#allocation5 + $0x74] sm:$0xf]
        %v748 = vld [vmem:[#allocation5 + $0x78] sm:$0xf]
        %v749 = vld [vmem:[#allocation5 + $0x7c] sm:$0xf]
        %v750 = vld [vmem:[#allocation5 + $0x80] sm:$0xf]
        %v751 = vld [vmem:[#allocation5 + $0x84] sm:$0xf]
        %v752 = vld [vmem:[#allocation5 + $0x88] sm:$0xf]
        %v753 = vld [vmem:[#allocation5 + $0x8c] sm:$0xf]
        %v754 = vld [vmem:[#allocation5 + $0x90] sm:$0xf]
        %v755 = vld [vmem:[#allocation5 + $0x94] sm:$0xf]
        %v756 = vld [vmem:[#allocation5 + $0x98] sm:$0xf]
        %v757 = vld [vmem:[#allocation5 + $0x9c] sm:$0xf]
        %v758 = vld [vmem:[#allocation5 + $0xa0] sm:$0xf]
        %v759 = vld [vmem:[#allocation5 + $0xa4] sm:$0xf]
        %v760 = vld [vmem:[#allocation5 + $0xa8] sm:$0xf]
        %v761 = vld [vmem:[#allocation5 + $0xac] sm:$0xf]
        %v762 = vld [vmem:[#allocation5 + $0xb0] sm:$0xf]
        %v763 = vld [vmem:[#allocation5 + $0xb4] sm:$0xf]
        %v764 = vld [vmem:[#allocation5 + $0xb8] sm:$0xf]
        %v765 = vld [vmem:[#allocation5 + $0xbc] sm:$0xf]
        %v766 = vld [vmem:[#allocation5 + $0xc0] sm:$0xf]
        %v767 = vld [vmem:[#allocation5 + $0xc4] sm:$0xf]
        %v768 = vld [vmem:[#allocation5 + $0xc8] sm:$0xf]
        %v769 = vld [vmem:[#allocation5 + $0xcc] sm:$0xf]
        %v770 = vld [vmem:[#allocation5 + $0xd0] sm:$0xf]
        %v771 = vld [vmem:[#allocation5 + $0xd4] sm:$0xf]
        %v772 = vld [vmem:[#allocation5 + $0xd8] sm:$0xf]
        %v773 = vld [vmem:[#allocation5 + $0xdc] sm:$0xf]
        %v774 = vld [vmem:[#allocation5 + $0xe0] sm:$0xf]
        %v775 = vld [vmem:[#allocation5 + $0xe4] sm:$0xf]
        %v776 = vld [vmem:[#allocation5 + $0xe8] sm:$0xf]
        %v777 = vld [vmem:[#allocation5 + $0xec] sm:$0xf]
        %v778 = vld [vmem:[#allocation5 + $0xf0] sm:$0xf]
        %v779 = vld [vmem:[#allocation5 + $0xf4] sm:$0xf]
        %v780 = vld [vmem:[#allocation5 + $0xf8] sm:$0xf]
        %v781 = vld [vmem:[#allocation5 + $0xfc] sm:$0xf]
        %v782 = vld [vmem:[#allocation5 + $0x100] sm:$0xf]
        %v783 = vld [vmem:[#allocation5 + $0x104] sm:$0xf]
        %v784 = vld [vmem:[#allocation5 + $0x108] sm:$0xf]
        %v785 = vld [vmem:[#allocation5 + $0x10c] sm:$0xf]
        %v786 = vld [vmem:[#allocation5 + $0x110] sm:$0xf]
        %v787 = vld [vmem:[#allocation5 + $0x114] sm:$0xf]
        %v788 = vld [vmem:[#allocation5 + $0x118] sm:$0xf]
        %v789 = vld [vmem:[#allocation5 + $0x11c] sm:$0xf]
        %v790 = vld [vmem:[#allocation5 + $0x120] sm:$0xf]
        %v791 = vld [vmem:[#allocation5 + $0x124] sm:$0xf]
        %v792 = vld [vmem:[#allocation5 + $0x128] sm:$0xf]
        %v793 = vld [vmem:[#allocation5 + $0x12c] sm:$0xf]
        %v794 = vld [vmem:[#allocation5 + $0x130] sm:$0xf]
        %v795 = vld [vmem:[#allocation5 + $0x134] sm:$0xf]
        %v796 = vld [vmem:[#allocation5 + $0x138] sm:$0xf]
        %v797 = vld [vmem:[#allocation5 + $0x13c] sm:$0xf]
        %v798 = vld [vmem:[#allocation5 + $0x140] sm:$0xf]
        %v799 = vld [vmem:[#allocation5 + $0x144] sm:$0xf]
        %v800 = vld [vmem:[#allocation5 + $0x148] sm:$0xf]
        %v801 = vld [vmem:[#allocation5 + $0x14c] sm:$0xf]
        %v802 = vld [vmem:[#allocation5 + $0x150] sm:$0xf]
        %v803 = vld [vmem:[#allocation5 + $0x154] sm:$0xf]
        %v804 = vld [vmem:[#allocation5 + $0x158] sm:$0xf]
        %v805 = vld [vmem:[#allocation5 + $0x15c] sm:$0xf]
        %v806 = vld [vmem:[#allocation5 + $0x160] sm:$0xf]
        %v807 = vld [vmem:[#allocation5 + $0x164] sm:$0xf]
        %v808 = vld [vmem:[#allocation5 + $0x168] sm:$0xf]
        %v809 = vld [vmem:[#allocation5 + $0x16c] sm:$0xf]
        %v810 = vld [vmem:[#allocation5 + $0x170] sm:$0xf]
        %v811 = vld [vmem:[#allocation5 + $0x174] sm:$0xf]
        %v812 = vld [vmem:[#allocation5 + $0x178] sm:$0xf]
        %v813 = vld [vmem:[#allocation5 + $0x17c] sm:$0xf]
        %v814 = vld [vmem:[#allocation5 + $0x180] sm:$0xf]
        %v815 = vld [vmem:[#allocation5 + $0x184] sm:$0xf]
        %v816 = vld [vmem:[#allocation5 + $0x188] sm:$0xf]
        %v817 = vld [vmem:[#allocation5 + $0x18c] sm:$0xf]
        %v818 = vld [vmem:[#allocation5 + $0x190] sm:$0xf]
        %v819 = vld [vmem:[#allocation5 + $0x194] sm:$0xf]
        %v820 = vld [vmem:[#allocation5 + $0x198] sm:$0xf]
        %v821 = vld [vmem:[#allocation5 + $0x19c] sm:$0xf]
        %v822 = vld [vmem:[#allocation5 + $0x1a0] sm:$0xf]
        %v823 = vld [vmem:[#allocation5 + $0x1a4] sm:$0xf]
        %v824 = vld [vmem:[#allocation5 + $0x1a8] sm:$0xf]
        %v825 = vld [vmem:[#allocation5 + $0x1ac] sm:$0xf]
        %v826 = vld [vmem:[#allocation5 + $0x1b0] sm:$0xf]
        %v827 = vld [vmem:[#allocation5 + $0x1b4] sm:$0xf]
        %v828 = vld [vmem:[#allocation5 + $0x1b8] sm:$0xf]
        %v829 = vld [vmem:[#allocation5 + $0x1bc] sm:$0xf]
        %v830 = vld [vmem:[%s10] sm:$0x1]
        %v832 = vlaneseq
        %v833 = vshrl.u32 %v832, 7
        %v834 = vsub.s32 0, %v833
        %v835 = vrot.slane %v830, %v834
        %v901 = vunpack.c.l.b16 %v654
        %v902 = vunpack.c.h.b16 %v654
        %v903 = vunpack.c.l.b16 %v655
        %v904 = vunpack.c.h.b16 %v655
        %v905 = vunpack.c.l.b16 %v656
        %v906 = vunpack.c.h.b16 %v656
        %v907 = vunpack.c.l.b16 %v657
        %v908 = vunpack.c.l.b16 %v658
        %v909 = vunpack.c.h.b16 %v658
        %v910 = vunpack.c.l.b16 %v659
        %v911 = vunpack.c.h.b16 %v659
        %v912 = vunpack.c.l.b16 %v660
        %v913 = vunpack.c.h.b16 %v660
        %v914 = vunpack.c.l.b16 %v661
        %v915 = vunpack.c.l.b16 %v662
        %v916 = vunpack.c.h.b16 %v662
        %v917 = vunpack.c.l.b16 %v663
        %v918 = vunpack.c.h.b16 %v663
        %v919 = vunpack.c.l.b16 %v664
        %v920 = vunpack.c.h.b16 %v664
        %v921 = vunpack.c.l.b16 %v665
        %v922 = vunpack.c.l.b16 %v666
        %v923 = vunpack.c.h.b16 %v666
        %v924 = vunpack.c.l.b16 %v667
        %v925 = vunpack.c.h.b16 %v667
        %v926 = vunpack.c.l.b16 %v668
        %v927 = vunpack.c.h.b16 %v668
        %v928 = vunpack.c.l.b16 %v669
        %v929 = vunpack.c.l.b16 %v670
        %v930 = vunpack.c.h.b16 %v670
        %v931 = vunpack.c.l.b16 %v671
        %v932 = vunpack.c.h.b16 %v671
        %v933 = vunpack.c.l.b16 %v672
        %v934 = vunpack.c.h.b16 %v672
        %v935 = vunpack.c.l.b16 %v673
        %v936 = vunpack.c.l.b16 %v674
        %v937 = vunpack.c.h.b16 %v674
        %v938 = vunpack.c.l.b16 %v675
        %v939 = vunpack.c.h.b16 %v675
        %v940 = vunpack.c.l.b16 %v676
        %v941 = vunpack.c.h.b16 %v676
        %v942 = vunpack.c.l.b16 %v677
        %v943 = vunpack.c.l.b16 %v678
        %v944 = vunpack.c.h.b16 %v678
        %v945 = vunpack.c.l.b16 %v679
        %v946 = vunpack.c.h.b16 %v679
        %v947 = vunpack.c.l.b16 %v680
        %v948 = vunpack.c.h.b16 %v680
        %v949 = vunpack.c.l.b16 %v681
        %v950 = vunpack.c.l.b16 %v682
        %v951 = vunpack.c.h.b16 %v682
        %v952 = vunpack.c.l.b16 %v683
        %v953 = vunpack.c.h.b16 %v683
        %v954 = vunpack.c.l.b16 %v684
        %v955 = vunpack.c.h.b16 %v684
        %v956 = vunpack.c.l.b16 %v685
        %v957 = vunpack.c.l.b16 %v686
        %v958 = vunpack.c.h.b16 %v686
        %v959 = vunpack.c.l.b16 %v687
        %v960 = vunpack.c.h.b16 %v687
        %v961 = vunpack.c.l.b16 %v688
        %v962 = vunpack.c.h.b16 %v688
        %v963 = vunpack.c.l.b16 %v689
        %v964 = vunpack.c.l.b16 %v690
        %v965 = vunpack.c.h.b16 %v690
        %v966 = vunpack.c.l.b16 %v691
        %v967 = vunpack.c.h.b16 %v691
        %v968 = vunpack.c.l.b16 %v692
        %v969 = vunpack.c.h.b16 %v692
        %v970 = vunpack.c.l.b16 %v693
        %v971 = vunpack.c.l.b16 %v694
        %v972 = vunpack.c.h.b16 %v694
        %v973 = vunpack.c.l.b16 %v695
        %v974 = vunpack.c.h.b16 %v695
        %v975 = vunpack.c.l.b16 %v696
        %v976 = vunpack.c.h.b16 %v696
        %v977 = vunpack.c.l.b16 %v697
        %v978 = vunpack.c.l.b16 %v698
        %v979 = vunpack.c.h.b16 %v698
        %v980 = vunpack.c.l.b16 %v699
        %v981 = vunpack.c.h.b16 %v699
        %v982 = vunpack.c.l.b16 %v700
        %v983 = vunpack.c.h.b16 %v700
        %v984 = vunpack.c.l.b16 %v701
        %v985 = vunpack.c.l.b16 %v702
        %v986 = vunpack.c.h.b16 %v702
        %v987 = vunpack.c.l.b16 %v703
        %v988 = vunpack.c.h.b16 %v703
        %v989 = vunpack.c.l.b16 %v704
        %v990 = vunpack.c.h.b16 %v704
        %v991 = vunpack.c.l.b16 %v705
        %v992 = vunpack.c.l.b16 %v706
        %v993 = vunpack.c.h.b16 %v706
        %v994 = vunpack.c.l.b16 %v707
        %v995 = vunpack.c.h.b16 %v707
        %v996 = vunpack.c.l.b16 %v708
        %v997 = vunpack.c.h.b16 %v708
        %v998 = vunpack.c.l.b16 %v709
        %v999 = vunpack.c.l.b16 %v710
        %v1000 = vunpack.c.h.b16 %v710
        %v1001 = vunpack.c.l.b16 %v711
        %v1002 = vunpack.c.h.b16 %v711
        %v1003 = vunpack.c.l.b16 %v712
        %v1004 = vunpack.c.h.b16 %v712
        %v1005 = vunpack.c.l.b16 %v713
        %v1006 = vunpack.c.l.b16 %v714
        %v1007 = vunpack.c.h.b16 %v714
        %v1008 = vunpack.c.l.b16 %v715
        %v1009 = vunpack.c.h.b16 %v715
        %v1010 = vunpack.c.l.b16 %v716
        %v1011 = vunpack.c.h.b16 %v716
        %v1012 = vunpack.c.l.b16 %v717
        %v1013 = vpack.c.b16 %v908, %v901
        %v1014 = vpack.c.b16 %v909, %v902
        %v1015 = vpack.c.b16 %v910, %v903
        %v1016 = vpack.c.b16 %v911, %v904
        %v1017 = vpack.c.b16 %v912, %v905
        %v1018 = vpack.c.b16 %v913, %v906
        %v1019 = vpack.c.b16 %v914, %v907
        %v1020 = vpack.c.b16 %v922, %v915
        %v1021 = vpack.c.b16 %v923, %v916
        %v1022 = vpack.c.b16 %v924, %v917
        %v1023 = vpack.c.b16 %v925, %v918
        %v1024 = vpack.c.b16 %v926, %v919
        %v1025 = vpack.c.b16 %v927, %v920
        %v1026 = vpack.c.b16 %v928, %v921
        %v1027 = vpack.c.b16 %v936, %v929
        %v1028 = vpack.c.b16 %v937, %v930
        %v1029 = vpack.c.b16 %v938, %v931
        %v1030 = vpack.c.b16 %v939, %v932
        %v1031 = vpack.c.b16 %v940, %v933
        %v1032 = vpack.c.b16 %v941, %v934
        %v1033 = vpack.c.b16 %v942, %v935
        %v1034 = vpack.c.b16 %v950, %v943
        %v1035 = vpack.c.b16 %v951, %v944
        %v1036 = vpack.c.b16 %v952, %v945
        %v1037 = vpack.c.b16 %v953, %v946
        %v1038 = vpack.c.b16 %v954, %v947
        %v1039 = vpack.c.b16 %v955, %v948
        %v1040 = vpack.c.b16 %v956, %v949
        %v1041 = vpack.c.b16 %v964, %v957
        %v1042 = vpack.c.b16 %v965, %v958
        %v1043 = vpack.c.b16 %v966, %v959
        %v1044 = vpack.c.b16 %v967, %v960
        %v1045 = vpack.c.b16 %v968, %v961
        %v1046 = vpack.c.b16 %v969, %v962
        %v1047 = vpack.c.b16 %v970, %v963
        %v1048 = vpack.c.b16 %v978, %v971
        %v1049 = vpack.c.b16 %v979, %v972
        %v1050 = vpack.c.b16 %v980, %v973
        %v1051 = vpack.c.b16 %v981, %v974
        %v1052 = vpack.c.b16 %v982, %v975
        %v1053 = vpack.c.b16 %v983, %v976
        %v1054 = vpack.c.b16 %v984, %v977
        %v1055 = vpack.c.b16 %v992, %v985
        %v1056 = vpack.c.b16 %v993, %v986
        %v1057 = vpack.c.b16 %v994, %v987
        %v1058 = vpack.c.b16 %v995, %v988
        %v1059 = vpack.c.b16 %v996, %v989
        %v1060 = vpack.c.b16 %v997, %v990
        %v1061 = vpack.c.b16 %v998, %v991
        %v1062 = vpack.c.b16 %v1006, %v999
        %v1063 = vpack.c.b16 %v1007, %v1000
        %v1064 = vpack.c.b16 %v1008, %v1001
        %v1065 = vpack.c.b16 %v1009, %v1002
        %v1066 = vpack.c.b16 %v1010, %v1003
        %v1067 = vpack.c.b16 %v1011, %v1004
        %v1068 = vpack.c.b16 %v1012, %v1005
        %v1237 = vunpack.c.l.b16 %v718
        %v1238 = vunpack.c.l.b16 %v719
        %v1239 = vunpack.c.l.b16 %v720
        %v1240 = vunpack.c.l.b16 %v721
        %v1241 = vunpack.c.l.b16 %v722
        %v1242 = vunpack.c.l.b16 %v723
        %v1243 = vunpack.c.l.b16 %v724
        %v1244 = vunpack.c.l.b16 %v725
        %v1245 = vunpack.c.l.b16 %v726
        %v1246 = vunpack.c.l.b16 %v727
        %v1247 = vunpack.c.l.b16 %v728
        %v1248 = vunpack.c.l.b16 %v729
        %v1249 = vunpack.c.l.b16 %v730
        %v1250 = vunpack.c.l.b16 %v731
        %v1251 = vunpack.c.l.b16 %v732
        %v1252 = vunpack.c.l.b16 %v733
        %v1253 = vunpack.c.l.b16 %v734
        %v1254 = vunpack.c.l.b16 %v735
        %v1255 = vunpack.c.l.b16 %v736
        %v1256 = vunpack.c.l.b16 %v737
        %v1257 = vunpack.c.l.b16 %v738
        %v1258 = vunpack.c.l.b16 %v739
        %v1259 = vunpack.c.l.b16 %v740
        %v1260 = vunpack.c.l.b16 %v741
        %v1261 = vunpack.c.l.b16 %v742
        %v1262 = vunpack.c.l.b16 %v743
        %v1263 = vunpack.c.l.b16 %v744
        %v1264 = vunpack.c.l.b16 %v745
        %v1265 = vunpack.c.l.b16 %v746
        %v1266 = vunpack.c.l.b16 %v747
        %v1267 = vunpack.c.l.b16 %v748
        %v1268 = vunpack.c.l.b16 %v749
        %v1269 = vunpack.c.l.b16 %v750
        %v1270 = vunpack.c.l.b16 %v751
        %v1271 = vunpack.c.l.b16 %v752
        %v1272 = vunpack.c.l.b16 %v753
        %v1273 = vunpack.c.l.b16 %v754
        %v1274 = vunpack.c.l.b16 %v755
        %v1275 = vunpack.c.l.b16 %v756
        %v1276 = vunpack.c.l.b16 %v757
        %v1277 = vunpack.c.l.b16 %v758
        %v1278 = vunpack.c.l.b16 %v759
        %v1279 = vunpack.c.l.b16 %v760
        %v1280 = vunpack.c.l.b16 %v761
        %v1281 = vunpack.c.l.b16 %v762
        %v1282 = vunpack.c.l.b16 %v763
        %v1283 = vunpack.c.l.b16 %v764
        %v1284 = vunpack.c.l.b16 %v765
        %v1285 = vunpack.c.l.b16 %v766
        %v1286 = vunpack.c.l.b16 %v767
        %v1287 = vunpack.c.l.b16 %v768
        %v1288 = vunpack.c.l.b16 %v769
        %v1289 = vunpack.c.l.b16 %v770
        %v1290 = vunpack.c.l.b16 %v771
        %v1291 = vunpack.c.l.b16 %v772
        %v1292 = vunpack.c.l.b16 %v773
        %v1293 = vunpack.c.l.b16 %v774
        %v1294 = vunpack.c.l.b16 %v775
        %v1295 = vunpack.c.l.b16 %v776
        %v1296 = vunpack.c.l.b16 %v777
        %v1297 = vunpack.c.l.b16 %v778
        %v1298 = vunpack.c.l.b16 %v779
        %v1299 = vunpack.c.l.b16 %v780
        %v1300 = vunpack.c.l.b16 %v781
        %v1301 = vunpack.c.l.b16 %v782
        %v1302 = vunpack.c.l.b16 %v783
        %v1303 = vunpack.c.l.b16 %v784
        %v1304 = vunpack.c.l.b16 %v785
        %v1305 = vunpack.c.l.b16 %v786
        %v1306 = vunpack.c.l.b16 %v787
        %v1307 = vunpack.c.l.b16 %v788
        %v1308 = vunpack.c.l.b16 %v789
        %v1309 = vunpack.c.l.b16 %v790
        %v1310 = vunpack.c.l.b16 %v791
        %v1311 = vunpack.c.l.b16 %v792
        %v1312 = vunpack.c.l.b16 %v793
        %v1313 = vunpack.c.l.b16 %v794
        %v1314 = vunpack.c.l.b16 %v795
        %v1315 = vunpack.c.l.b16 %v796
        %v1316 = vunpack.c.l.b16 %v797
        %v1317 = vunpack.c.l.b16 %v798
        %v1318 = vunpack.c.l.b16 %v799
        %v1319 = vunpack.c.l.b16 %v800
        %v1320 = vunpack.c.l.b16 %v801
        %v1321 = vunpack.c.l.b16 %v802
        %v1322 = vunpack.c.l.b16 %v803
        %v1323 = vunpack.c.l.b16 %v804
        %v1324 = vunpack.c.l.b16 %v805
        %v1325 = vunpack.c.l.b16 %v806
        %v1326 = vunpack.c.l.b16 %v807
        %v1327 = vunpack.c.l.b16 %v808
        %v1328 = vunpack.c.l.b16 %v809
        %v1329 = vunpack.c.l.b16 %v810
        %v1330 = vunpack.c.l.b16 %v811
        %v1331 = vunpack.c.l.b16 %v812
        %v1332 = vunpack.c.l.b16 %v813
        %v1333 = vunpack.c.l.b16 %v814
        %v1334 = vunpack.c.l.b16 %v815
        %v1335 = vunpack.c.l.b16 %v816
        %v1336 = vunpack.c.l.b16 %v817
        %v1337 = vunpack.c.l.b16 %v818
        %v1338 = vunpack.c.l.b16 %v819
        %v1339 = vunpack.c.l.b16 %v820
        %v1340 = vunpack.c.l.b16 %v821
        %v1341 = vunpack.c.l.b16 %v822
        %v1342 = vunpack.c.l.b16 %v823
        %v1343 = vunpack.c.l.b16 %v824
        %v1344 = vunpack.c.l.b16 %v825
        %v1345 = vunpack.c.l.b16 %v826
        %v1346 = vunpack.c.l.b16 %v827
        %v1347 = vunpack.c.l.b16 %v828
        %v1348 = vunpack.c.l.b16 %v829
        %v1349 = vpack.c.b16 %v1238, %v1237
        %v1350 = vpack.c.b16 %v1240, %v1239
        %v1351 = vpack.c.b16 %v1242, %v1241
        %v1352 = vpack.c.b16 %v1244, %v1243
        %v1353 = vpack.c.b16 %v1246, %v1245
        %v1354 = vpack.c.b16 %v1248, %v1247
        %v1355 = vpack.c.b16 %v1250, %v1249
        %v1356 = vpack.c.b16 %v1252, %v1251
        %v1357 = vpack.c.b16 %v1254, %v1253
        %v1358 = vpack.c.b16 %v1256, %v1255
        %v1359 = vpack.c.b16 %v1258, %v1257
        %v1360 = vpack.c.b16 %v1260, %v1259
        %v1361 = vpack.c.b16 %v1262, %v1261
        %v1362 = vpack.c.b16 %v1264, %v1263
        %v1363 = vpack.c.b16 %v1266, %v1265
        %v1364 = vpack.c.b16 %v1268, %v1267
        %v1365 = vpack.c.b16 %v1270, %v1269
        %v1366 = vpack.c.b16 %v1272, %v1271
        %v1367 = vpack.c.b16 %v1274, %v1273
        %v1368 = vpack.c.b16 %v1276, %v1275
        %v1369 = vpack.c.b16 %v1278, %v1277
        %v1370 = vpack.c.b16 %v1280, %v1279
        %v1371 = vpack.c.b16 %v1282, %v1281
        %v1372 = vpack.c.b16 %v1284, %v1283
        %v1373 = vpack.c.b16 %v1286, %v1285
        %v1374 = vpack.c.b16 %v1288, %v1287
        %v1375 = vpack.c.b16 %v1290, %v1289
        %v1376 = vpack.c.b16 %v1292, %v1291
        %v1377 = vpack.c.b16 %v1294, %v1293
        %v1378 = vpack.c.b16 %v1296, %v1295
        %v1379 = vpack.c.b16 %v1298, %v1297
        %v1380 = vpack.c.b16 %v1300, %v1299
        %v1381 = vpack.c.b16 %v1302, %v1301
        %v1382 = vpack.c.b16 %v1304, %v1303
        %v1383 = vpack.c.b16 %v1306, %v1305
        %v1384 = vpack.c.b16 %v1308, %v1307
        %v1385 = vpack.c.b16 %v1310, %v1309
        %v1386 = vpack.c.b16 %v1312, %v1311
        %v1387 = vpack.c.b16 %v1314, %v1313
        %v1388 = vpack.c.b16 %v1316, %v1315
        %v1389 = vpack.c.b16 %v1318, %v1317
        %v1390 = vpack.c.b16 %v1320, %v1319
        %v1391 = vpack.c.b16 %v1322, %v1321
        %v1392 = vpack.c.b16 %v1324, %v1323
        %v1393 = vpack.c.b16 %v1326, %v1325
        %v1394 = vpack.c.b16 %v1328, %v1327
        %v1395 = vpack.c.b16 %v1330, %v1329
        %v1396 = vpack.c.b16 %v1332, %v1331
        %v1397 = vpack.c.b16 %v1334, %v1333
        %v1398 = vpack.c.b16 %v1336, %v1335
        %v1399 = vpack.c.b16 %v1338, %v1337
        %v1400 = vpack.c.b16 %v1340, %v1339
        %v1401 = vpack.c.b16 %v1342, %v1341
        %v1402 = vpack.c.b16 %v1344, %v1343
        %v1403 = vpack.c.b16 %v1346, %v1345
        %v1404 = vpack.c.b16 %v1348, %v1347
        %1461 = vmatprep.subr.bf16.mxu0 0
        %1462 = vmatpush1.bf16.msra.mxu0 %v1349
        %1463 = vmatprep.subr.bf16.mxu0 0
        %1464 = vmatpush1.bf16.msra.mxu0 %v1350
        %1465 = vmatprep.subr.bf16.mxu0 0
        %1466 = vmatpush1.bf16.msra.mxu0 %v1351
        %1467 = vmatprep.subr.bf16.mxu0 0
        %1468 = vmatpush1.bf16.msra.mxu0 %v1352
        %1469 = vmatprep.subr.bf16.mxu0 0
        %1470 = vmatpush1.bf16.msra.mxu0 %v1353
        %1471 = vmatprep.subr.bf16.mxu0 0
        %1472 = vmatpush1.bf16.msra.mxu0 %v1354
        %1473 = vmatprep.subr.bf16.mxu0 0
        %1474 = vmatpush1.bf16.msra.mxu0 %v1355
        %1475 = vmatprep.subr.bf16.mxu0 0
        %1476 = vmatpush1.bf16.msra.mxu0 %v1356
        %1477 = vmatprep.subr.bf16.mxu0 0
        %1478 = vmatpush1.bf16.msra.mxu0 %v1357
        %1479 = vmatprep.subr.bf16.mxu0 0
        %1480 = vmatpush1.bf16.msra.mxu0 %v1358
        %1481 = vmatprep.subr.bf16.mxu0 0
        %1482 = vmatpush1.bf16.msra.mxu0 %v1359
        %1483 = vmatprep.subr.bf16.mxu0 0
        %1484 = vmatpush1.bf16.msra.mxu0 %v1360
        %1485 = vmatprep.subr.bf16.mxu0 0
        %1486 = vmatpush1.bf16.msra.mxu0 %v1361
        %1487 = vmatprep.subr.bf16.mxu0 0
        %1488 = vmatpush1.bf16.msra.mxu0 %v1362
        %1489 = vmatprep.subr.bf16.mxu0 0
        %1490 = vmatpush1.bf16.msra.mxu0 %v1363
        %1491 = vmatprep.subr.bf16.mxu0 0
        %1492 = vmatpush1.bf16.msra.mxu0 %v1364
        %1493 = vmatprep.mubr.bf16.mxu0 %v1014
        %1494 = vmatmul.mubr.bf16.gmra.mrb[0].mxu0 %v1013
        %v1495 = vpop.f32.mrb[0].mxu0
        %v1496 = vadd.f32 %v835, %v1495
        %v1497 = vpop.f32.mrb[0].mxu0
        %v1498 = vpop.f32.mrb[0].mxu0
        %v1499 = vadd.f32 %v835, %v1498
        %v1500 = vpop.f32.mrb[0].mxu0
        %1501 = vmatprep.mubr.bf16.mxu0 %v1021
        %1502 = vmatmul.mubr.bf16.gmra.mrb[0].mxu0 %v1020
        %v1503 = vpop.f32.mrb[0].mxu0
        %v1504 = vadd.f32 %v835, %v1503
        %v1505 = vpop.f32.mrb[0].mxu0
        %v1506 = vpop.f32.mrb[0].mxu0
        %v1507 = vadd.f32 %v835, %v1506
        %v1508 = vpop.f32.mrb[0].mxu0
        %1509 = vmatprep.mubr.bf16.mxu0 %v1028
        %1510 = vmatmul.mubr.bf16.gmra.mrb[0].mxu0 %v1027
        %v1511 = vpop.f32.mrb[0].mxu0
        %v1512 = vadd.f32 %v835, %v1511
        %v1513 = vpop.f32.mrb[0].mxu0
        %v1514 = vpop.f32.mrb[0].mxu0
        %v1515 = vadd.f32 %v835, %v1514
        %v1516 = vpop.f32.mrb[0].mxu0
        %1517 = vmatprep.mubr.bf16.mxu0 %v1035
        %1518 = vmatmul.mubr.bf16.gmra.mrb[0].mxu0 %v1034
        %v1519 = vpop.f32.mrb[0].mxu0
        %v1520 = vadd.f32 %v835, %v1519
        %v1521 = vpop.f32.mrb[0].mxu0
        %v1522 = vpop.f32.mrb[0].mxu0
        %v1523 = vadd.f32 %v835, %v1522
        %v1524 = vpop.f32.mrb[0].mxu0
        %1525 = vmatprep.mubr.bf16.mxu0 %v1042
        %1526 = vmatmul.mubr.bf16.gmra.mrb[0].mxu0 %v1041
        %v1527 = vpop.f32.mrb[0].mxu0
        %v1528 = vadd.f32 %v835, %v1527
        %v1529 = vpop.f32.mrb[0].mxu0
        %v1530 = vpop.f32.mrb[0].mxu0
        %v1531 = vadd.f32 %v835, %v1530
        %v1532 = vpop.f32.mrb[0].mxu0
        %1533 = vmatprep.mubr.bf16.mxu0 %v1049
        %1534 = vmatmul.mubr.bf16.gmra.mrb[0].mxu0 %v1048
        %v1535 = vpop.f32.mrb[0].mxu0
        %v1536 = vadd.f32 %v835, %v1535
        %v1537 = vpop.f32.mrb[0].mxu0
        %v1538 = vpop.f32.mrb[0].mxu0
        %v1539 = vadd.f32 %v835, %v1538
        %v1540 = vpop.f32.mrb[0].mxu0
        %1541 = vmatprep.mubr.bf16.mxu0 %v1056
        %1542 = vmatmul.mubr.bf16.gmra.mrb[0].mxu0 %v1055
        %v1543 = vpop.f32.mrb[0].mxu0
        %v1544 = vadd.f32 %v835, %v1543
        %v1545 = vpop.f32.mrb[0].mxu0
        %v1546 = vpop.f32.mrb[0].mxu0
        %v1547 = vadd.f32 %v835, %v1546
        %v1548 = vpop.f32.mrb[0].mxu0
        %1549 = vmatprep.mubr.bf16.mxu0 %v1063
        %1550 = vmatmul.mubr.bf16.gmra.mrb[0].mxu0 %v1062
        %v1551 = vpop.f32.mrb[0].mxu0
        %v1552 = vadd.f32 %v835, %v1551
        %v1553 = vpop.f32.mrb[0].mxu0
        %v1554 = vpop.f32.mrb[0].mxu0
        %v1555 = vadd.f32 %v835, %v1554
        %v1556 = vpop.f32.mrb[0].mxu0
        %1557 = vdwg.mxu0
        %1558 = vmatprep.subr.bf16.mxu0 0
        %1559 = vmatpush1.bf16.msra.mxu0 %v1365
        %1560 = vmatprep.subr.bf16.mxu0 0
        %1561 = vmatpush1.bf16.msra.mxu0 %v1366
        %1562 = vmatprep.subr.bf16.mxu0 0
        %1563 = vmatpush1.bf16.msra.mxu0 %v1367
        %1564 = vmatprep.subr.bf16.mxu0 0
        %1565 = vmatpush1.bf16.msra.mxu0 %v1368
        %1566 = vmatprep.subr.bf16.mxu0 0
        %1567 = vmatpush1.bf16.msra.mxu0 %v1369
        %1568 = vmatprep.subr.bf16.mxu0 0
        %1569 = vmatpush1.bf16.msra.mxu0 %v1370
        %1570 = vmatprep.subr.bf16.mxu0 0
        %1571 = vmatpush1.bf16.msra.mxu0 %v1371
        %1572 = vmatprep.subr.bf16.mxu0 0
        %1573 = vmatpush1.bf16.msra.mxu0 %v1372
        %1574 = vmatprep.subr.bf16.mxu0 0
        %1575 = vmatpush1.bf16.msra.mxu0 %v1373
        %1576 = vmatprep.subr.bf16.mxu0 0
        %1577 = vmatpush1.bf16.msra.mxu0 %v1374
        %1578 = vmatprep.subr.bf16.mxu0 0
        %1579 = vmatpush1.bf16.msra.mxu0 %v1375
        %1580 = vmatprep.subr.bf16.mxu0 0
        %1581 = vmatpush1.bf16.msra.mxu0 %v1376
        %1582 = vmatprep.subr.bf16.mxu0 0
        %1583 = vmatpush1.bf16.msra.mxu0 %v1377
        %1584 = vmatprep.subr.bf16.mxu0 0
        %1585 = vmatpush1.bf16.msra.mxu0 %v1378
        %1586 = vmatprep.subr.bf16.mxu0 0
        %1587 = vmatpush1.bf16.msra.mxu0 %v1379
        %1588 = vmatprep.subr.bf16.mxu0 0
        %1589 = vmatpush1.bf16.msra.mxu0 %v1380
        %1590 = vmatprep.mubr.bf16.mxu0 %v1016
        %1591 = vmatmul.mubr.bf16.gmra.mrb[0].mxu0 %v1015
        %v1592 = vpop.f32.mrb[0].mxu0
        %v1593 = vadd.f32 %v1496, %v1592
        %v1594 = vpop.f32.mrb[0].mxu0
        %v1595 = vpop.f32.mrb[0].mxu0
        %v1596 = vadd.f32 %v1499, %v1595
        %v1597 = vpop.f32.mrb[0].mxu0
        %1598 = vmatprep.mubr.bf16.mxu0 %v1023
        %1599 = vmatmul.mubr.bf16.gmra.mrb[0].mxu0 %v1022
        %v1600 = vpop.f32.mrb[0].mxu0
        %v1601 = vadd.f32 %v1504, %v1600
        %v1602 = vpop.f32.mrb[0].mxu0
        %v1603 = vpop.f32.mrb[0].mxu0
        %v1604 = vadd.f32 %v1507, %v1603
        %v1605 = vpop.f32.mrb[0].mxu0
        %1606 = vmatprep.mubr.bf16.mxu0 %v1030
        %1607 = vmatmul.mubr.bf16.gmra.mrb[0].mxu0 %v1029
        %v1608 = vpop.f32.mrb[0].mxu0
        %v1609 = vadd.f32 %v1512, %v1608
        %v1610 = vpop.f32.mrb[0].mxu0
        %v1611 = vpop.f32.mrb[0].mxu0
        %v1612 = vadd.f32 %v1515, %v1611
        %v1613 = vpop.f32.mrb[0].mxu0
        %1614 = vmatprep.mubr.bf16.mxu0 %v1037
        %1615 = vmatmul.mubr.bf16.gmra.mrb[0].mxu0 %v1036
        %v1616 = vpop.f32.mrb[0].mxu0
        %v1617 = vadd.f32 %v1520, %v1616
        %v1618 = vpop.f32.mrb[0].mxu0
        %v1619 = vpop.f32.mrb[0].mxu0
        %v1620 = vadd.f32 %v1523, %v1619
        %v1621 = vpop.f32.mrb[0].mxu0
        %1622 = vmatprep.mubr.bf16.mxu0 %v1044
        %1623 = vmatmul.mubr.bf16.gmra.mrb[0].mxu0 %v1043
        %v1624 = vpop.f32.mrb[0].mxu0
        %v1625 = vadd.f32 %v1528, %v1624
        %v1626 = vpop.f32.mrb[0].mxu0
        %v1627 = vpop.f32.mrb[0].mxu0
        %v1628 = vadd.f32 %v1531, %v1627
        %v1629 = vpop.f32.mrb[0].mxu0
        %1630 = vmatprep.mubr.bf16.mxu0 %v1051
        %1631 = vmatmul.mubr.bf16.gmra.mrb[0].mxu0 %v1050
        %v1632 = vpop.f32.mrb[0].mxu0
        %v1633 = vadd.f32 %v1536, %v1632
        %v1634 = vpop.f32.mrb[0].mxu0
        %v1635 = vpop.f32.mrb[0].mxu0
        %v1636 = vadd.f32 %v1539, %v1635
        %v1637 = vpop.f32.mrb[0].mxu0
        %1638 = vmatprep.mubr.bf16.mxu0 %v1058
        %1639 = vmatmul.mubr.bf16.gmra.mrb[0].mxu0 %v1057
        %v1640 = vpop.f32.mrb[0].mxu0
        %v1641 = vadd.f32 %v1544, %v1640
        %v1642 = vpop.f32.mrb[0].mxu0
        %v1643 = vpop.f32.mrb[0].mxu0
        %v1644 = vadd.f32 %v1547, %v1643
        %v1645 = vpop.f32.mrb[0].mxu0
        %1646 = vmatprep.mubr.bf16.mxu0 %v1065
        %1647 = vmatmul.mubr.bf16.gmra.mrb[0].mxu0 %v1064
        %v1648 = vpop.f32.mrb[0].mxu0
        %v1649 = vadd.f32 %v1552, %v1648
        %v1650 = vpop.f32.mrb[0].mxu0
        %v1651 = vpop.f32.mrb[0].mxu0
        %v1652 = vadd.f32 %v1555, %v1651
        %v1653 = vpop.f32.mrb[0].mxu0
        %1654 = vdwg.mxu0
        %1655 = vmatprep.subr.bf16.mxu0 0
        %1656 = vmatpush1.bf16.msra.mxu0 %v1381
        %1657 = vmatprep.subr.bf16.mxu0 0
        %1658 = vmatpush1.bf16.msra.mxu0 %v1382
        %1659 = vmatprep.subr.bf16.mxu0 0
        %1660 = vmatpush1.bf16.msra.mxu0 %v1383
        %1661 = vmatprep.subr.bf16.mxu0 0
        %1662 = vmatpush1.bf16.msra.mxu0 %v1384
        %1663 = vmatprep.subr.bf16.mxu0 0
        %1664 = vmatpush1.bf16.msra.mxu0 %v1385
        %1665 = vmatprep.subr.bf16.mxu0 0
        %1666 = vmatpush1.bf16.msra.mxu0 %v1386
        %1667 = vmatprep.subr.bf16.mxu0 0
        %1668 = vmatpush1.bf16.msra.mxu0 %v1387
        %1669 = vmatprep.subr.bf16.mxu0 0
        %1670 = vmatpush1.bf16.msra.mxu0 %v1388
        %1671 = vmatprep.subr.bf16.mxu0 0
        %1672 = vmatpush1.bf16.msra.mxu0 %v1389
        %1673 = vmatprep.subr.bf16.mxu0 0
        %1674 = vmatpush1.bf16.msra.mxu0 %v1390
        %1675 = vmatprep.subr.bf16.mxu0 0
        %1676 = vmatpush1.bf16.msra.mxu0 %v1391
        %1677 = vmatprep.subr.bf16.mxu0 0
        %1678 = vmatpush1.bf16.msra.mxu0 %v1392
        %1679 = vmatprep.subr.bf16.mxu0 0
        %1680 = vmatpush1.bf16.msra.mxu0 %v1393
        %1681 = vmatprep.subr.bf16.mxu0 0
        %1682 = vmatpush1.bf16.msra.mxu0 %v1394
        %1683 = vmatprep.subr.bf16.mxu0 0
        %1684 = vmatpush1.bf16.msra.mxu0 %v1395
        %1685 = vmatprep.subr.bf16.mxu0 0
        %1686 = vmatpush1.bf16.msra.mxu0 %v1396
        %1687 = vmatprep.mubr.bf16.mxu0 %v1018
        %1688 = vmatmul.mubr.bf16.gmra.mrb[0].mxu0 %v1017
        %v1689 = vpop.f32.mrb[0].mxu0
        %v1690 = vadd.f32 %v1593, %v1689
        %v1691 = vpop.f32.mrb[0].mxu0
        %v1692 = vpop.f32.mrb[0].mxu0
        %v1693 = vadd.f32 %v1596, %v1692
        %v1694 = vpop.f32.mrb[0].mxu0
        %1695 = vmatprep.mubr.bf16.mxu0 %v1025
        %1696 = vmatmul.mubr.bf16.gmra.mrb[0].mxu0 %v1024
        %v1697 = vpop.f32.mrb[0].mxu0
        %v1698 = vadd.f32 %v1601, %v1697
        %v1699 = vpop.f32.mrb[0].mxu0
        %v1700 = vpop.f32.mrb[0].mxu0
        %v1701 = vadd.f32 %v1604, %v1700
        %v1702 = vpop.f32.mrb[0].mxu0
        %1703 = vmatprep.mubr.bf16.mxu0 %v1032
        %1704 = vmatmul.mubr.bf16.gmra.mrb[0].mxu0 %v1031
        %v1705 = vpop.f32.mrb[0].mxu0
        %v1706 = vadd.f32 %v1609, %v1705
        %v1707 = vpop.f32.mrb[0].mxu0
        %v1708 = vpop.f32.mrb[0].mxu0
        %v1709 = vadd.f32 %v1612, %v1708
        %v1710 = vpop.f32.mrb[0].mxu0
        %1711 = vmatprep.mubr.bf16.mxu0 %v1039
        %1712 = vmatmul.mubr.bf16.gmra.mrb[0].mxu0 %v1038
        %v1713 = vpop.f32.mrb[0].mxu0
        %v1714 = vadd.f32 %v1617, %v1713
        %v1715 = vpop.f32.mrb[0].mxu0
        %v1716 = vpop.f32.mrb[0].mxu0
        %v1717 = vadd.f32 %v1620, %v1716
        %v1718 = vpop.f32.mrb[0].mxu0
        %1719 = vmatprep.mubr.bf16.mxu0 %v1046
        %1720 = vmatmul.mubr.bf16.gmra.mrb[0].mxu0 %v1045
        %v1721 = vpop.f32.mrb[0].mxu0
        %v1722 = vadd.f32 %v1625, %v1721
        %v1723 = vpop.f32.mrb[0].mxu0
        %v1724 = vpop.f32.mrb[0].mxu0
        %v1725 = vadd.f32 %v1628, %v1724
        %v1726 = vpop.f32.mrb[0].mxu0
        %1727 = vmatprep.mubr.bf16.mxu0 %v1053
        %1728 = vmatmul.mubr.bf16.gmra.mrb[0].mxu0 %v1052
        %v1729 = vpop.f32.mrb[0].mxu0
        %v1730 = vadd.f32 %v1633, %v1729
        %v1731 = vpop.f32.mrb[0].mxu0
        %v1732 = vpop.f32.mrb[0].mxu0
        %v1733 = vadd.f32 %v1636, %v1732
        %v1734 = vpop.f32.mrb[0].mxu0
        %1735 = vmatprep.mubr.bf16.mxu0 %v1060
        %1736 = vmatmul.mubr.bf16.gmra.mrb[0].mxu0 %v1059
        %v1737 = vpop.f32.mrb[0].mxu0
        %v1738 = vadd.f32 %v1641, %v1737
        %v1739 = vpop.f32.mrb[0].mxu0
        %v1740 = vpop.f32.mrb[0].mxu0
        %v1741 = vadd.f32 %v1644, %v1740
        %v1742 = vpop.f32.mrb[0].mxu0
        %1743 = vmatprep.mubr.bf16.mxu0 %v1067
        %1744 = vmatmul.mubr.bf16.gmra.mrb[0].mxu0 %v1066
        %v1745 = vpop.f32.mrb[0].mxu0
        %v1746 = vadd.f32 %v1649, %v1745
        %v1747 = vpop.f32.mrb[0].mxu0
        %v1748 = vpop.f32.mrb[0].mxu0
        %v1749 = vadd.f32 %v1652, %v1748
        %v1750 = vpop.f32.mrb[0].mxu0
        %1751 = vdwg.mxu0
        %1752 = vmatprep.subr.bf16.mxu0 0
        %1753 = vmatpush1.bf16.msra.mxu0 %v1397
        %1754 = vmatprep.subr.bf16.mxu0 0
        %1755 = vmatpush1.bf16.msra.mxu0 %v1398
        %1756 = vmatprep.subr.bf16.mxu0 0
        %1757 = vmatpush1.bf16.msra.mxu0 %v1399
        %1758 = vmatprep.subr.bf16.mxu0 0
        %1759 = vmatpush1.bf16.msra.mxu0 %v1400
        %1760 = vmatprep.subr.bf16.mxu0 0
        %1761 = vmatpush1.bf16.msra.mxu0 %v1401
        %1762 = vmatprep.subr.bf16.mxu0 0
        %1763 = vmatpush1.bf16.msra.mxu0 %v1402
        %1764 = vmatprep.subr.bf16.mxu0 0
        %1765 = vmatpush1.bf16.msra.mxu0 %v1403
        %1766 = vmatprep.subr.bf16.mxu0 0
        %1767 = vmatpush1.bf16.msra.mxu0 %v1404
        %1768 = vmatprep.subr.bf16.mxu0 0
        %1769 = vmatpush1.bf16.msra.mxu0 0
        %1770 = vmatprep.subr.bf16.mxu0 0
        %1771 = vmatpush1.bf16.msra.mxu0 0
        %1772 = vmatprep.subr.bf16.mxu0 0
        %1773 = vmatpush1.bf16.msra.mxu0 0
        %1774 = vmatprep.subr.bf16.mxu0 0
        %1775 = vmatpush1.bf16.msra.mxu0 0
        %1776 = vmatprep.subr.bf16.mxu0 0
        %1777 = vmatpush1.bf16.msra.mxu0 0
        %1778 = vmatprep.subr.bf16.mxu0 0
        %1779 = vmatpush1.bf16.msra.mxu0 0
        %1780 = vmatprep.subr.bf16.mxu0 0
        %1781 = vmatpush1.bf16.msra.mxu0 0
        %1782 = vmatprep.subr.bf16.mxu0 0
        %1783 = vmatpush1.bf16.msra.mxu0 0
        %1784 = vmatprep.mubr.bf16.mxu0 0
        %1785 = vmatmul.mubr.bf16.gmra.mrb[0].mxu0 %v1019
        %v1786 = vpop.f32.mrb[0].mxu0
        %v1787 = vadd.f32 %v1690, %v1786
        %v1788 = vpop.f32.mrb[0].mxu0
        %v1789 = vpop.f32.mrb[0].mxu0
        %v1790 = vadd.f32 %v1693, %v1789
        %v1791 = vpop.f32.mrb[0].mxu0
        %1792 = vmatprep.mubr.bf16.mxu0 0
        %1793 = vmatmul.mubr.bf16.gmra.mrb[0].mxu0 %v1026
        %v1794 = vpop.f32.mrb[0].mxu0
        %v1795 = vadd.f32 %v1698, %v1794
        %v1796 = vpop.f32.mrb[0].mxu0
        %v1797 = vpop.f32.mrb[0].mxu0
        %v1798 = vadd.f32 %v1701, %v1797
        %v1799 = vpop.f32.mrb[0].mxu0
        %1800 = vmatprep.mubr.bf16.mxu0 0
        %1801 = vmatmul.mubr.bf16.gmra.mrb[0].mxu0 %v1033
        %v1802 = vpop.f32.mrb[0].mxu0
        %v1803 = vadd.f32 %v1706, %v1802
        %v1804 = vpop.f32.mrb[0].mxu0
        %v1805 = vpop.f32.mrb[0].mxu0
        %v1806 = vadd.f32 %v1709, %v1805
        %v1807 = vpop.f32.mrb[0].mxu0
        %1808 = vmatprep.mubr.bf16.mxu0 0
        %1809 = vmatmul.mubr.bf16.gmra.mrb[0].mxu0 %v1040
        %v1810 = vpop.f32.mrb[0].mxu0
        %v1811 = vadd.f32 %v1714, %v1810
        %v1812 = vpop.f32.mrb[0].mxu0
        %v1813 = vpop.f32.mrb[0].mxu0
        %v1814 = vadd.f32 %v1717, %v1813
        %v1815 = vpop.f32.mrb[0].mxu0
        %1816 = vmatprep.mubr.bf16.mxu0 0
        %1817 = vmatmul.mubr.bf16.gmra.mrb[0].mxu0 %v1047
        %v1818 = vpop.f32.mrb[0].mxu0
        %v1819 = vadd.f32 %v1722, %v1818
        %v1820 = vpop.f32.mrb[0].mxu0
        %v1821 = vpop.f32.mrb[0].mxu0
        %v1822 = vadd.f32 %v1725, %v1821
        %v1823 = vpop.f32.mrb[0].mxu0
        %1824 = vmatprep.mubr.bf16.mxu0 0
        %1825 = vmatmul.mubr.bf16.gmra.mrb[0].mxu0 %v1054
        %v1826 = vpop.f32.mrb[0].mxu0
        %v1827 = vadd.f32 %v1730, %v1826
        %v1828 = vpop.f32.mrb[0].mxu0
        %v1829 = vpop.f32.mrb[0].mxu0
        %v1830 = vadd.f32 %v1733, %v1829
        %v1831 = vpop.f32.mrb[0].mxu0
        %1832 = vmatprep.mubr.bf16.mxu0 0
        %1833 = vmatmul.mubr.bf16.gmra.mrb[0].mxu0 %v1061
        %v1834 = vpop.f32.mrb[0].mxu0
        %v1835 = vadd.f32 %v1738, %v1834
        %v1836 = vpop.f32.mrb[0].mxu0
        %v1837 = vpop.f32.mrb[0].mxu0
        %v1838 = vadd.f32 %v1741, %v1837
        %v1839 = vpop.f32.mrb[0].mxu0
        %1840 = vmatprep.mubr.bf16.mxu0 0
        %1841 = vmatmul.mubr.bf16.gmra.mrb[0].mxu0 %v1068
        %v1842 = vpop.f32.mrb[0].mxu0
        %v1843 = vadd.f32 %v1746, %v1842
        %v1844 = vpop.f32.mrb[0].mxu0
        %v1845 = vpop.f32.mrb[0].mxu0
        %v1846 = vadd.f32 %v1749, %v1845
        %v1847 = vpop.f32.mrb[0].mxu0
        %1848 = vdwg.mxu0
        %v1849 = vmax.f32 %v1787, 0.0
        %v1850 = vmax.f32 %v1790, 0.0
        %v1851 = vmax.f32 %v1795, 0.0
        %v1852 = vmax.f32 %v1798, 0.0
        %v1853 = vmax.f32 %v1803, 0.0
        %v1854 = vmax.f32 %v1806, 0.0
        %v1855 = vmax.f32 %v1811, 0.0
        %v1856 = vmax.f32 %v1814, 0.0
        %v1857 = vmax.f32 %v1819, 0.0
        %v1858 = vmax.f32 %v1822, 0.0
        %v1859 = vmax.f32 %v1827, 0.0
        %v1860 = vmax.f32 %v1830, 0.0
        %v1861 = vmax.f32 %v1835, 0.0
        %v1862 = vmax.f32 %v1838, 0.0
        %v1863 = vmax.f32 %v1843, 0.0
        %v1864 = vmax.f32 %v1846, 0.0
        %v1865 = vpack.c.bf16 %v1850, %v1849
        %v1866 = vpack.c.bf16 %v1852, %v1851
        %v1867 = vpack.c.bf16 %v1854, %v1853
        %v1868 = vpack.c.bf16 %v1856, %v1855
        %v1869 = vpack.c.bf16 %v1858, %v1857
        %v1870 = vpack.c.bf16 %v1860, %v1859
        %v1871 = vpack.c.bf16 %v1862, %v1861
        %v1872 = vpack.c.bf16 %v1864, %v1863
        %v1873 = vld [vmem:[%s2] sm:$0xf]
        %v1874 = vld [vmem:[%s2 + $0x4] sm:$0xf]
        %v1875 = vld [vmem:[%s2 + $0x8] sm:$0xf]
        %v1876 = vld [vmem:[%s2 + $0xc] sm:$0xf]
        %v1877 = vld [vmem:[%s2 + $0x10] sm:$0xf]
        %v1878 = vld [vmem:[%s2 + $0x14] sm:$0xf]
        %v1879 = vld [vmem:[%s2 + $0x18] sm:$0xf]
        %v1880 = vld [vmem:[%s2 + $0x1c] sm:$0xf]
        %v1881 = vld [vmem:[%s2 + $0x20] sm:$0xf]
        %v1882 = vld [vmem:[%s2 + $0x24] sm:$0xf]
        %v1883 = vld [vmem:[%s2 + $0x28] sm:$0xf]
        %v1884 = vld [vmem:[%s2 + $0x2c] sm:$0xf]
        %v1885 = vld [vmem:[%s2 + $0x30] sm:$0xf]
        %v1886 = vld [vmem:[%s2 + $0x34] sm:$0xf]
        %v1887 = vld [vmem:[%s2 + $0x38] sm:$0xf]
        %v1888 = vld [vmem:[%s2 + $0x3c] sm:$0xf]
        %v1889 = vld [vmem:[%s11] sm:$0x1]
        %v1891 = vlaneseq
        %v1892 = vshrl.u32 %v1891, 7
        %v1893 = vsub.s32 0, %v1892
        %v1894 = vrot.slane %v1889, %v1893
        %v1912 = vunpack.c.l.b16 %v1873
        %v1913 = vunpack.c.l.b16 %v1874
        %v1914 = vunpack.c.l.b16 %v1875
        %v1915 = vunpack.c.l.b16 %v1876
        %v1916 = vunpack.c.l.b16 %v1877
        %v1917 = vunpack.c.l.b16 %v1878
        %v1918 = vunpack.c.l.b16 %v1879
        %v1919 = vunpack.c.l.b16 %v1880
        %v1920 = vunpack.c.l.b16 %v1881
        %v1921 = vunpack.c.l.b16 %v1882
        %v1922 = vunpack.c.l.b16 %v1883
        %v1923 = vunpack.c.l.b16 %v1884
        %v1924 = vunpack.c.l.b16 %v1885
        %v1925 = vunpack.c.l.b16 %v1886
        %v1926 = vunpack.c.l.b16 %v1887
        %v1927 = vunpack.c.l.b16 %v1888
        %v1928 = vpack.c.b16 %v1913, %v1912
        %v1929 = vpack.c.b16 %v1915, %v1914
        %v1930 = vpack.c.b16 %v1917, %v1916
        %v1931 = vpack.c.b16 %v1919, %v1918
        %v1932 = vpack.c.b16 %v1921, %v1920
        %v1933 = vpack.c.b16 %v1923, %v1922
        %v1934 = vpack.c.b16 %v1925, %v1924
        %v1935 = vpack.c.b16 %v1927, %v1926
        %1944 = vmatprep.subr.bf16.mxu0 0
        %1945 = vmatpush1.bf16.msra.mxu0 %v1928
        %1946 = vmatprep.subr.bf16.mxu0 0
        %1947 = vmatpush1.bf16.msra.mxu0 %v1929
        %1948 = vmatprep.subr.bf16.mxu0 0
        %1949 = vmatpush1.bf16.msra.mxu0 %v1930
        %1950 = vmatprep.subr.bf16.mxu0 0
        %1951 = vmatpush1.bf16.msra.mxu0 %v1931
        %1952 = vmatprep.subr.bf16.mxu0 0
        %1953 = vmatpush1.bf16.msra.mxu0 %v1932
        %1954 = vmatprep.subr.bf16.mxu0 0
        %1955 = vmatpush1.bf16.msra.mxu0 %v1933
        %1956 = vmatprep.subr.bf16.mxu0 0
        %1957 = vmatpush1.bf16.msra.mxu0 %v1934
        %1958 = vmatprep.subr.bf16.mxu0 0
        %1959 = vmatpush1.bf16.msra.mxu0 %v1935
        %1960 = vmatprep.subr.bf16.mxu0 0
        %1961 = vmatpush1.bf16.msra.mxu0 0
        %1962 = vmatprep.subr.bf16.mxu0 0
        %1963 = vmatpush1.bf16.msra.mxu0 0
        %1964 = vmatprep.subr.bf16.mxu0 0
        %1965 = vmatpush1.bf16.msra.mxu0 0
        %1966 = vmatprep.subr.bf16.mxu0 0
        %1967 = vmatpush1.bf16.msra.mxu0 0
        %1968 = vmatprep.subr.bf16.mxu0 0
        %1969 = vmatpush1.bf16.msra.mxu0 0
        %1970 = vmatprep.subr.bf16.mxu0 0
        %1971 = vmatpush1.bf16.msra.mxu0 0
        %1972 = vmatprep.subr.bf16.mxu0 0
        %1973 = vmatpush1.bf16.msra.mxu0 0
        %1974 = vmatprep.subr.bf16.mxu0 0
        %1975 = vmatpush1.bf16.msra.mxu0 0
        %1976 = vmatprep.mubr.bf16.mxu0 0
        %1977 = vmatmul.mubr.bf16.gmra.mrb[0].mxu0 %v1865
        %v1978 = vpop.f32.mrb[0].mxu0
        %v1979 = vadd.f32 %v1894, %v1978
        %v1980 = vpop.f32.mrb[0].mxu0
        %v1981 = vpop.f32.mrb[0].mxu0
        %v1982 = vadd.f32 %v1894, %v1981
        %v1983 = vpop.f32.mrb[0].mxu0
        %1984 = vmatprep.mubr.bf16.mxu0 0
        %1985 = vmatmul.mubr.bf16.gmra.mrb[0].mxu0 %v1866
        %v1986 = vpop.f32.mrb[0].mxu0
        %v1987 = vadd.f32 %v1894, %v1986
        %v1988 = vpop.f32.mrb[0].mxu0
        %v1989 = vpop.f32.mrb[0].mxu0
        %v1990 = vadd.f32 %v1894, %v1989
        %v1991 = vpop.f32.mrb[0].mxu0
        %1992 = vmatprep.mubr.bf16.mxu0 0
        %1993 = vmatmul.mubr.bf16.gmra.mrb[0].mxu0 %v1867
        %v1994 = vpop.f32.mrb[0].mxu0
        %v1995 = vadd.f32 %v1894, %v1994
        %v1996 = vpop.f32.mrb[0].mxu0
        %v1997 = vpop.f32.mrb[0].mxu0
        %v1998 = vadd.f32 %v1894, %v1997
        %v1999 = vpop.f32.mrb[0].mxu0
        %2000 = vmatprep.mubr.bf16.mxu0 0
        %2001 = vmatmul.mubr.bf16.gmra.mrb[0].mxu0 %v1868
        %v2002 = vpop.f32.mrb[0].mxu0
        %v2003 = vadd.f32 %v1894, %v2002
        %v2004 = vpop.f32.mrb[0].mxu0
        %v2005 = vpop.f32.mrb[0].mxu0
        %v2006 = vadd.f32 %v1894, %v2005
        %v2007 = vpop.f32.mrb[0].mxu0
        %2008 = vmatprep.mubr.bf16.mxu0 0
        %2009 = vmatmul.mubr.bf16.gmra.mrb[0].mxu0 %v1869
        %v2010 = vpop.f32.mrb[0].mxu0
        %v2011 = vadd.f32 %v1894, %v2010
        %v2012 = vpop.f32.mrb[0].mxu0
        %v2013 = vpop.f32.mrb[0].mxu0
        %v2014 = vadd.f32 %v1894, %v2013
        %v2015 = vpop.f32.mrb[0].mxu0
        %2016 = vmatprep.mubr.bf16.mxu0 0
        %2017 = vmatmul.mubr.bf16.gmra.mrb[0].mxu0 %v1870
        %v2018 = vpop.f32.mrb[0].mxu0
        %v2019 = vadd.f32 %v1894, %v2018
        %v2020 = vpop.f32.mrb[0].mxu0
        %v2021 = vpop.f32.mrb[0].mxu0
        %v2022 = vadd.f32 %v1894, %v2021
        %v2023 = vpop.f32.mrb[0].mxu0
        %2024 = vmatprep.mubr.bf16.mxu0 0
        %2025 = vmatmul.mubr.bf16.gmra.mrb[0].mxu0 %v1871
        %v2026 = vpop.f32.mrb[0].mxu0
        %v2027 = vadd.f32 %v1894, %v2026
        %v2028 = vpop.f32.mrb[0].mxu0
        %v2029 = vpop.f32.mrb[0].mxu0
        %v2030 = vadd.f32 %v1894, %v2029
        %v2031 = vpop.f32.mrb[0].mxu0
        %2032 = vmatprep.mubr.bf16.mxu0 0
        %2033 = vmatmul.mubr.bf16.gmra.mrb[0].mxu0 %v1872
        %v2034 = vpop.f32.mrb[0].mxu0
        %v2035 = vadd.f32 %v1894, %v2034
        %v2036 = vpop.f32.mrb[0].mxu0
        %v2037 = vpop.f32.mrb[0].mxu0
        %v2038 = vadd.f32 %v1894, %v2037
        %v2039 = vpop.f32.mrb[0].mxu0
        %2040 = vdwg.mxu0
        %v2041 = vmax.f32 %v1979, 0.0
        %v2042 = vmax.f32 %v1982, 0.0
        %v2043 = vmax.f32 %v1987, 0.0
        %v2044 = vmax.f32 %v1990, 0.0
        %v2045 = vmax.f32 %v1995, 0.0
        %v2046 = vmax.f32 %v1998, 0.0
        %v2047 = vmax.f32 %v2003, 0.0
        %v2048 = vmax.f32 %v2006, 0.0
        %v2049 = vmax.f32 %v2011, 0.0
        %v2050 = vmax.f32 %v2014, 0.0
        %v2051 = vmax.f32 %v2019, 0.0
        %v2052 = vmax.f32 %v2022, 0.0
        %v2053 = vmax.f32 %v2027, 0.0
        %v2054 = vmax.f32 %v2030, 0.0
        %v2055 = vmax.f32 %v2035, 0.0
        %v2056 = vmax.f32 %v2038, 0.0
        %v2057 = vpack.c.bf16 %v2042, %v2041
        %v2058 = vpack.c.bf16 %v2044, %v2043
        %v2059 = vpack.c.bf16 %v2046, %v2045
        %v2060 = vpack.c.bf16 %v2048, %v2047
        %v2061 = vpack.c.bf16 %v2050, %v2049
        %v2062 = vpack.c.bf16 %v2052, %v2051
        %v2063 = vpack.c.bf16 %v2054, %v2053
        %v2064 = vpack.c.bf16 %v2056, %v2055
        %v2065 = vld [vmem:[%s3] sm:$0xf]
        %v2066 = vld [vmem:[%s3 + $0x4] sm:$0xf]
        %v2067 = vld [vmem:[%s3 + $0x8] sm:$0xf]
        %v2068 = vld [vmem:[%s3 + $0xc] sm:$0xf]
        %v2069 = vld [vmem:[%s3 + $0x10] sm:$0xf]
        %v2070 = vld [vmem:[%s3 + $0x14] sm:$0xf]
        %v2071 = vld [vmem:[%s3 + $0x18] sm:$0xf]
        %v2072 = vld [vmem:[%s3 + $0x1c] sm:$0xf]
        %v2073 = vld [vmem:[%s3 + $0x20] sm:$0xf]
        %v2074 = vld [vmem:[%s3 + $0x24] sm:$0xf]
        %v2075 = vld [vmem:[%s3 + $0x28] sm:$0xf]
        %v2076 = vld [vmem:[%s3 + $0x2c] sm:$0xf]
        %v2077 = vld [vmem:[%s12] sm:$0x1]
        %v2079 = vlaneseq
        %v2080 = vshrl.u32 %v2079, 7
        %v2081 = vsub.s32 0, %v2080
        %v2082 = vrot.slane %v2077, %v2081
        %v2096 = vunpack.c.l.b16 %v2065
        %v2097 = vunpack.c.l.b16 %v2066
        %v2098 = vunpack.c.l.b16 %v2067
        %v2099 = vunpack.c.l.b16 %v2068
        %v2100 = vunpack.c.l.b16 %v2069
        %v2101 = vunpack.c.l.b16 %v2070
        %v2102 = vunpack.c.l.b16 %v2071
        %v2103 = vunpack.c.l.b16 %v2072
        %v2104 = vunpack.c.l.b16 %v2073
        %v2105 = vunpack.c.l.b16 %v2074
        %v2106 = vunpack.c.l.b16 %v2075
        %v2107 = vunpack.c.l.b16 %v2076
        %v2108 = vpack.c.b16 %v2097, %v2096
        %v2109 = vpack.c.b16 %v2099, %v2098
        %v2110 = vpack.c.b16 %v2101, %v2100
        %v2111 = vpack.c.b16 %v2103, %v2102
        %v2112 = vpack.c.b16 %v2105, %v2104
        %v2113 = vpack.c.b16 %v2107, %v2106
        %vm2120 = vcmask 785408
        %v2122 = vsel %vm2120, %v2057, 0
        %v2125 = vsel %vm2120, %v2058, 0
        %v2128 = vsel %vm2120, %v2059, 0
        %v2131 = vsel %vm2120, %v2060, 0
        %v2134 = vsel %vm2120, %v2061, 0
        %v2137 = vsel %vm2120, %v2062, 0
        %v2140 = vsel %vm2120, %v2063, 0
        %v2143 = vsel %vm2120, %v2064, 0
        %2145 = vmatprep.subr.bf16.mxu0 0
        %2146 = vmatpush1.bf16.msra.mxu0 %v2108
        %2147 = vmatprep.subr.bf16.mxu0 0
        %2148 = vmatpush1.bf16.msra.mxu0 %v2109
        %2149 = vmatprep.subr.bf16.mxu0 0
        %2150 = vmatpush1.bf16.msra.mxu0 %v2110
        %2151 = vmatprep.subr.bf16.mxu0 0
        %2152 = vmatpush1.bf16.msra.mxu0 %v2111
        %2153 = vmatprep.subr.bf16.mxu0 0
        %2154 = vmatpush1.bf16.msra.mxu0 %v2112
        %2155 = vmatprep.subr.bf16.mxu0 0
        %2156 = vmatpush1.bf16.msra.mxu0 %v2113
        %2157 = vmatprep.subr.bf16.mxu0 0
        %2158 = vmatpush1.bf16.msra.mxu0 0
        %2159 = vmatprep.subr.bf16.mxu0 0
        %2160 = vmatpush1.bf16.msra.mxu0 0
        %2161 = vmatprep.subr.bf16.mxu0 0
        %2162 = vmatpush1.bf16.msra.mxu0 0
        %2163 = vmatprep.subr.bf16.mxu0 0
        %2164 = vmatpush1.bf16.msra.mxu0 0
        %2165 = vmatprep.subr.bf16.mxu0 0
        %2166 = vmatpush1.bf16.msra.mxu0 0
        %2167 = vmatprep.subr.bf16.mxu0 0
        %2168 = vmatpush1.bf16.msra.mxu0 0
        %2169 = vmatprep.subr.bf16.mxu0 0
        %2170 = vmatpush1.bf16.msra.mxu0 0
        %2171 = vmatprep.subr.bf16.mxu0 0
        %2172 = vmatpush1.bf16.msra.mxu0 0
        %2173 = vmatprep.subr.bf16.mxu0 0
        %2174 = vmatpush1.bf16.msra.mxu0 0
        %2175 = vmatprep.subr.bf16.mxu0 0
        %2176 = vmatpush1.bf16.msra.mxu0 0
        %2177 = vmatprep.mubr.bf16.mxu0 0
        %2178 = vmatmul.mubr.bf16.gmra.mrb[0].mxu0 %v2122
        %v2179 = vpop.f32.mrb[0].mxu0
        %v2180 = vadd.f32 %v2082, %v2179
        %v2181 = vpop.f32.mrb[0].mxu0
        %v2182 = vpop.f32.mrb[0].mxu0
        %v2183 = vadd.f32 %v2082, %v2182
        %v2184 = vpop.f32.mrb[0].mxu0
        %2185 = vmatprep.mubr.bf16.mxu0 0
        %2186 = vmatmul.mubr.bf16.gmra.mrb[0].mxu0 %v2125
        %v2187 = vpop.f32.mrb[0].mxu0
        %v2188 = vadd.f32 %v2082, %v2187
        %v2189 = vpop.f32.mrb[0].mxu0
        %v2190 = vpop.f32.mrb[0].mxu0
        %v2191 = vadd.f32 %v2082, %v2190
        %v2192 = vpop.f32.mrb[0].mxu0
        %2193 = vmatprep.mubr.bf16.mxu0 0
        %2194 = vmatmul.mubr.bf16.gmra.mrb[0].mxu0 %v2128
        %v2195 = vpop.f32.mrb[0].mxu0
        %v2196 = vadd.f32 %v2082, %v2195
        %v2197 = vpop.f32.mrb[0].mxu0
        %v2198 = vpop.f32.mrb[0].mxu0
        %v2199 = vadd.f32 %v2082, %v2198
        %v2200 = vpop.f32.mrb[0].mxu0
        %2201 = vmatprep.mubr.bf16.mxu0 0
        %2202 = vmatmul.mubr.bf16.gmra.mrb[0].mxu0 %v2131
        %v2203 = vpop.f32.mrb[0].mxu0
        %v2204 = vadd.f32 %v2082, %v2203
        %v2205 = vpop.f32.mrb[0].mxu0
        %v2206 = vpop.f32.mrb[0].mxu0
        %v2207 = vadd.f32 %v2082, %v2206
        %v2208 = vpop.f32.mrb[0].mxu0
        %2209 = vmatprep.mubr.bf16.mxu0 0
        %2210 = vmatmul.mubr.bf16.gmra.mrb[0].mxu0 %v2134
        %v2211 = vpop.f32.mrb[0].mxu0
        %v2212 = vadd.f32 %v2082, %v2211
        %v2213 = vpop.f32.mrb[0].mxu0
        %v2214 = vpop.f32.mrb[0].mxu0
        %v2215 = vadd.f32 %v2082, %v2214
        %v2216 = vpop.f32.mrb[0].mxu0
        %2217 = vmatprep.mubr.bf16.mxu0 0
        %2218 = vmatmul.mubr.bf16.gmra.mrb[0].mxu0 %v2137
        %v2219 = vpop.f32.mrb[0].mxu0
        %v2220 = vadd.f32 %v2082, %v2219
        %v2221 = vpop.f32.mrb[0].mxu0
        %v2222 = vpop.f32.mrb[0].mxu0
        %v2223 = vadd.f32 %v2082, %v2222
        %v2224 = vpop.f32.mrb[0].mxu0
        %2225 = vmatprep.mubr.bf16.mxu0 0
        %2226 = vmatmul.mubr.bf16.gmra.mrb[0].mxu0 %v2140
        %v2227 = vpop.f32.mrb[0].mxu0
        %v2228 = vadd.f32 %v2082, %v2227
        %v2229 = vpop.f32.mrb[0].mxu0
        %v2230 = vpop.f32.mrb[0].mxu0
        %v2231 = vadd.f32 %v2082, %v2230
        %v2232 = vpop.f32.mrb[0].mxu0
        %2233 = vmatprep.mubr.bf16.mxu0 0
        %2234 = vmatmul.mubr.bf16.gmra.mrb[0].mxu0 %v2143
        %v2235 = vpop.f32.mrb[0].mxu0
        %v2236 = vadd.f32 %v2082, %v2235
        %v2237 = vpop.f32.mrb[0].mxu0
        %v2238 = vpop.f32.mrb[0].mxu0
        %v2239 = vadd.f32 %v2082, %v2238
        %v2240 = vpop.f32.mrb[0].mxu0
        %2241 = vdwg.mxu0
        %v2242 = vmax.f32 %v2180, 0.0
        %v2243 = vmax.f32 %v2183, 0.0
        %v2244 = vmax.f32 %v2188, 0.0
        %v2245 = vmax.f32 %v2191, 0.0
        %v2246 = vmax.f32 %v2196, 0.0
        %v2247 = vmax.f32 %v2199, 0.0
        %v2248 = vmax.f32 %v2204, 0.0
        %v2249 = vmax.f32 %v2207, 0.0
        %v2250 = vmax.f32 %v2212, 0.0
        %v2251 = vmax.f32 %v2215, 0.0
        %v2252 = vmax.f32 %v2220, 0.0
        %v2253 = vmax.f32 %v2223, 0.0
        %v2254 = vmax.f32 %v2228, 0.0
        %v2255 = vmax.f32 %v2231, 0.0
        %v2256 = vmax.f32 %v2236, 0.0
        %v2257 = vmax.f32 %v2239, 0.0
        %v2258 = vpack.c.bf16 %v2243, %v2242
        %v2259 = vpack.c.bf16 %v2245, %v2244
        %v2260 = vpack.c.bf16 %v2247, %v2246
        %v2261 = vpack.c.bf16 %v2249, %v2248
        %v2262 = vpack.c.bf16 %v2251, %v2250
        %v2263 = vpack.c.bf16 %v2253, %v2252
        %v2264 = vpack.c.bf16 %v2255, %v2254
        %v2265 = vpack.c.bf16 %v2257, %v2256
        %v2266 = vld [vmem:[%s4] sm:$0xf]
        %v2267 = vld [vmem:[%s4 + $0x4] sm:$0xf]
        %v2268 = vld [vmem:[%s4 + $0x8] sm:$0xf]
        %v2269 = vld [vmem:[%s4 + $0xc] sm:$0xf]
        %v2270 = vld [vmem:[%s4 + $0x10] sm:$0xf]
        %v2271 = vld [vmem:[%s4 + $0x14] sm:$0xf]
        %v2272 = vld [vmem:[%s4 + $0x18] sm:$0xf]
        %v2273 = vld [vmem:[%s4 + $0x1c] sm:$0xf]
        %v2274 = vld [vmem:[%s13] sm:$0x1]
        %v2276 = vlaneseq
        %v2277 = vshrl.u32 %v2276, 7
        %v2278 = vsub.s32 0, %v2277
        %v2279 = vrot.slane %v2274, %v2278
        %v2289 = vunpack.c.l.b16 %v2266
        %v2290 = vunpack.c.l.b16 %v2267
        %v2291 = vunpack.c.l.b16 %v2268
        %v2292 = vunpack.c.l.b16 %v2269
        %v2293 = vunpack.c.l.b16 %v2270
        %v2294 = vunpack.c.l.b16 %v2271
        %v2295 = vunpack.c.l.b16 %v2272
        %v2296 = vunpack.c.l.b16 %v2273
        %v2297 = vpack.c.b16 %v2290, %v2289
        %v2298 = vpack.c.b16 %v2292, %v2291
        %v2299 = vpack.c.b16 %v2294, %v2293
        %v2300 = vpack.c.b16 %v2296, %v2295
        %vm2305 = vcmask 523264
        %v2307 = vsel %vm2305, %v2258, 0
        %v2310 = vsel %vm2305, %v2259, 0
        %v2313 = vsel %vm2305, %v2260, 0
        %v2316 = vsel %vm2305, %v2261, 0
        %v2319 = vsel %vm2305, %v2262, 0
        %v2322 = vsel %vm2305, %v2263, 0
        %v2325 = vsel %vm2305, %v2264, 0
        %v2328 = vsel %vm2305, %v2265, 0
        %2330 = vmatprep.subr.bf16.mxu0 0
        %2331 = vmatpush1.bf16.msra.mxu0 %v2297
        %2332 = vmatprep.subr.bf16.mxu0 0
        %2333 = vmatpush1.bf16.msra.mxu0 %v2298
        %2334 = vmatprep.subr.bf16.mxu0 0
        %2335 = vmatpush1.bf16.msra.mxu0 %v2299
        %2336 = vmatprep.subr.bf16.mxu0 0
        %2337 = vmatpush1.bf16.msra.mxu0 %v2300
        %2338 = vmatprep.subr.bf16.mxu0 0
        %2339 = vmatpush1.bf16.msra.mxu0 0
        %2340 = vmatprep.subr.bf16.mxu0 0
        %2341 = vmatpush1.bf16.msra.mxu0 0
        %2342 = vmatprep.subr.bf16.mxu0 0
        %2343 = vmatpush1.bf16.msra.mxu0 0
        %2344 = vmatprep.subr.bf16.mxu0 0
        %2345 = vmatpush1.bf16.msra.mxu0 0
        %2346 = vmatprep.subr.bf16.mxu0 0
        %2347 = vmatpush1.bf16.msra.mxu0 0
        %2348 = vmatprep.subr.bf16.mxu0 0
        %2349 = vmatpush1.bf16.msra.mxu0 0
        %2350 = vmatprep.subr.bf16.mxu0 0
        %2351 = vmatpush1.bf16.msra.mxu0 0
        %2352 = vmatprep.subr.bf16.mxu0 0
        %2353 = vmatpush1.bf16.msra.mxu0 0
        %2354 = vmatprep.subr.bf16.mxu0 0
        %2355 = vmatpush1.bf16.msra.mxu0 0
        %2356 = vmatprep.subr.bf16.mxu0 0
        %2357 = vmatpush1.bf16.msra.mxu0 0
        %2358 = vmatprep.subr.bf16.mxu0 0
        %2359 = vmatpush1.bf16.msra.mxu0 0
        %2360 = vmatprep.subr.bf16.mxu0 0
        %2361 = vmatpush1.bf16.msra.mxu0 0
        %2362 = vmatprep.mubr.bf16.mxu0 0
        %2363 = vmatmul.mubr.bf16.gmra.mrb[0].mxu0 %v2307
        %v2364 = vpop.f32.mrb[0].mxu0
        %v2365 = vadd.f32 %v2279, %v2364
        %v2366 = vpop.f32.mrb[0].mxu0
        %v2367 = vpop.f32.mrb[0].mxu0
        %v2368 = vadd.f32 %v2279, %v2367
        %v2369 = vpop.f32.mrb[0].mxu0
        %2370 = vmatprep.mubr.bf16.mxu0 0
        %2371 = vmatmul.mubr.bf16.gmra.mrb[0].mxu0 %v2310
        %v2372 = vpop.f32.mrb[0].mxu0
        %v2373 = vadd.f32 %v2279, %v2372
        %v2374 = vpop.f32.mrb[0].mxu0
        %v2375 = vpop.f32.mrb[0].mxu0
        %v2376 = vadd.f32 %v2279, %v2375
        %v2377 = vpop.f32.mrb[0].mxu0
        %2378 = vmatprep.mubr.bf16.mxu0 0
        %2379 = vmatmul.mubr.bf16.gmra.mrb[0].mxu0 %v2313
        %v2380 = vpop.f32.mrb[0].mxu0
        %v2381 = vadd.f32 %v2279, %v2380
        %v2382 = vpop.f32.mrb[0].mxu0
        %v2383 = vpop.f32.mrb[0].mxu0
        %v2384 = vadd.f32 %v2279, %v2383
        %v2385 = vpop.f32.mrb[0].mxu0
        %2386 = vmatprep.mubr.bf16.mxu0 0
        %2387 = vmatmul.mubr.bf16.gmra.mrb[0].mxu0 %v2316
        %v2388 = vpop.f32.mrb[0].mxu0
        %v2389 = vadd.f32 %v2279, %v2388
        %v2390 = vpop.f32.mrb[0].mxu0
        %v2391 = vpop.f32.mrb[0].mxu0
        %v2392 = vadd.f32 %v2279, %v2391
        %v2393 = vpop.f32.mrb[0].mxu0
        %2394 = vmatprep.mubr.bf16.mxu0 0
        %2395 = vmatmul.mubr.bf16.gmra.mrb[0].mxu0 %v2319
        %v2396 = vpop.f32.mrb[0].mxu0
        %v2397 = vadd.f32 %v2279, %v2396
        %v2398 = vpop.f32.mrb[0].mxu0
        %v2399 = vpop.f32.mrb[0].mxu0
        %v2400 = vadd.f32 %v2279, %v2399
        %v2401 = vpop.f32.mrb[0].mxu0
        %2402 = vmatprep.mubr.bf16.mxu0 0
        %2403 = vmatmul.mubr.bf16.gmra.mrb[0].mxu0 %v2322
        %v2404 = vpop.f32.mrb[0].mxu0
        %v2405 = vadd.f32 %v2279, %v2404
        %v2406 = vpop.f32.mrb[0].mxu0
        %v2407 = vpop.f32.mrb[0].mxu0
        %v2408 = vadd.f32 %v2279, %v2407
        %v2409 = vpop.f32.mrb[0].mxu0
        %2410 = vmatprep.mubr.bf16.mxu0 0
        %2411 = vmatmul.mubr.bf16.gmra.mrb[0].mxu0 %v2325
        %v2412 = vpop.f32.mrb[0].mxu0
        %v2413 = vadd.f32 %v2279, %v2412
        %v2414 = vpop.f32.mrb[0].mxu0
        %v2415 = vpop.f32.mrb[0].mxu0
        %v2416 = vadd.f32 %v2279, %v2415
        %v2417 = vpop.f32.mrb[0].mxu0
        %2418 = vmatprep.mubr.bf16.mxu0 0
        %2419 = vmatmul.mubr.bf16.gmra.mrb[0].mxu0 %v2328
        %v2420 = vpop.f32.mrb[0].mxu0
        %v2421 = vadd.f32 %v2279, %v2420
        %v2422 = vpop.f32.mrb[0].mxu0
        %v2423 = vpop.f32.mrb[0].mxu0
        %v2424 = vadd.f32 %v2279, %v2423
        %v2425 = vpop.f32.mrb[0].mxu0
        %2426 = vdwg.mxu0
        %v2427 = vmax.f32 %v2365, 0.0
        %v2428 = vmax.f32 %v2368, 0.0
        %v2429 = vmax.f32 %v2373, 0.0
        %v2430 = vmax.f32 %v2376, 0.0
        %v2431 = vmax.f32 %v2381, 0.0
        %v2432 = vmax.f32 %v2384, 0.0
        %v2433 = vmax.f32 %v2389, 0.0
        %v2434 = vmax.f32 %v2392, 0.0
        %v2435 = vmax.f32 %v2397, 0.0
        %v2436 = vmax.f32 %v2400, 0.0
        %v2437 = vmax.f32 %v2405, 0.0
        %v2438 = vmax.f32 %v2408, 0.0
        %v2439 = vmax.f32 %v2413, 0.0
        %v2440 = vmax.f32 %v2416, 0.0
        %v2441 = vmax.f32 %v2421, 0.0
        %v2442 = vmax.f32 %v2424, 0.0
        %v2443 = vpack.c.bf16 %v2428, %v2427
        %v2444 = vpack.c.bf16 %v2430, %v2429
        %v2445 = vpack.c.bf16 %v2432, %v2431
        %v2446 = vpack.c.bf16 %v2434, %v2433
        %v2447 = vpack.c.bf16 %v2436, %v2435
        %v2448 = vpack.c.bf16 %v2438, %v2437
        %v2449 = vpack.c.bf16 %v2440, %v2439
        %v2450 = vpack.c.bf16 %v2442, %v2441
        %v2451 = vld [vmem:[%s5] sm:$0xf]
        %v2452 = vld [vmem:[%s5 + $0x4] sm:$0xf]
        %v2453 = vld [vmem:[%s5 + $0x8] sm:$0xf]
        %v2454 = vld [vmem:[%s14] sm:$0x1]
        %v2456 = vlaneseq
        %v2457 = vshrl.u32 %v2456, 7
        %v2458 = vsub.s32 0, %v2457
        %v2459 = vrot.slane %v2454, %v2458
        %v2464 = vunpack.c.l.b16 %v2451
        %v2465 = vunpack.c.l.b16 %v2452
        %v2466 = vunpack.c.l.b16 %v2453
        %v2467 = vpack.c.b16 %v2465, %v2464
        %v2468 = vpack.c.b16 %v2466, %v2466
        %vm2470 = vcmask 195584
        %v2472 = vsel %vm2470, %v2443, 0
        %v2475 = vsel %vm2470, %v2444, 0
        %v2478 = vsel %vm2470, %v2445, 0
        %v2481 = vsel %vm2470, %v2446, 0
        %v2484 = vsel %vm2470, %v2447, 0
        %v2487 = vsel %vm2470, %v2448, 0
        %v2490 = vsel %vm2470, %v2449, 0
        %v2493 = vsel %vm2470, %v2450, 0
        %vm2495 = vcmask 1043456
        %v2497 = vsel %vm2495, %v2468, 0
        %2499 = vmatprep.subr.bf16.mxu0 0
        %2500 = vmatpush1.bf16.msra.mxu0 %v2467
        %2501 = vmatprep.subr.bf16.mxu0 0
        %2502 = vmatpush1.bf16.msra.mxu0 %v2497
        %2503 = vmatprep.subr.bf16.mxu0 0
        %2504 = vmatpush1.bf16.msra.mxu0 0
        %2505 = vmatprep.subr.bf16.mxu0 0
        %2506 = vmatpush1.bf16.msra.mxu0 0
        %2507 = vmatprep.subr.bf16.mxu0 0
        %2508 = vmatpush1.bf16.msra.mxu0 0
        %2509 = vmatprep.subr.bf16.mxu0 0
        %2510 = vmatpush1.bf16.msra.mxu0 0
        %2511 = vmatprep.subr.bf16.mxu0 0
        %2512 = vmatpush1.bf16.msra.mxu0 0
        %2513 = vmatprep.subr.bf16.mxu0 0
        %2514 = vmatpush1.bf16.msra.mxu0 0
        %2515 = vmatprep.subr.bf16.mxu0 0
        %2516 = vmatpush1.bf16.msra.mxu0 0
        %2517 = vmatprep.subr.bf16.mxu0 0
        %2518 = vmatpush1.bf16.msra.mxu0 0
        %2519 = vmatprep.subr.bf16.mxu0 0
        %2520 = vmatpush1.bf16.msra.mxu0 0
        %2521 = vmatprep.subr.bf16.mxu0 0
        %2522 = vmatpush1.bf16.msra.mxu0 0
        %2523 = vmatprep.subr.bf16.mxu0 0
        %2524 = vmatpush1.bf16.msra.mxu0 0
        %2525 = vmatprep.subr.bf16.mxu0 0
        %2526 = vmatpush1.bf16.msra.mxu0 0
        %2527 = vmatprep.subr.bf16.mxu0 0
        %2528 = vmatpush1.bf16.msra.mxu0 0
        %2529 = vmatprep.subr.bf16.mxu0 0
        %2530 = vmatpush1.bf16.msra.mxu0 0
        %2531 = vmatprep.mubr.bf16.mxu0 0
        %2532 = vmatmul.mubr.bf16.gmra.mrb[0].mxu0 %v2472
        %v2533 = vpop.f32.mrb[0].mxu0
        %v2534 = vadd.f32 %v2459, %v2533
        %v2535 = vpop.f32.mrb[0].mxu0
        %v2536 = vpop.f32.mrb[0].mxu0
        %v2537 = vadd.f32 %v2459, %v2536
        %v2538 = vpop.f32.mrb[0].mxu0
        %2539 = vmatprep.mubr.bf16.mxu0 0
        %2540 = vmatmul.mubr.bf16.gmra.mrb[0].mxu0 %v2475
        %v2541 = vpop.f32.mrb[0].mxu0
        %v2542 = vadd.f32 %v2459, %v2541
        %v2543 = vpop.f32.mrb[0].mxu0
        %v2544 = vpop.f32.mrb[0].mxu0
        %v2545 = vadd.f32 %v2459, %v2544
        %v2546 = vpop.f32.mrb[0].mxu0
        %2547 = vmatprep.mubr.bf16.mxu0 0
        %2548 = vmatmul.mubr.bf16.gmra.mrb[0].mxu0 %v2478
        %v2549 = vpop.f32.mrb[0].mxu0
        %v2550 = vadd.f32 %v2459, %v2549
        %v2551 = vpop.f32.mrb[0].mxu0
        %v2552 = vpop.f32.mrb[0].mxu0
        %v2553 = vadd.f32 %v2459, %v2552
        %v2554 = vpop.f32.mrb[0].mxu0
        %2555 = vmatprep.mubr.bf16.mxu0 0
        %2556 = vmatmul.mubr.bf16.gmra.mrb[0].mxu0 %v2481
        %v2557 = vpop.f32.mrb[0].mxu0
        %v2558 = vadd.f32 %v2459, %v2557
        %v2559 = vpop.f32.mrb[0].mxu0
        %v2560 = vpop.f32.mrb[0].mxu0
        %v2561 = vadd.f32 %v2459, %v2560
        %v2562 = vpop.f32.mrb[0].mxu0
        %2563 = vmatprep.mubr.bf16.mxu0 0
        %2564 = vmatmul.mubr.bf16.gmra.mrb[0].mxu0 %v2484
        %v2565 = vpop.f32.mrb[0].mxu0
        %v2566 = vadd.f32 %v2459, %v2565
        %v2567 = vpop.f32.mrb[0].mxu0
        %v2568 = vpop.f32.mrb[0].mxu0
        %v2569 = vadd.f32 %v2459, %v2568
        %v2570 = vpop.f32.mrb[0].mxu0
        %2571 = vmatprep.mubr.bf16.mxu0 0
        %2572 = vmatmul.mubr.bf16.gmra.mrb[0].mxu0 %v2487
        %v2573 = vpop.f32.mrb[0].mxu0
        %v2574 = vadd.f32 %v2459, %v2573
        %v2575 = vpop.f32.mrb[0].mxu0
        %v2576 = vpop.f32.mrb[0].mxu0
        %v2577 = vadd.f32 %v2459, %v2576
        %v2578 = vpop.f32.mrb[0].mxu0
        %2579 = vmatprep.mubr.bf16.mxu0 0
        %2580 = vmatmul.mubr.bf16.gmra.mrb[0].mxu0 %v2490
        %v2581 = vpop.f32.mrb[0].mxu0
        %v2582 = vadd.f32 %v2459, %v2581
        %v2583 = vpop.f32.mrb[0].mxu0
        %v2584 = vpop.f32.mrb[0].mxu0
        %v2585 = vadd.f32 %v2459, %v2584
        %v2586 = vpop.f32.mrb[0].mxu0
        %2587 = vmatprep.mubr.bf16.mxu0 0
        %2588 = vmatmul.mubr.bf16.gmra.mrb[0].mxu0 %v2493
        %v2589 = vpop.f32.mrb[0].mxu0
        %v2590 = vadd.f32 %v2459, %v2589
        %v2591 = vpop.f32.mrb[0].mxu0
        %v2592 = vpop.f32.mrb[0].mxu0
        %v2593 = vadd.f32 %v2459, %v2592
        %v2594 = vpop.f32.mrb[0].mxu0
        %2595 = vdwg.mxu0
        %v2596 = vmax.f32 %v2534, 0.0
        %v2597 = vmax.f32 %v2537, 0.0
        %v2598 = vmax.f32 %v2542, 0.0
        %v2599 = vmax.f32 %v2545, 0.0
        %v2600 = vmax.f32 %v2550, 0.0
        %v2601 = vmax.f32 %v2553, 0.0
        %v2602 = vmax.f32 %v2558, 0.0
        %v2603 = vmax.f32 %v2561, 0.0
        %v2604 = vmax.f32 %v2566, 0.0
        %v2605 = vmax.f32 %v2569, 0.0
        %v2606 = vmax.f32 %v2574, 0.0
        %v2607 = vmax.f32 %v2577, 0.0
        %v2608 = vmax.f32 %v2582, 0.0
        %v2609 = vmax.f32 %v2585, 0.0
        %v2610 = vmax.f32 %v2590, 0.0
        %v2611 = vmax.f32 %v2593, 0.0
        %v2612 = vpack.c.bf16 %v2597, %v2596
        %v2613 = vpack.c.bf16 %v2599, %v2598
        %v2614 = vpack.c.bf16 %v2601, %v2600
        %v2615 = vpack.c.bf16 %v2603, %v2602
        %v2616 = vpack.c.bf16 %v2605, %v2604
        %v2617 = vpack.c.bf16 %v2607, %v2606
        %v2618 = vpack.c.bf16 %v2609, %v2608
        %v2619 = vpack.c.bf16 %v2611, %v2610
        %v2620 = vld [vmem:[%s6] sm:$0xf]
        %v2621 = vld [vmem:[%s6 + $0x4] sm:$0xf]
        %v2622 = vld [vmem:[%s6 + $0x8] sm:$0xf]
        %v2623 = vld [vmem:[%s15] sm:$0x1]
        %v2625 = vlaneseq
        %v2626 = vshrl.u32 %v2625, 7
        %v2627 = vsub.s32 0, %v2626
        %v2628 = vrot.slane %v2623, %v2627
        %v2633 = vunpack.c.l.b16 %v2620
        %v2634 = vunpack.c.l.b16 %v2621
        %v2635 = vunpack.c.l.b16 %v2622
        %v2636 = vpack.c.b16 %v2634, %v2633
        %v2637 = vpack.c.b16 %v2635, %v2635
        %v2640 = vsel %vm2470, %v2612, 0
        %v2643 = vsel %vm2470, %v2613, 0
        %v2646 = vsel %vm2470, %v2614, 0
        %v2649 = vsel %vm2470, %v2615, 0
        %v2652 = vsel %vm2470, %v2616, 0
        %v2655 = vsel %vm2470, %v2617, 0
        %v2658 = vsel %vm2470, %v2618, 0
        %v2661 = vsel %vm2470, %v2619, 0
        %v2664 = vsel %vm2495, %v2637, 0
        %2666 = vmatprep.subr.bf16.mxu0 0
        %2667 = vmatpush1.bf16.msra.mxu0 %v2636
        %2668 = vmatprep.subr.bf16.mxu0 0
        %2669 = vmatpush1.bf16.msra.mxu0 %v2664
        %2670 = vmatprep.subr.bf16.mxu0 0
        %2671 = vmatpush1.bf16.msra.mxu0 0
        %2672 = vmatprep.subr.bf16.mxu0 0
        %2673 = vmatpush1.bf16.msra.mxu0 0
        %2674 = vmatprep.subr.bf16.mxu0 0
        %2675 = vmatpush1.bf16.msra.mxu0 0
        %2676 = vmatprep.subr.bf16.mxu0 0
        %2677 = vmatpush1.bf16.msra.mxu0 0
        %2678 = vmatprep.subr.bf16.mxu0 0
        %2679 = vmatpush1.bf16.msra.mxu0 0
        %2680 = vmatprep.subr.bf16.mxu0 0
        %2681 = vmatpush1.bf16.msra.mxu0 0
        %2682 = vmatprep.subr.bf16.mxu0 0
        %2683 = vmatpush1.bf16.msra.mxu0 0
        %2684 = vmatprep.subr.bf16.mxu0 0
        %2685 = vmatpush1.bf16.msra.mxu0 0
        %2686 = vmatprep.subr.bf16.mxu0 0
        %2687 = vmatpush1.bf16.msra.mxu0 0
        %2688 = vmatprep.subr.bf16.mxu0 0
        %2689 = vmatpush1.bf16.msra.mxu0 0
        %2690 = vmatprep.subr.bf16.mxu0 0
        %2691 = vmatpush1.bf16.msra.mxu0 0
        %2692 = vmatprep.subr.bf16.mxu0 0
        %2693 = vmatpush1.bf16.msra.mxu0 0
        %2694 = vmatprep.subr.bf16.mxu0 0
        %2695 = vmatpush1.bf16.msra.mxu0 0
        %2696 = vmatprep.subr.bf16.mxu0 0
        %2697 = vmatpush1.bf16.msra.mxu0 0
        %2698 = vmatprep.mubr.bf16.mxu0 0
        %2699 = vmatmul.mubr.bf16.gmra.mrb[0].mxu0 %v2640
        %v2700 = vpop.f32.mrb[0].mxu0
        %v2701 = vadd.f32 %v2628, %v2700
        %v2702 = vpop.f32.mrb[0].mxu0
        %v2703 = vpop.f32.mrb[0].mxu0
        %v2704 = vadd.f32 %v2628, %v2703
        %v2705 = vpop.f32.mrb[0].mxu0
        %2706 = vmatprep.mubr.bf16.mxu0 0
        %2707 = vmatmul.mubr.bf16.gmra.mrb[0].mxu0 %v2643
        %v2708 = vpop.f32.mrb[0].mxu0
        %v2709 = vadd.f32 %v2628, %v2708
        %v2710 = vpop.f32.mrb[0].mxu0
        %v2711 = vpop.f32.mrb[0].mxu0
        %v2712 = vadd.f32 %v2628, %v2711
        %v2713 = vpop.f32.mrb[0].mxu0
        %2714 = vmatprep.mubr.bf16.mxu0 0
        %2715 = vmatmul.mubr.bf16.gmra.mrb[0].mxu0 %v2646
        %v2716 = vpop.f32.mrb[0].mxu0
        %v2717 = vadd.f32 %v2628, %v2716
        %v2718 = vpop.f32.mrb[0].mxu0
        %v2719 = vpop.f32.mrb[0].mxu0
        %v2720 = vadd.f32 %v2628, %v2719
        %v2721 = vpop.f32.mrb[0].mxu0
        %2722 = vmatprep.mubr.bf16.mxu0 0
        %2723 = vmatmul.mubr.bf16.gmra.mrb[0].mxu0 %v2649
        %v2724 = vpop.f32.mrb[0].mxu0
        %v2725 = vadd.f32 %v2628, %v2724
        %v2726 = vpop.f32.mrb[0].mxu0
        %v2727 = vpop.f32.mrb[0].mxu0
        %v2728 = vadd.f32 %v2628, %v2727
        %v2729 = vpop.f32.mrb[0].mxu0
        %2730 = vmatprep.mubr.bf16.mxu0 0
        %2731 = vmatmul.mubr.bf16.gmra.mrb[0].mxu0 %v2652
        %v2732 = vpop.f32.mrb[0].mxu0
        %v2733 = vadd.f32 %v2628, %v2732
        %v2734 = vpop.f32.mrb[0].mxu0
        %v2735 = vpop.f32.mrb[0].mxu0
        %v2736 = vadd.f32 %v2628, %v2735
        %v2737 = vpop.f32.mrb[0].mxu0
        %2738 = vmatprep.mubr.bf16.mxu0 0
        %2739 = vmatmul.mubr.bf16.gmra.mrb[0].mxu0 %v2655
        %v2740 = vpop.f32.mrb[0].mxu0
        %v2741 = vadd.f32 %v2628, %v2740
        %v2742 = vpop.f32.mrb[0].mxu0
        %v2743 = vpop.f32.mrb[0].mxu0
        %v2744 = vadd.f32 %v2628, %v2743
        %v2745 = vpop.f32.mrb[0].mxu0
        %2746 = vmatprep.mubr.bf16.mxu0 0
        %2747 = vmatmul.mubr.bf16.gmra.mrb[0].mxu0 %v2658
        %v2748 = vpop.f32.mrb[0].mxu0
        %v2749 = vadd.f32 %v2628, %v2748
        %v2750 = vpop.f32.mrb[0].mxu0
        %v2751 = vpop.f32.mrb[0].mxu0
        %v2752 = vadd.f32 %v2628, %v2751
        %v2753 = vpop.f32.mrb[0].mxu0
        %2754 = vmatprep.mubr.bf16.mxu0 0
        %2755 = vmatmul.mubr.bf16.gmra.mrb[0].mxu0 %v2661
        %v2756 = vpop.f32.mrb[0].mxu0
        %v2757 = vadd.f32 %v2628, %v2756
        %v2758 = vpop.f32.mrb[0].mxu0
        %v2759 = vpop.f32.mrb[0].mxu0
        %v2760 = vadd.f32 %v2628, %v2759
        %v2761 = vpop.f32.mrb[0].mxu0
        %2762 = vdwg.mxu0
        %v2763 = vmax.f32 %v2701, 0.0
        %v2764 = vmax.f32 %v2704, 0.0
        %v2765 = vmax.f32 %v2709, 0.0
        %v2766 = vmax.f32 %v2712, 0.0
        %v2767 = vmax.f32 %v2717, 0.0
        %v2768 = vmax.f32 %v2720, 0.0
        %v2769 = vmax.f32 %v2725, 0.0
        %v2770 = vmax.f32 %v2728, 0.0
        %v2771 = vmax.f32 %v2733, 0.0
        %v2772 = vmax.f32 %v2736, 0.0
        %v2773 = vmax.f32 %v2741, 0.0
        %v2774 = vmax.f32 %v2744, 0.0
        %v2775 = vmax.f32 %v2749, 0.0
        %v2776 = vmax.f32 %v2752, 0.0
        %v2777 = vmax.f32 %v2757, 0.0
        %v2778 = vmax.f32 %v2760, 0.0
        %v2779 = vpack.c.bf16 %v2764, %v2763
        %v2780 = vpack.c.bf16 %v2766, %v2765
        %v2781 = vpack.c.bf16 %v2768, %v2767
        %v2782 = vpack.c.bf16 %v2770, %v2769
        %v2783 = vpack.c.bf16 %v2772, %v2771
        %v2784 = vpack.c.bf16 %v2774, %v2773
        %v2785 = vpack.c.bf16 %v2776, %v2775
        %v2786 = vpack.c.bf16 %v2778, %v2777
        %v2787 = vld [vmem:[%s7] sm:$0xf]
        %v2788 = vld [vmem:[%s7 + $0x4] sm:$0xf]
        %v2789 = vld [vmem:[%s7 + $0x8] sm:$0xf]
        %v2790 = vld [vmem:[%s7 + $0xc] sm:$0xf]
        %v2791 = vld [vmem:[%s7 + $0x10] sm:$0xf]
        %v2792 = vld [vmem:[%s7 + $0x14] sm:$0xf]
        %v2793 = vld [vmem:[%s7 + $0x18] sm:$0xf]
        %v2794 = vld [vmem:[%s7 + $0x1c] sm:$0xf]
        %v2795 = vld [vmem:[%s16] sm:$0x1]
        %v2797 = vlaneseq
        %v2798 = vshrl.u32 %v2797, 7
        %v2799 = vsub.s32 0, %v2798
        %v2800 = vrot.slane %v2795, %v2799
        %v2810 = vunpack.c.l.b16 %v2787
        %v2811 = vunpack.c.l.b16 %v2788
        %v2812 = vunpack.c.l.b16 %v2789
        %v2813 = vunpack.c.l.b16 %v2790
        %v2814 = vunpack.c.l.b16 %v2791
        %v2815 = vunpack.c.l.b16 %v2792
        %v2816 = vunpack.c.l.b16 %v2793
        %v2817 = vunpack.c.l.b16 %v2794
        %v2818 = vpack.c.b16 %v2811, %v2810
        %v2819 = vpack.c.b16 %v2813, %v2812
        %v2820 = vpack.c.b16 %v2815, %v2814
        %v2821 = vpack.c.b16 %v2817, %v2816
        %v2827 = vsel %vm2305, %v2779, 0
        %v2830 = vsel %vm2305, %v2780, 0
        %v2833 = vsel %vm2305, %v2781, 0
        %v2836 = vsel %vm2305, %v2782, 0
        %v2839 = vsel %vm2305, %v2783, 0
        %v2842 = vsel %vm2305, %v2784, 0
        %v2845 = vsel %vm2305, %v2785, 0
        %v2848 = vsel %vm2305, %v2786, 0
        %2850 = vmatprep.subr.bf16.mxu0 0
        %2851 = vmatpush1.bf16.msra.mxu0 %v2818
        %2852 = vmatprep.subr.bf16.mxu0 0
        %2853 = vmatpush1.bf16.msra.mxu0 %v2819
        %2854 = vmatprep.subr.bf16.mxu0 0
        %2855 = vmatpush1.bf16.msra.mxu0 %v2820
        %2856 = vmatprep.subr.bf16.mxu0 0
        %2857 = vmatpush1.bf16.msra.mxu0 %v2821
        %2858 = vmatprep.subr.bf16.mxu0 0
        %2859 = vmatpush1.bf16.msra.mxu0 0
        %2860 = vmatprep.subr.bf16.mxu0 0
        %2861 = vmatpush1.bf16.msra.mxu0 0
        %2862 = vmatprep.subr.bf16.mxu0 0
        %2863 = vmatpush1.bf16.msra.mxu0 0
        %2864 = vmatprep.subr.bf16.mxu0 0
        %2865 = vmatpush1.bf16.msra.mxu0 0
        %2866 = vmatprep.subr.bf16.mxu0 0
        %2867 = vmatpush1.bf16.msra.mxu0 0
        %2868 = vmatprep.subr.bf16.mxu0 0
        %2869 = vmatpush1.bf16.msra.mxu0 0
        %2870 = vmatprep.subr.bf16.mxu0 0
        %2871 = vmatpush1.bf16.msra.mxu0 0
        %2872 = vmatprep.subr.bf16.mxu0 0
        %2873 = vmatpush1.bf16.msra.mxu0 0
        %2874 = vmatprep.subr.bf16.mxu0 0
        %2875 = vmatpush1.bf16.msra.mxu0 0
        %2876 = vmatprep.subr.bf16.mxu0 0
        %2877 = vmatpush1.bf16.msra.mxu0 0
        %2878 = vmatprep.subr.bf16.mxu0 0
        %2879 = vmatpush1.bf16.msra.mxu0 0
        %2880 = vmatprep.subr.bf16.mxu0 0
        %2881 = vmatpush1.bf16.msra.mxu0 0
        %2882 = vmatprep.mubr.bf16.mxu0 0
        %2883 = vmatmul.mubr.bf16.gmra.mrb[0].mxu0 %v2827
        %v2884 = vpop.f32.mrb[0].mxu0
        %v2885 = vadd.f32 %v2800, %v2884
        %v2886 = vpop.f32.mrb[0].mxu0
        %v2887 = vpop.f32.mrb[0].mxu0
        %v2888 = vadd.f32 %v2800, %v2887
        %v2889 = vpop.f32.mrb[0].mxu0
        %2890 = vmatprep.mubr.bf16.mxu0 0
        %2891 = vmatmul.mubr.bf16.gmra.mrb[0].mxu0 %v2830
        %v2892 = vpop.f32.mrb[0].mxu0
        %v2893 = vadd.f32 %v2800, %v2892
        %v2894 = vpop.f32.mrb[0].mxu0
        %v2895 = vpop.f32.mrb[0].mxu0
        %v2896 = vadd.f32 %v2800, %v2895
        %v2897 = vpop.f32.mrb[0].mxu0
        %2898 = vmatprep.mubr.bf16.mxu0 0
        %2899 = vmatmul.mubr.bf16.gmra.mrb[0].mxu0 %v2833
        %v2900 = vpop.f32.mrb[0].mxu0
        %v2901 = vadd.f32 %v2800, %v2900
        %v2902 = vpop.f32.mrb[0].mxu0
        %v2903 = vpop.f32.mrb[0].mxu0
        %v2904 = vadd.f32 %v2800, %v2903
        %v2905 = vpop.f32.mrb[0].mxu0
        %2906 = vmatprep.mubr.bf16.mxu0 0
        %2907 = vmatmul.mubr.bf16.gmra.mrb[0].mxu0 %v2836
        %v2908 = vpop.f32.mrb[0].mxu0
        %v2909 = vadd.f32 %v2800, %v2908
        %v2910 = vpop.f32.mrb[0].mxu0
        %v2911 = vpop.f32.mrb[0].mxu0
        %v2912 = vadd.f32 %v2800, %v2911
        %v2913 = vpop.f32.mrb[0].mxu0
        %2914 = vmatprep.mubr.bf16.mxu0 0
        %2915 = vmatmul.mubr.bf16.gmra.mrb[0].mxu0 %v2839
        %v2916 = vpop.f32.mrb[0].mxu0
        %v2917 = vadd.f32 %v2800, %v2916
        %v2918 = vpop.f32.mrb[0].mxu0
        %v2919 = vpop.f32.mrb[0].mxu0
        %v2920 = vadd.f32 %v2800, %v2919
        %v2921 = vpop.f32.mrb[0].mxu0
        %2922 = vmatprep.mubr.bf16.mxu0 0
        %2923 = vmatmul.mubr.bf16.gmra.mrb[0].mxu0 %v2842
        %v2924 = vpop.f32.mrb[0].mxu0
        %v2925 = vadd.f32 %v2800, %v2924
        %v2926 = vpop.f32.mrb[0].mxu0
        %v2927 = vpop.f32.mrb[0].mxu0
        %v2928 = vadd.f32 %v2800, %v2927
        %v2929 = vpop.f32.mrb[0].mxu0
        %2930 = vmatprep.mubr.bf16.mxu0 0
        %2931 = vmatmul.mubr.bf16.gmra.mrb[0].mxu0 %v2845
        %v2932 = vpop.f32.mrb[0].mxu0
        %v2933 = vadd.f32 %v2800, %v2932
        %v2934 = vpop.f32.mrb[0].mxu0
        %v2935 = vpop.f32.mrb[0].mxu0
        %v2936 = vadd.f32 %v2800, %v2935
        %v2937 = vpop.f32.mrb[0].mxu0
        %2938 = vmatprep.mubr.bf16.mxu0 0
        %2939 = vmatmul.mubr.bf16.gmra.mrb[0].mxu0 %v2848
        %v2940 = vpop.f32.mrb[0].mxu0
        %v2941 = vadd.f32 %v2800, %v2940
        %v2942 = vpop.f32.mrb[0].mxu0
        %v2943 = vpop.f32.mrb[0].mxu0
        %v2944 = vadd.f32 %v2800, %v2943
        %v2945 = vpop.f32.mrb[0].mxu0
        %2946 = vdwg.mxu0
        %v2947 = vmax.f32 %v2885, 0.0
        %v2948 = vmax.f32 %v2888, 0.0
        %v2949 = vmax.f32 %v2893, 0.0
        %v2950 = vmax.f32 %v2896, 0.0
        %v2951 = vmax.f32 %v2901, 0.0
        %v2952 = vmax.f32 %v2904, 0.0
        %v2953 = vmax.f32 %v2909, 0.0
        %v2954 = vmax.f32 %v2912, 0.0
        %v2955 = vmax.f32 %v2917, 0.0
        %v2956 = vmax.f32 %v2920, 0.0
        %v2957 = vmax.f32 %v2925, 0.0
        %v2958 = vmax.f32 %v2928, 0.0
        %v2959 = vmax.f32 %v2933, 0.0
        %v2960 = vmax.f32 %v2936, 0.0
        %v2961 = vmax.f32 %v2941, 0.0
        %v2962 = vmax.f32 %v2944, 0.0
        %v2963 = vpack.c.bf16 %v2948, %v2947
        %v2964 = vpack.c.bf16 %v2950, %v2949
        %v2965 = vpack.c.bf16 %v2952, %v2951
        %v2966 = vpack.c.bf16 %v2954, %v2953
        %v2967 = vpack.c.bf16 %v2956, %v2955
        %v2968 = vpack.c.bf16 %v2958, %v2957
        %v2969 = vpack.c.bf16 %v2960, %v2959
        %v2970 = vpack.c.bf16 %v2962, %v2961
        %v2971 = vld [vmem:[%s8] sm:$0xf]
        %v2972 = vld [vmem:[%s8 + $0x4] sm:$0xf]
        %v2973 = vld [vmem:[%s8 + $0x8] sm:$0xf]
        %v2974 = vld [vmem:[%s8 + $0xc] sm:$0xf]
        %v2975 = vld [vmem:[%s8 + $0x10] sm:$0xf]
        %v2976 = vld [vmem:[%s8 + $0x14] sm:$0xf]
        %v2977 = vld [vmem:[%s8 + $0x18] sm:$0xf]
        %v2978 = vld [vmem:[%s8 + $0x1c] sm:$0xf]
        %v2979 = vld [vmem:[%s8 + $0x20] sm:$0xf]
        %v2980 = vld [vmem:[%s8 + $0x24] sm:$0xf]
        %v2981 = vld [vmem:[%s8 + $0x28] sm:$0xf]
        %v2982 = vld [vmem:[%s8 + $0x2c] sm:$0xf]
        %v2983 = vld [vmem:[%s17] sm:$0x1]
        %v2985 = vlaneseq
        %v2986 = vshrl.u32 %v2985, 7
        %v2987 = vsub.s32 0, %v2986
        %v2988 = vrot.slane %v2983, %v2987
        %v3002 = vunpack.c.l.b16 %v2971
        %v3003 = vunpack.c.l.b16 %v2972
        %v3004 = vunpack.c.l.b16 %v2973
        %v3005 = vunpack.c.l.b16 %v2974
        %v3006 = vunpack.c.l.b16 %v2975
        %v3007 = vunpack.c.l.b16 %v2976
        %v3008 = vunpack.c.l.b16 %v2977
        %v3009 = vunpack.c.l.b16 %v2978
        %v3010 = vunpack.c.l.b16 %v2979
        %v3011 = vunpack.c.l.b16 %v2980
        %v3012 = vunpack.c.l.b16 %v2981
        %v3013 = vunpack.c.l.b16 %v2982
        %v3014 = vpack.c.b16 %v3003, %v3002
        %v3015 = vpack.c.b16 %v3005, %v3004
        %v3016 = vpack.c.b16 %v3007, %v3006
        %v3017 = vpack.c.b16 %v3009, %v3008
        %v3018 = vpack.c.b16 %v3011, %v3010
        %v3019 = vpack.c.b16 %v3013, %v3012
        %v3027 = vsel %vm2120, %v2963, 0
        %v3030 = vsel %vm2120, %v2964, 0
        %v3033 = vsel %vm2120, %v2965, 0
        %v3036 = vsel %vm2120, %v2966, 0
        %v3039 = vsel %vm2120, %v2967, 0
        %v3042 = vsel %vm2120, %v2968, 0
        %v3045 = vsel %vm2120, %v2969, 0
        %v3048 = vsel %vm2120, %v2970, 0
        %3050 = vmatprep.subr.bf16.mxu0 0
        %3051 = vmatpush1.bf16.msra.mxu0 %v3014
        %3052 = vmatprep.subr.bf16.mxu0 0
        %3053 = vmatpush1.bf16.msra.mxu0 %v3015
        %3054 = vmatprep.subr.bf16.mxu0 0
        %3055 = vmatpush1.bf16.msra.mxu0 %v3016
        %3056 = vmatprep.subr.bf16.mxu0 0
        %3057 = vmatpush1.bf16.msra.mxu0 %v3017
        %3058 = vmatprep.subr.bf16.mxu0 0
        %3059 = vmatpush1.bf16.msra.mxu0 %v3018
        %3060 = vmatprep.subr.bf16.mxu0 0
        %3061 = vmatpush1.bf16.msra.mxu0 %v3019
        %3062 = vmatprep.subr.bf16.mxu0 0
        %3063 = vmatpush1.bf16.msra.mxu0 0
        %3064 = vmatprep.subr.bf16.mxu0 0
        %3065 = vmatpush1.bf16.msra.mxu0 0
        %3066 = vmatprep.subr.bf16.mxu0 0
        %3067 = vmatpush1.bf16.msra.mxu0 0
        %3068 = vmatprep.subr.bf16.mxu0 0
        %3069 = vmatpush1.bf16.msra.mxu0 0
        %3070 = vmatprep.subr.bf16.mxu0 0
        %3071 = vmatpush1.bf16.msra.mxu0 0
        %3072 = vmatprep.subr.bf16.mxu0 0
        %3073 = vmatpush1.bf16.msra.mxu0 0
        %3074 = vmatprep.subr.bf16.mxu0 0
        %3075 = vmatpush1.bf16.msra.mxu0 0
        %3076 = vmatprep.subr.bf16.mxu0 0
        %3077 = vmatpush1.bf16.msra.mxu0 0
        %3078 = vmatprep.subr.bf16.mxu0 0
        %3079 = vmatpush1.bf16.msra.mxu0 0
        %3080 = vmatprep.subr.bf16.mxu0 0
        %3081 = vmatpush1.bf16.msra.mxu0 0
        %3082 = vmatprep.mubr.bf16.mxu0 0
        %3083 = vmatmul.mubr.bf16.gmra.mrb[0].mxu0 %v3027
        %v3084 = vpop.f32.mrb[0].mxu0
        %v3085 = vadd.f32 %v2988, %v3084
        %v3086 = vpop.f32.mrb[0].mxu0
        %v3087 = vpop.f32.mrb[0].mxu0
        %v3088 = vadd.f32 %v2988, %v3087
        %v3089 = vpop.f32.mrb[0].mxu0
        %3090 = vmatprep.mubr.bf16.mxu0 0
        %3091 = vmatmul.mubr.bf16.gmra.mrb[0].mxu0 %v3030
        %v3092 = vpop.f32.mrb[0].mxu0
        %v3093 = vadd.f32 %v2988, %v3092
        %v3094 = vpop.f32.mrb[0].mxu0
        %v3095 = vpop.f32.mrb[0].mxu0
        %v3096 = vadd.f32 %v2988, %v3095
        %v3097 = vpop.f32.mrb[0].mxu0
        %3098 = vmatprep.mubr.bf16.mxu0 0
        %3099 = vmatmul.mubr.bf16.gmra.mrb[0].mxu0 %v3033
        %v3100 = vpop.f32.mrb[0].mxu0
        %v3101 = vadd.f32 %v2988, %v3100
        %v3102 = vpop.f32.mrb[0].mxu0
        %v3103 = vpop.f32.mrb[0].mxu0
        %v3104 = vadd.f32 %v2988, %v3103
        %v3105 = vpop.f32.mrb[0].mxu0
        %3106 = vmatprep.mubr.bf16.mxu0 0
        %3107 = vmatmul.mubr.bf16.gmra.mrb[0].mxu0 %v3036
        %v3108 = vpop.f32.mrb[0].mxu0
        %v3109 = vadd.f32 %v2988, %v3108
        %v3110 = vpop.f32.mrb[0].mxu0
        %v3111 = vpop.f32.mrb[0].mxu0
        %v3112 = vadd.f32 %v2988, %v3111
        %v3113 = vpop.f32.mrb[0].mxu0
        %3114 = vmatprep.mubr.bf16.mxu0 0
        %3115 = vmatmul.mubr.bf16.gmra.mrb[0].mxu0 %v3039
        %v3116 = vpop.f32.mrb[0].mxu0
        %v3117 = vadd.f32 %v2988, %v3116
        %v3118 = vpop.f32.mrb[0].mxu0
        %v3119 = vpop.f32.mrb[0].mxu0
        %v3120 = vadd.f32 %v2988, %v3119
        %v3121 = vpop.f32.mrb[0].mxu0
        %3122 = vmatprep.mubr.bf16.mxu0 0
        %3123 = vmatmul.mubr.bf16.gmra.mrb[0].mxu0 %v3042
        %v3124 = vpop.f32.mrb[0].mxu0
        %v3125 = vadd.f32 %v2988, %v3124
        %v3126 = vpop.f32.mrb[0].mxu0
        %v3127 = vpop.f32.mrb[0].mxu0
        %v3128 = vadd.f32 %v2988, %v3127
        %v3129 = vpop.f32.mrb[0].mxu0
        %3130 = vmatprep.mubr.bf16.mxu0 0
        %3131 = vmatmul.mubr.bf16.gmra.mrb[0].mxu0 %v3045
        %v3132 = vpop.f32.mrb[0].mxu0
        %v3133 = vadd.f32 %v2988, %v3132
        %v3134 = vpop.f32.mrb[0].mxu0
        %v3135 = vpop.f32.mrb[0].mxu0
        %v3136 = vadd.f32 %v2988, %v3135
        %v3137 = vpop.f32.mrb[0].mxu0
        %3138 = vmatprep.mubr.bf16.mxu0 0
        %3139 = vmatmul.mubr.bf16.gmra.mrb[0].mxu0 %v3048
        %v3140 = vpop.f32.mrb[0].mxu0
        %v3141 = vadd.f32 %v2988, %v3140
        %v3142 = vpop.f32.mrb[0].mxu0
        %v3143 = vpop.f32.mrb[0].mxu0
        %v3144 = vadd.f32 %v2988, %v3143
        %v3145 = vpop.f32.mrb[0].mxu0
        %3146 = vdwg.mxu0
        %v3147 = vmax.f32 %v3085, 0.0
        %v3148 = vmax.f32 %v3088, 0.0
        %v3149 = vmax.f32 %v3093, 0.0
        %v3150 = vmax.f32 %v3096, 0.0
        %v3151 = vmax.f32 %v3101, 0.0
        %v3152 = vmax.f32 %v3104, 0.0
        %v3153 = vmax.f32 %v3109, 0.0
        %v3154 = vmax.f32 %v3112, 0.0
        %v3155 = vmax.f32 %v3117, 0.0
        %v3156 = vmax.f32 %v3120, 0.0
        %v3157 = vmax.f32 %v3125, 0.0
        %v3158 = vmax.f32 %v3128, 0.0
        %v3159 = vmax.f32 %v3133, 0.0
        %v3160 = vmax.f32 %v3136, 0.0
        %v3161 = vmax.f32 %v3141, 0.0
        %v3162 = vmax.f32 %v3144, 0.0
        %v3163 = vpack.c.bf16 %v3148, %v3147
        %v3164 = vpack.c.bf16 %v3150, %v3149
        %v3165 = vpack.c.bf16 %v3152, %v3151
        %v3166 = vpack.c.bf16 %v3154, %v3153
        %v3167 = vpack.c.bf16 %v3156, %v3155
        %v3168 = vpack.c.bf16 %v3158, %v3157
        %v3169 = vpack.c.bf16 %v3160, %v3159
        %v3170 = vpack.c.bf16 %v3162, %v3161
        %v3171 = vld [vmem:[#allocation7] sm:$0xff]
        %v3172 = vld [vmem:[#allocation7 + $0x8] sm:$0xff]
        %v3173 = vld [vmem:[#allocation7 + $0x10] sm:$0xff]
        %v3174 = vld [vmem:[#allocation7 + $0x18] sm:$0xf]
        %v3175 = vld [vmem:[#allocation7 + $0x1c] sm:$0xff]
        %v3176 = vld [vmem:[#allocation7 + $0x24] sm:$0xff]
        %v3177 = vld [vmem:[#allocation7 + $0x2c] sm:$0xff]
        %v3178 = vld [vmem:[#allocation7 + $0x34] sm:$0xf]
        %v3179 = vld [vmem:[#allocation7 + $0x38] sm:$0xff]
        %v3180 = vld [vmem:[#allocation7 + $0x40] sm:$0xff]
        %v3181 = vld [vmem:[#allocation7 + $0x48] sm:$0xff]
        %v3182 = vld [vmem:[#allocation7 + $0x50] sm:$0xf]
        %v3183 = vld [vmem:[#allocation7 + $0x54] sm:$0xff]
        %v3184 = vld [vmem:[#allocation7 + $0x5c] sm:$0xff]
        %v3185 = vld [vmem:[#allocation7 + $0x64] sm:$0xff]
        %v3186 = vld [vmem:[#allocation7 + $0x6c] sm:$0xf]
        %v3187 = vld [vmem:[#allocation7 + $0x70] sm:$0xff]
        %v3188 = vld [vmem:[#allocation7 + $0x78] sm:$0xff]
        %v3189 = vld [vmem:[#allocation7 + $0x80] sm:$0xff]
        %v3190 = vld [vmem:[#allocation7 + $0x88] sm:$0xf]
        %v3191 = vld [vmem:[#allocation7 + $0x8c] sm:$0xff]
        %v3192 = vld [vmem:[#allocation7 + $0x94] sm:$0xff]
        %v3193 = vld [vmem:[#allocation7 + $0x9c] sm:$0xff]
        %v3194 = vld [vmem:[#allocation7 + $0xa4] sm:$0xf]
        %v3195 = vld [vmem:[#allocation7 + $0xa8] sm:$0xff]
        %v3196 = vld [vmem:[#allocation7 + $0xb0] sm:$0xff]
        %v3197 = vld [vmem:[#allocation7 + $0xb8] sm:$0xff]
        %v3198 = vld [vmem:[#allocation7 + $0xc0] sm:$0xf]
        %v3199 = vld [vmem:[#allocation7 + $0xc4] sm:$0xff]
        %v3200 = vld [vmem:[#allocation7 + $0xcc] sm:$0xff]
        %v3201 = vld [vmem:[#allocation7 + $0xd4] sm:$0xff]
        %v3202 = vld [vmem:[#allocation7 + $0xdc] sm:$0xf]
        %v3203 = vld [vmem:[#allocation7 + $0xe0] sm:$0xff]
        %v3204 = vld [vmem:[#allocation7 + $0xe8] sm:$0xff]
        %v3205 = vld [vmem:[#allocation7 + $0xf0] sm:$0xff]
        %v3206 = vld [vmem:[#allocation7 + $0xf8] sm:$0xf]
        %v3207 = vld [vmem:[#allocation7 + $0xfc] sm:$0xff]
        %v3208 = vld [vmem:[#allocation7 + $0x104] sm:$0xff]
        %v3209 = vld [vmem:[#allocation7 + $0x10c] sm:$0xff]
        %v3210 = vld [vmem:[#allocation7 + $0x114] sm:$0xf]
        %v3211 = vld [vmem:[#allocation7 + $0x118] sm:$0xff]
        %v3212 = vld [vmem:[#allocation7 + $0x120] sm:$0xff]
        %v3213 = vld [vmem:[#allocation7 + $0x128] sm:$0xff]
        %v3214 = vld [vmem:[#allocation7 + $0x130] sm:$0xf]
        %v3215 = vld [vmem:[#allocation7 + $0x134] sm:$0xff]
        %v3216 = vld [vmem:[#allocation7 + $0x13c] sm:$0xff]
        %v3217 = vld [vmem:[#allocation7 + $0x144] sm:$0xff]
        %v3218 = vld [vmem:[#allocation7 + $0x14c] sm:$0xf]
        %v3219 = vld [vmem:[#allocation7 + $0x150] sm:$0xff]
        %v3220 = vld [vmem:[#allocation7 + $0x158] sm:$0xff]
        %v3221 = vld [vmem:[#allocation7 + $0x160] sm:$0xff]
        %v3222 = vld [vmem:[#allocation7 + $0x168] sm:$0xf]
        %v3223 = vld [vmem:[#allocation7 + $0x16c] sm:$0xff]
        %v3224 = vld [vmem:[#allocation7 + $0x174] sm:$0xff]
        %v3225 = vld [vmem:[#allocation7 + $0x17c] sm:$0xff]
        %v3226 = vld [vmem:[#allocation7 + $0x184] sm:$0xf]
        %v3227 = vld [vmem:[#allocation7 + $0x188] sm:$0xff]
        %v3228 = vld [vmem:[#allocation7 + $0x190] sm:$0xff]
        %v3229 = vld [vmem:[#allocation7 + $0x198] sm:$0xff]
        %v3230 = vld [vmem:[#allocation7 + $0x1a0] sm:$0xf]
        %v3231 = vld [vmem:[#allocation7 + $0x1a4] sm:$0xff]
        %v3232 = vld [vmem:[#allocation7 + $0x1ac] sm:$0xff]
        %v3233 = vld [vmem:[#allocation7 + $0x1b4] sm:$0xff]
        %v3234 = vld [vmem:[#allocation7 + $0x1bc] sm:$0xf]
        %v3235 = vld [vmem:[%s18] sm:$0xff]
        %v3237 = vlaneseq
        %v3238 = vshrl.u32 %v3237, 7
        %v3239 = vsub.s32 0, %v3238
        %v3240 = vrot.slane %v3235, %v3239
        %v3241 = vlaneseq
        %v3242 = vshrl.u32 %v3241, 7
        %v3243 = vsub.s32 1, %v3242
        %v3244 = vrot.slane %v3235, %v3243
        %v3245 = vlaneseq
        %v3246 = vshrl.u32 %v3245, 7
        %v3247 = vsub.s32 2, %v3246
        %v3248 = vrot.slane %v3235, %v3247
        %v3249 = vlaneseq
        %v3250 = vshrl.u32 %v3249, 7
        %v3251 = vsub.s32 3, %v3250
        %v3252 = vrot.slane %v3235, %v3251
        %v3253 = vlaneseq
        %v3254 = vshrl.u32 %v3253, 7
        %v3255 = vsub.s32 4, %v3254
        %v3256 = vrot.slane %v3235, %v3255
        %v3257 = vlaneseq
        %v3258 = vshrl.u32 %v3257, 7
        %v3259 = vsub.s32 5, %v3258
        %v3260 = vrot.slane %v3235, %v3259
        %v3261 = vlaneseq
        %v3262 = vshrl.u32 %v3261, 7
        %v3263 = vsub.s32 6, %v3262
        %v3264 = vrot.slane %v3235, %v3263
        %v3336 = vunpack.c.l.b16 %v3171
        %v3337 = vunpack.c.h.b16 %v3171
        %v3338 = vunpack.c.l.b16 %v3172
        %v3339 = vunpack.c.h.b16 %v3172
        %v3340 = vunpack.c.l.b16 %v3173
        %v3341 = vunpack.c.h.b16 %v3173
        %v3342 = vunpack.c.l.b16 %v3174
        %v3343 = vunpack.c.l.b16 %v3175
        %v3344 = vunpack.c.h.b16 %v3175
        %v3345 = vunpack.c.l.b16 %v3176
        %v3346 = vunpack.c.h.b16 %v3176
        %v3347 = vunpack.c.l.b16 %v3177
        %v3348 = vunpack.c.h.b16 %v3177
        %v3349 = vunpack.c.l.b16 %v3178
        %v3350 = vunpack.c.l.b16 %v3179
        %v3351 = vunpack.c.h.b16 %v3179
        %v3352 = vunpack.c.l.b16 %v3180
        %v3353 = vunpack.c.h.b16 %v3180
        %v3354 = vunpack.c.l.b16 %v3181
        %v3355 = vunpack.c.h.b16 %v3181
        %v3356 = vunpack.c.l.b16 %v3182
        %v3357 = vunpack.c.l.b16 %v3183
        %v3358 = vunpack.c.h.b16 %v3183
        %v3359 = vunpack.c.l.b16 %v3184
        %v3360 = vunpack.c.h.b16 %v3184
        %v3361 = vunpack.c.l.b16 %v3185
        %v3362 = vunpack.c.h.b16 %v3185
        %v3363 = vunpack.c.l.b16 %v3186
        %v3364 = vunpack.c.l.b16 %v3187
        %v3365 = vunpack.c.h.b16 %v3187
        %v3366 = vunpack.c.l.b16 %v3188
        %v3367 = vunpack.c.h.b16 %v3188
        %v3368 = vunpack.c.l.b16 %v3189
        %v3369 = vunpack.c.h.b16 %v3189
        %v3370 = vunpack.c.l.b16 %v3190
        %v3371 = vunpack.c.l.b16 %v3191
        %v3372 = vunpack.c.h.b16 %v3191
        %v3373 = vunpack.c.l.b16 %v3192
        %v3374 = vunpack.c.h.b16 %v3192
        %v3375 = vunpack.c.l.b16 %v3193
        %v3376 = vunpack.c.h.b16 %v3193
        %v3377 = vunpack.c.l.b16 %v3194
        %v3378 = vunpack.c.l.b16 %v3195
        %v3379 = vunpack.c.h.b16 %v3195
        %v3380 = vunpack.c.l.b16 %v3196
        %v3381 = vunpack.c.h.b16 %v3196
        %v3382 = vunpack.c.l.b16 %v3197
        %v3383 = vunpack.c.h.b16 %v3197
        %v3384 = vunpack.c.l.b16 %v3198
        %v3385 = vunpack.c.l.b16 %v3199
        %v3386 = vunpack.c.h.b16 %v3199
        %v3387 = vunpack.c.l.b16 %v3200
        %v3388 = vunpack.c.h.b16 %v3200
        %v3389 = vunpack.c.l.b16 %v3201
        %v3390 = vunpack.c.h.b16 %v3201
        %v3391 = vunpack.c.l.b16 %v3202
        %v3392 = vunpack.c.l.b16 %v3203
        %v3393 = vunpack.c.h.b16 %v3203
        %v3394 = vunpack.c.l.b16 %v3204
        %v3395 = vunpack.c.h.b16 %v3204
        %v3396 = vunpack.c.l.b16 %v3205
        %v3397 = vunpack.c.h.b16 %v3205
        %v3398 = vunpack.c.l.b16 %v3206
        %v3399 = vunpack.c.l.b16 %v3207
        %v3400 = vunpack.c.h.b16 %v3207
        %v3401 = vunpack.c.l.b16 %v3208
        %v3402 = vunpack.c.h.b16 %v3208
        %v3403 = vunpack.c.l.b16 %v3209
        %v3404 = vunpack.c.h.b16 %v3209
        %v3405 = vunpack.c.l.b16 %v3210
        %v3406 = vunpack.c.l.b16 %v3211
        %v3407 = vunpack.c.h.b16 %v3211
        %v3408 = vunpack.c.l.b16 %v3212
        %v3409 = vunpack.c.h.b16 %v3212
        %v3410 = vunpack.c.l.b16 %v3213
        %v3411 = vunpack.c.h.b16 %v3213
        %v3412 = vunpack.c.l.b16 %v3214
        %v3413 = vunpack.c.l.b16 %v3215
        %v3414 = vunpack.c.h.b16 %v3215
        %v3415 = vunpack.c.l.b16 %v3216
        %v3416 = vunpack.c.h.b16 %v3216
        %v3417 = vunpack.c.l.b16 %v3217
        %v3418 = vunpack.c.h.b16 %v3217
        %v3419 = vunpack.c.l.b16 %v3218
        %v3420 = vunpack.c.l.b16 %v3219
        %v3421 = vunpack.c.h.b16 %v3219
        %v3422 = vunpack.c.l.b16 %v3220
        %v3423 = vunpack.c.h.b16 %v3220
        %v3424 = vunpack.c.l.b16 %v3221
        %v3425 = vunpack.c.h.b16 %v3221
        %v3426 = vunpack.c.l.b16 %v3222
        %v3427 = vunpack.c.l.b16 %v3223
        %v3428 = vunpack.c.h.b16 %v3223
        %v3429 = vunpack.c.l.b16 %v3224
        %v3430 = vunpack.c.h.b16 %v3224
        %v3431 = vunpack.c.l.b16 %v3225
        %v3432 = vunpack.c.h.b16 %v3225
        %v3433 = vunpack.c.l.b16 %v3226
        %v3434 = vunpack.c.l.b16 %v3227
        %v3435 = vunpack.c.h.b16 %v3227
        %v3436 = vunpack.c.l.b16 %v3228
        %v3437 = vunpack.c.h.b16 %v3228
        %v3438 = vunpack.c.l.b16 %v3229
        %v3439 = vunpack.c.h.b16 %v3229
        %v3440 = vunpack.c.l.b16 %v3230
        %v3441 = vunpack.c.l.b16 %v3231
        %v3442 = vunpack.c.h.b16 %v3231
        %v3443 = vunpack.c.l.b16 %v3232
        %v3444 = vunpack.c.h.b16 %v3232
        %v3445 = vunpack.c.l.b16 %v3233
        %v3446 = vunpack.c.h.b16 %v3233
        %v3447 = vunpack.c.l.b16 %v3234
        %v3448 = vpack.c.b16 %v3343, %v3336
        %v3449 = vpack.c.b16 %v3344, %v3337
        %v3450 = vpack.c.b16 %v3345, %v3338
        %v3451 = vpack.c.b16 %v3346, %v3339
        %v3452 = vpack.c.b16 %v3347, %v3340
        %v3453 = vpack.c.b16 %v3348, %v3341
        %v3454 = vpack.c.b16 %v3349, %v3342
        %v3455 = vpack.c.b16 %v3357, %v3350
        %v3456 = vpack.c.b16 %v3358, %v3351
        %v3457 = vpack.c.b16 %v3359, %v3352
        %v3458 = vpack.c.b16 %v3360, %v3353
        %v3459 = vpack.c.b16 %v3361, %v3354
        %v3460 = vpack.c.b16 %v3362, %v3355
        %v3461 = vpack.c.b16 %v3363, %v3356
        %v3462 = vpack.c.b16 %v3371, %v3364
        %v3463 = vpack.c.b16 %v3372, %v3365
        %v3464 = vpack.c.b16 %v3373, %v3366
        %v3465 = vpack.c.b16 %v3374, %v3367
        %v3466 = vpack.c.b16 %v3375, %v3368
        %v3467 = vpack.c.b16 %v3376, %v3369
        %v3468 = vpack.c.b16 %v3377, %v3370
        %v3469 = vpack.c.b16 %v3385, %v3378
        %v3470 = vpack.c.b16 %v3386, %v3379
        %v3471 = vpack.c.b16 %v3387, %v3380
        %v3472 = vpack.c.b16 %v3388, %v3381
        %v3473 = vpack.c.b16 %v3389, %v3382
        %v3474 = vpack.c.b16 %v3390, %v3383
        %v3475 = vpack.c.b16 %v3391, %v3384
        %v3476 = vpack.c.b16 %v3399, %v3392
        %v3477 = vpack.c.b16 %v3400, %v3393
        %v3478 = vpack.c.b16 %v3401, %v3394
        %v3479 = vpack.c.b16 %v3402, %v3395
        %v3480 = vpack.c.b16 %v3403, %v3396
        %v3481 = vpack.c.b16 %v3404, %v3397
        %v3482 = vpack.c.b16 %v3405, %v3398
        %v3483 = vpack.c.b16 %v3413, %v3406
        %v3484 = vpack.c.b16 %v3414, %v3407
        %v3485 = vpack.c.b16 %v3415, %v3408
        %v3486 = vpack.c.b16 %v3416, %v3409
        %v3487 = vpack.c.b16 %v3417, %v3410
        %v3488 = vpack.c.b16 %v3418, %v3411
        %v3489 = vpack.c.b16 %v3419, %v3412
        %v3490 = vpack.c.b16 %v3427, %v3420
        %v3491 = vpack.c.b16 %v3428, %v3421
        %v3492 = vpack.c.b16 %v3429, %v3422
        %v3493 = vpack.c.b16 %v3430, %v3423
        %v3494 = vpack.c.b16 %v3431, %v3424
        %v3495 = vpack.c.b16 %v3432, %v3425
        %v3496 = vpack.c.b16 %v3433, %v3426
        %v3497 = vpack.c.b16 %v3441, %v3434
        %v3498 = vpack.c.b16 %v3442, %v3435
        %v3499 = vpack.c.b16 %v3443, %v3436
        %v3500 = vpack.c.b16 %v3444, %v3437
        %v3501 = vpack.c.b16 %v3445, %v3438
        %v3502 = vpack.c.b16 %v3446, %v3439
        %v3503 = vpack.c.b16 %v3447, %v3440
        %3560 = vmatprep.subr.bf16.mxu0 %v3449
        %3561 = vmatpush1.bf16.msra.mxu0 %v3448
        %3562 = vmatprep.subr.bf16.mxu0 %v3456
        %3563 = vmatpush1.bf16.msra.mxu0 %v3455
        %3564 = vmatprep.subr.bf16.mxu0 %v3463
        %3565 = vmatpush1.bf16.msra.mxu0 %v3462
        %3566 = vmatprep.subr.bf16.mxu0 %v3470
        %3567 = vmatpush1.bf16.msra.mxu0 %v3469
        %3568 = vmatprep.subr.bf16.mxu0 %v3477
        %3569 = vmatpush1.bf16.msra.mxu0 %v3476
        %3570 = vmatprep.subr.bf16.mxu0 %v3484
        %3571 = vmatpush1.bf16.msra.mxu0 %v3483
        %3572 = vmatprep.subr.bf16.mxu0 %v3491
        %3573 = vmatpush1.bf16.msra.mxu0 %v3490
        %3574 = vmatprep.subr.bf16.mxu0 %v3498
        %3575 = vmatpush1.bf16.msra.mxu0 %v3497
        %3576 = vmatprep.subr.bf16.mxu0 0
        %3577 = vmatpush1.bf16.msra.mxu0 0
        %3578 = vmatprep.subr.bf16.mxu0 0
        %3579 = vmatpush1.bf16.msra.mxu0 0
        %3580 = vmatprep.subr.bf16.mxu0 0
        %3581 = vmatpush1.bf16.msra.mxu0 0
        %3582 = vmatprep.subr.bf16.mxu0 0
        %3583 = vmatpush1.bf16.msra.mxu0 0
        %3584 = vmatprep.subr.bf16.mxu0 0
        %3585 = vmatpush1.bf16.msra.mxu0 0
        %3586 = vmatprep.subr.bf16.mxu0 0
        %3587 = vmatpush1.bf16.msra.mxu0 0
        %3588 = vmatprep.subr.bf16.mxu0 0
        %3589 = vmatpush1.bf16.msra.mxu0 0
        %3590 = vmatprep.subr.bf16.mxu0 0
        %3591 = vmatpush1.bf16.msra.mxu0 0
        %3592 = vmatprep.mubr.bf16.mxu0 0
        %3593 = vmatmul.mubr.bf16.gmra.mrb[0].mxu0 %v3163
        %v3594 = vpop.f32.mrb[0].mxu0
        %v3595 = vadd.f32 %v3240, %v3594
        %v3596 = vpop.f32.mrb[0].mxu0
        %v3597 = vadd.f32 %v3244, %v3596
        %v3598 = vpop.f32.mrb[0].mxu0
        %v3599 = vadd.f32 %v3240, %v3598
        %v3600 = vpop.f32.mrb[0].mxu0
        %v3601 = vadd.f32 %v3244, %v3600
        %3602 = vmatprep.mubr.bf16.mxu0 0
        %3603 = vmatmul.mubr.bf16.gmra.mrb[0].mxu0 %v3164
        %v3604 = vpop.f32.mrb[0].mxu0
        %v3605 = vadd.f32 %v3240, %v3604
        %v3606 = vpop.f32.mrb[0].mxu0
        %v3607 = vadd.f32 %v3244, %v3606
        %v3608 = vpop.f32.mrb[0].mxu0
        %v3609 = vadd.f32 %v3240, %v3608
        %v3610 = vpop.f32.mrb[0].mxu0
        %v3611 = vadd.f32 %v3244, %v3610
        %3612 = vmatprep.mubr.bf16.mxu0 0
        %3613 = vmatmul.mubr.bf16.gmra.mrb[0].mxu0 %v3165
        %v3614 = vpop.f32.mrb[0].mxu0
        %v3615 = vadd.f32 %v3240, %v3614
        %v3616 = vpop.f32.mrb[0].mxu0
        %v3617 = vadd.f32 %v3244, %v3616
        %v3618 = vpop.f32.mrb[0].mxu0
        %v3619 = vadd.f32 %v3240, %v3618
        %v3620 = vpop.f32.mrb[0].mxu0
        %v3621 = vadd.f32 %v3244, %v3620
        %3622 = vmatprep.mubr.bf16.mxu0 0
        %3623 = vmatmul.mubr.bf16.gmra.mrb[0].mxu0 %v3166
        %v3624 = vpop.f32.mrb[0].mxu0
        %v3625 = vadd.f32 %v3240, %v3624
        %v3626 = vpop.f32.mrb[0].mxu0
        %v3627 = vadd.f32 %v3244, %v3626
        %v3628 = vpop.f32.mrb[0].mxu0
        %v3629 = vadd.f32 %v3240, %v3628
        %v3630 = vpop.f32.mrb[0].mxu0
        %v3631 = vadd.f32 %v3244, %v3630
        %3632 = vmatprep.mubr.bf16.mxu0 0
        %3633 = vmatmul.mubr.bf16.gmra.mrb[0].mxu0 %v3167
        %v3634 = vpop.f32.mrb[0].mxu0
        %v3635 = vadd.f32 %v3240, %v3634
        %v3636 = vpop.f32.mrb[0].mxu0
        %v3637 = vadd.f32 %v3244, %v3636
        %v3638 = vpop.f32.mrb[0].mxu0
        %v3639 = vadd.f32 %v3240, %v3638
        %v3640 = vpop.f32.mrb[0].mxu0
        %v3641 = vadd.f32 %v3244, %v3640
        %3642 = vmatprep.mubr.bf16.mxu0 0
        %3643 = vmatmul.mubr.bf16.gmra.mrb[0].mxu0 %v3168
        %v3644 = vpop.f32.mrb[0].mxu0
        %v3645 = vadd.f32 %v3240, %v3644
        %v3646 = vpop.f32.mrb[0].mxu0
        %v3647 = vadd.f32 %v3244, %v3646
        %v3648 = vpop.f32.mrb[0].mxu0
        %v3649 = vadd.f32 %v3240, %v3648
        %v3650 = vpop.f32.mrb[0].mxu0
        %v3651 = vadd.f32 %v3244, %v3650
        %3652 = vmatprep.mubr.bf16.mxu0 0
        %3653 = vmatmul.mubr.bf16.gmra.mrb[0].mxu0 %v3169
        %v3654 = vpop.f32.mrb[0].mxu0
        %v3655 = vadd.f32 %v3240, %v3654
        %v3656 = vpop.f32.mrb[0].mxu0
        %v3657 = vadd.f32 %v3244, %v3656
        %v3658 = vpop.f32.mrb[0].mxu0
        %v3659 = vadd.f32 %v3240, %v3658
        %v3660 = vpop.f32.mrb[0].mxu0
        %v3661 = vadd.f32 %v3244, %v3660
        %3662 = vmatprep.mubr.bf16.mxu0 0
        %3663 = vmatmul.mubr.bf16.gmra.mrb[0].mxu0 %v3170
        %v3664 = vpop.f32.mrb[0].mxu0
        %v3665 = vadd.f32 %v3240, %v3664
        %v3666 = vpop.f32.mrb[0].mxu0
        %v3667 = vadd.f32 %v3244, %v3666
        %v3668 = vpop.f32.mrb[0].mxu0
        %v3669 = vadd.f32 %v3240, %v3668
        %v3670 = vpop.f32.mrb[0].mxu0
        %v3671 = vadd.f32 %v3244, %v3670
        %3672 = vdwg.mxu0
        %3673 = vmatprep.subr.bf16.mxu0 %v3451
        %3674 = vmatpush1.bf16.msra.mxu0 %v3450
        %3675 = vmatprep.subr.bf16.mxu0 %v3458
        %3676 = vmatpush1.bf16.msra.mxu0 %v3457
        %3677 = vmatprep.subr.bf16.mxu0 %v3465
        %3678 = vmatpush1.bf16.msra.mxu0 %v3464
        %3679 = vmatprep.subr.bf16.mxu0 %v3472
        %3680 = vmatpush1.bf16.msra.mxu0 %v3471
        %3681 = vmatprep.subr.bf16.mxu0 %v3479
        %3682 = vmatpush1.bf16.msra.mxu0 %v3478
        %3683 = vmatprep.subr.bf16.mxu0 %v3486
        %3684 = vmatpush1.bf16.msra.mxu0 %v3485
        %3685 = vmatprep.subr.bf16.mxu0 %v3493
        %3686 = vmatpush1.bf16.msra.mxu0 %v3492
        %3687 = vmatprep.subr.bf16.mxu0 %v3500
        %3688 = vmatpush1.bf16.msra.mxu0 %v3499
        %3689 = vmatprep.subr.bf16.mxu0 0
        %3690 = vmatpush1.bf16.msra.mxu0 0
        %3691 = vmatprep.subr.bf16.mxu0 0
        %3692 = vmatpush1.bf16.msra.mxu0 0
        %3693 = vmatprep.subr.bf16.mxu0 0
        %3694 = vmatpush1.bf16.msra.mxu0 0
        %3695 = vmatprep.subr.bf16.mxu0 0
        %3696 = vmatpush1.bf16.msra.mxu0 0
        %3697 = vmatprep.subr.bf16.mxu0 0
        %3698 = vmatpush1.bf16.msra.mxu0 0
        %3699 = vmatprep.subr.bf16.mxu0 0
        %3700 = vmatpush1.bf16.msra.mxu0 0
        %3701 = vmatprep.subr.bf16.mxu0 0
        %3702 = vmatpush1.bf16.msra.mxu0 0
        %3703 = vmatprep.subr.bf16.mxu0 0
        %3704 = vmatpush1.bf16.msra.mxu0 0
        %3705 = vmatprep.mubr.bf16.mxu0 0
        %3706 = vmatmul.mubr.bf16.gmra.mrb[0].mxu0 %v3163
        %v3707 = vpop.f32.mrb[0].mxu0
        %v3708 = vadd.f32 %v3248, %v3707
        %v3709 = vpop.f32.mrb[0].mxu0
        %v3710 = vadd.f32 %v3252, %v3709
        %v3711 = vpop.f32.mrb[0].mxu0
        %v3712 = vadd.f32 %v3248, %v3711
        %v3713 = vpop.f32.mrb[0].mxu0
        %v3714 = vadd.f32 %v3252, %v3713
        %3715 = vmatprep.mubr.bf16.mxu0 0
        %3716 = vmatmul.mubr.bf16.gmra.mrb[0].mxu0 %v3164
        %v3717 = vpop.f32.mrb[0].mxu0
        %v3718 = vadd.f32 %v3248, %v3717
        %v3719 = vpop.f32.mrb[0].mxu0
        %v3720 = vadd.f32 %v3252, %v3719
        %v3721 = vpop.f32.mrb[0].mxu0
        %v3722 = vadd.f32 %v3248, %v3721
        %v3723 = vpop.f32.mrb[0].mxu0
        %v3724 = vadd.f32 %v3252, %v3723
        %3725 = vmatprep.mubr.bf16.mxu0 0
        %3726 = vmatmul.mubr.bf16.gmra.mrb[0].mxu0 %v3165
        %v3727 = vpop.f32.mrb[0].mxu0
        %v3728 = vadd.f32 %v3248, %v3727
        %v3729 = vpop.f32.mrb[0].mxu0
        %v3730 = vadd.f32 %v3252, %v3729
        %v3731 = vpop.f32.mrb[0].mxu0
        %v3732 = vadd.f32 %v3248, %v3731
        %v3733 = vpop.f32.mrb[0].mxu0
        %v3734 = vadd.f32 %v3252, %v3733
        %3735 = vmatprep.mubr.bf16.mxu0 0
        %3736 = vmatmul.mubr.bf16.gmra.mrb[0].mxu0 %v3166
        %v3737 = vpop.f32.mrb[0].mxu0
        %v3738 = vadd.f32 %v3248, %v3737
        %v3739 = vpop.f32.mrb[0].mxu0
        %v3740 = vadd.f32 %v3252, %v3739
        %v3741 = vpop.f32.mrb[0].mxu0
        %v3742 = vadd.f32 %v3248, %v3741
        %v3743 = vpop.f32.mrb[0].mxu0
        %v3744 = vadd.f32 %v3252, %v3743
        %3745 = vmatprep.mubr.bf16.mxu0 0
        %3746 = vmatmul.mubr.bf16.gmra.mrb[0].mxu0 %v3167
        %v3747 = vpop.f32.mrb[0].mxu0
        %v3748 = vadd.f32 %v3248, %v3747
        %v3749 = vpop.f32.mrb[0].mxu0
        %v3750 = vadd.f32 %v3252, %v3749
        %v3751 = vpop.f32.mrb[0].mxu0
        %v3752 = vadd.f32 %v3248, %v3751
        %v3753 = vpop.f32.mrb[0].mxu0
        %v3754 = vadd.f32 %v3252, %v3753
        %3755 = vmatprep.mubr.bf16.mxu0 0
        %3756 = vmatmul.mubr.bf16.gmra.mrb[0].mxu0 %v3168
        %v3757 = vpop.f32.mrb[0].mxu0
        %v3758 = vadd.f32 %v3248, %v3757
        %v3759 = vpop.f32.mrb[0].mxu0
        %v3760 = vadd.f32 %v3252, %v3759
        %v3761 = vpop.f32.mrb[0].mxu0
        %v3762 = vadd.f32 %v3248, %v3761
        %v3763 = vpop.f32.mrb[0].mxu0
        %v3764 = vadd.f32 %v3252, %v3763
        %3765 = vmatprep.mubr.bf16.mxu0 0
        %3766 = vmatmul.mubr.bf16.gmra.mrb[0].mxu0 %v3169
        %v3767 = vpop.f32.mrb[0].mxu0
        %v3768 = vadd.f32 %v3248, %v3767
        %v3769 = vpop.f32.mrb[0].mxu0
        %v3770 = vadd.f32 %v3252, %v3769
        %v3771 = vpop.f32.mrb[0].mxu0
        %v3772 = vadd.f32 %v3248, %v3771
        %v3773 = vpop.f32.mrb[0].mxu0
        %v3774 = vadd.f32 %v3252, %v3773
        %3775 = vmatprep.mubr.bf16.mxu0 0
        %3776 = vmatmul.mubr.bf16.gmra.mrb[0].mxu0 %v3170
        %v3777 = vpop.f32.mrb[0].mxu0
        %v3778 = vadd.f32 %v3248, %v3777
        %v3779 = vpop.f32.mrb[0].mxu0
        %v3780 = vadd.f32 %v3252, %v3779
        %v3781 = vpop.f32.mrb[0].mxu0
        %v3782 = vadd.f32 %v3248, %v3781
        %v3783 = vpop.f32.mrb[0].mxu0
        %v3784 = vadd.f32 %v3252, %v3783
        %3785 = vdwg.mxu0
        %3786 = vmatprep.subr.bf16.mxu0 %v3453
        %3787 = vmatpush1.bf16.msra.mxu0 %v3452
        %3788 = vmatprep.subr.bf16.mxu0 %v3460
        %3789 = vmatpush1.bf16.msra.mxu0 %v3459
        %3790 = vmatprep.subr.bf16.mxu0 %v3467
        %3791 = vmatpush1.bf16.msra.mxu0 %v3466
        %3792 = vmatprep.subr.bf16.mxu0 %v3474
        %3793 = vmatpush1.bf16.msra.mxu0 %v3473
        %3794 = vmatprep.subr.bf16.mxu0 %v3481
        %3795 = vmatpush1.bf16.msra.mxu0 %v3480
        %3796 = vmatprep.subr.bf16.mxu0 %v3488
        %3797 = vmatpush1.bf16.msra.mxu0 %v3487
        %3798 = vmatprep.subr.bf16.mxu0 %v3495
        %3799 = vmatpush1.bf16.msra.mxu0 %v3494
        %3800 = vmatprep.subr.bf16.mxu0 %v3502
        %3801 = vmatpush1.bf16.msra.mxu0 %v3501
        %3802 = vmatprep.subr.bf16.mxu0 0
        %3803 = vmatpush1.bf16.msra.mxu0 0
        %3804 = vmatprep.subr.bf16.mxu0 0
        %3805 = vmatpush1.bf16.msra.mxu0 0
        %3806 = vmatprep.subr.bf16.mxu0 0
        %3807 = vmatpush1.bf16.msra.mxu0 0
        %3808 = vmatprep.subr.bf16.mxu0 0
        %3809 = vmatpush1.bf16.msra.mxu0 0
        %3810 = vmatprep.subr.bf16.mxu0 0
        %3811 = vmatpush1.bf16.msra.mxu0 0
        %3812 = vmatprep.subr.bf16.mxu0 0
        %3813 = vmatpush1.bf16.msra.mxu0 0
        %3814 = vmatprep.subr.bf16.mxu0 0
        %3815 = vmatpush1.bf16.msra.mxu0 0
        %3816 = vmatprep.subr.bf16.mxu0 0
        %3817 = vmatpush1.bf16.msra.mxu0 0
        %3818 = vmatprep.mubr.bf16.mxu0 0
        %3819 = vmatmul.mubr.bf16.gmra.mrb[0].mxu0 %v3163
        %v3820 = vpop.f32.mrb[0].mxu0
        %v3821 = vadd.f32 %v3256, %v3820
        %v3822 = vpop.f32.mrb[0].mxu0
        %v3823 = vadd.f32 %v3260, %v3822
        %v3824 = vpop.f32.mrb[0].mxu0
        %v3825 = vadd.f32 %v3256, %v3824
        %v3826 = vpop.f32.mrb[0].mxu0
        %v3827 = vadd.f32 %v3260, %v3826
        %3828 = vmatprep.mubr.bf16.mxu0 0
        %3829 = vmatmul.mubr.bf16.gmra.mrb[0].mxu0 %v3164
        %v3830 = vpop.f32.mrb[0].mxu0
        %v3831 = vadd.f32 %v3256, %v3830
        %v3832 = vpop.f32.mrb[0].mxu0
        %v3833 = vadd.f32 %v3260, %v3832
        %v3834 = vpop.f32.mrb[0].mxu0
        %v3835 = vadd.f32 %v3256, %v3834
        %v3836 = vpop.f32.mrb[0].mxu0
        %v3837 = vadd.f32 %v3260, %v3836
        %3838 = vmatprep.mubr.bf16.mxu0 0
        %3839 = vmatmul.mubr.bf16.gmra.mrb[0].mxu0 %v3165
        %v3840 = vpop.f32.mrb[0].mxu0
        %v3841 = vadd.f32 %v3256, %v3840
        %v3842 = vpop.f32.mrb[0].mxu0
        %v3843 = vadd.f32 %v3260, %v3842
        %v3844 = vpop.f32.mrb[0].mxu0
        %v3845 = vadd.f32 %v3256, %v3844
        %v3846 = vpop.f32.mrb[0].mxu0
        %v3847 = vadd.f32 %v3260, %v3846
        %3848 = vmatprep.mubr.bf16.mxu0 0
        %3849 = vmatmul.mubr.bf16.gmra.mrb[0].mxu0 %v3166
        %v3850 = vpop.f32.mrb[0].mxu0
        %v3851 = vadd.f32 %v3256, %v3850
        %v3852 = vpop.f32.mrb[0].mxu0
        %v3853 = vadd.f32 %v3260, %v3852
        %v3854 = vpop.f32.mrb[0].mxu0
        %v3855 = vadd.f32 %v3256, %v3854
        %v3856 = vpop.f32.mrb[0].mxu0
        %v3857 = vadd.f32 %v3260, %v3856
        %3858 = vmatprep.mubr.bf16.mxu0 0
        %3859 = vmatmul.mubr.bf16.gmra.mrb[0].mxu0 %v3167
        %v3860 = vpop.f32.mrb[0].mxu0
        %v3861 = vadd.f32 %v3256, %v3860
        %v3862 = vpop.f32.mrb[0].mxu0
        %v3863 = vadd.f32 %v3260, %v3862
        %v3864 = vpop.f32.mrb[0].mxu0
        %v3865 = vadd.f32 %v3256, %v3864
        %v3866 = vpop.f32.mrb[0].mxu0
        %v3867 = vadd.f32 %v3260, %v3866
        %3868 = vmatprep.mubr.bf16.mxu0 0
        %3869 = vmatmul.mubr.bf16.gmra.mrb[0].mxu0 %v3168
        %v3870 = vpop.f32.mrb[0].mxu0
        %v3871 = vadd.f32 %v3256, %v3870
        %v3872 = vpop.f32.mrb[0].mxu0
        %v3873 = vadd.f32 %v3260, %v3872
        %v3874 = vpop.f32.mrb[0].mxu0
        %v3875 = vadd.f32 %v3256, %v3874
        %v3876 = vpop.f32.mrb[0].mxu0
        %v3877 = vadd.f32 %v3260, %v3876
        %3878 = vmatprep.mubr.bf16.mxu0 0
        %3879 = vmatmul.mubr.bf16.gmra.mrb[0].mxu0 %v3169
        %v3880 = vpop.f32.mrb[0].mxu0
        %v3881 = vadd.f32 %v3256, %v3880
        %v3882 = vpop.f32.mrb[0].mxu0
        %v3883 = vadd.f32 %v3260, %v3882
        %v3884 = vpop.f32.mrb[0].mxu0
        %v3885 = vadd.f32 %v3256, %v3884
        %v3886 = vpop.f32.mrb[0].mxu0
        %v3887 = vadd.f32 %v3260, %v3886
        %3888 = vmatprep.mubr.bf16.mxu0 0
        %3889 = vmatmul.mubr.bf16.gmra.mrb[0].mxu0 %v3170
        %v3890 = vpop.f32.mrb[0].mxu0
        %v3891 = vadd.f32 %v3256, %v3890
        %v3892 = vpop.f32.mrb[0].mxu0
        %v3893 = vadd.f32 %v3260, %v3892
        %v3894 = vpop.f32.mrb[0].mxu0
        %v3895 = vadd.f32 %v3256, %v3894
        %v3896 = vpop.f32.mrb[0].mxu0
        %v3897 = vadd.f32 %v3260, %v3896
        %3898 = vdwg.mxu0
        %3899 = vmatprep.subr.bf16.mxu0 0
        %3900 = vmatpush1.bf16.msra.mxu0 %v3454
        %3901 = vmatprep.subr.bf16.mxu0 0
        %3902 = vmatpush1.bf16.msra.mxu0 %v3461
        %3903 = vmatprep.subr.bf16.mxu0 0
        %3904 = vmatpush1.bf16.msra.mxu0 %v3468
        %3905 = vmatprep.subr.bf16.mxu0 0
        %3906 = vmatpush1.bf16.msra.mxu0 %v3475
        %3907 = vmatprep.subr.bf16.mxu0 0
        %3908 = vmatpush1.bf16.msra.mxu0 %v3482
        %3909 = vmatprep.subr.bf16.mxu0 0
        %3910 = vmatpush1.bf16.msra.mxu0 %v3489
        %3911 = vmatprep.subr.bf16.mxu0 0
        %3912 = vmatpush1.bf16.msra.mxu0 %v3496
        %3913 = vmatprep.subr.bf16.mxu0 0
        %3914 = vmatpush1.bf16.msra.mxu0 %v3503
        %3915 = vmatprep.subr.bf16.mxu0 0
        %3916 = vmatpush1.bf16.msra.mxu0 0
        %3917 = vmatprep.subr.bf16.mxu0 0
        %3918 = vmatpush1.bf16.msra.mxu0 0
        %3919 = vmatprep.subr.bf16.mxu0 0
        %3920 = vmatpush1.bf16.msra.mxu0 0
        %3921 = vmatprep.subr.bf16.mxu0 0
        %3922 = vmatpush1.bf16.msra.mxu0 0
        %3923 = vmatprep.subr.bf16.mxu0 0
        %3924 = vmatpush1.bf16.msra.mxu0 0
        %3925 = vmatprep.subr.bf16.mxu0 0
        %3926 = vmatpush1.bf16.msra.mxu0 0
        %3927 = vmatprep.subr.bf16.mxu0 0
        %3928 = vmatpush1.bf16.msra.mxu0 0
        %3929 = vmatprep.subr.bf16.mxu0 0
        %3930 = vmatpush1.bf16.msra.mxu0 0
        %3931 = vmatprep.mubr.bf16.mxu0 0
        %3932 = vmatmul.mubr.bf16.gmra.mrb[0].mxu0 %v3163
        %v3933 = vpop.f32.mrb[0].mxu0
        %v3934 = vadd.f32 %v3264, %v3933
        %v3935 = vpop.f32.mrb[0].mxu0
        %v3936 = vpop.f32.mrb[0].mxu0
        %v3937 = vadd.f32 %v3264, %v3936
        %v3938 = vpop.f32.mrb[0].mxu0
        %3939 = vmatprep.mubr.bf16.mxu0 0
        %3940 = vmatmul.mubr.bf16.gmra.mrb[0].mxu0 %v3164
        %v3941 = vpop.f32.mrb[0].mxu0
        %v3942 = vadd.f32 %v3264, %v3941
        %v3943 = vpop.f32.mrb[0].mxu0
        %v3944 = vpop.f32.mrb[0].mxu0
        %v3945 = vadd.f32 %v3264, %v3944
        %v3946 = vpop.f32.mrb[0].mxu0
        %3947 = vmatprep.mubr.bf16.mxu0 0
        %3948 = vmatmul.mubr.bf16.gmra.mrb[0].mxu0 %v3165
        %v3949 = vpop.f32.mrb[0].mxu0
        %v3950 = vadd.f32 %v3264, %v3949
        %v3951 = vpop.f32.mrb[0].mxu0
        %v3952 = vpop.f32.mrb[0].mxu0
        %v3953 = vadd.f32 %v3264, %v3952
        %v3954 = vpop.f32.mrb[0].mxu0
        %3955 = vmatprep.mubr.bf16.mxu0 0
        %3956 = vmatmul.mubr.bf16.gmra.mrb[0].mxu0 %v3166
        %v3957 = vpop.f32.mrb[0].mxu0
        %v3958 = vadd.f32 %v3264, %v3957
        %v3959 = vpop.f32.mrb[0].mxu0
        %v3960 = vpop.f32.mrb[0].mxu0
        %v3961 = vadd.f32 %v3264, %v3960
        %v3962 = vpop.f32.mrb[0].mxu0
        %3963 = vmatprep.mubr.bf16.mxu0 0
        %3964 = vmatmul.mubr.bf16.gmra.mrb[0].mxu0 %v3167
        %v3965 = vpop.f32.mrb[0].mxu0
        %v3966 = vadd.f32 %v3264, %v3965
        %v3967 = vpop.f32.mrb[0].mxu0
        %v3968 = vpop.f32.mrb[0].mxu0
        %v3969 = vadd.f32 %v3264, %v3968
        %v3970 = vpop.f32.mrb[0].mxu0
        %3971 = vmatprep.mubr.bf16.mxu0 0
        %3972 = vmatmul.mubr.bf16.gmra.mrb[0].mxu0 %v3168
        %v3973 = vpop.f32.mrb[0].mxu0
        %v3974 = vadd.f32 %v3264, %v3973
        %v3975 = vpop.f32.mrb[0].mxu0
        %v3976 = vpop.f32.mrb[0].mxu0
        %v3977 = vadd.f32 %v3264, %v3976
        %v3978 = vpop.f32.mrb[0].mxu0
        %3979 = vmatprep.mubr.bf16.mxu0 0
        %3980 = vmatmul.mubr.bf16.gmra.mrb[0].mxu0 %v3169
        %v3981 = vpop.f32.mrb[0].mxu0
        %v3982 = vadd.f32 %v3264, %v3981
        %v3983 = vpop.f32.mrb[0].mxu0
        %v3984 = vpop.f32.mrb[0].mxu0
        %v3985 = vadd.f32 %v3264, %v3984
        %v3986 = vpop.f32.mrb[0].mxu0
        %3987 = vmatprep.mubr.bf16.mxu0 0
        %3988 = vmatmul.mubr.bf16.gmra.mrb[0].mxu0 %v3170
        %v3989 = vpop.f32.mrb[0].mxu0
        %v3990 = vadd.f32 %v3264, %v3989
        %v3991 = vpop.f32.mrb[0].mxu0
        %v3992 = vpop.f32.mrb[0].mxu0
        %v3993 = vadd.f32 %v3264, %v3992
        %v3994 = vpop.f32.mrb[0].mxu0
        %3995 = vdwg.mxu0
        %v3996 = vxor.u32 %v3595, 2147483648
        %v3997 = vxor.u32 %v3597, 2147483648
        %v3998 = vxor.u32 %v3708, 2147483648
        %v3999 = vxor.u32 %v3710, 2147483648
        %v4000 = vxor.u32 %v3821, 2147483648
        %v4001 = vxor.u32 %v3823, 2147483648
        %v4002 = vxor.u32 %v3934, 2147483648
        %v4003 = vxor.u32 %v3599, 2147483648
        %v4004 = vxor.u32 %v3601, 2147483648
        %v4005 = vxor.u32 %v3712, 2147483648
        %v4006 = vxor.u32 %v3714, 2147483648
        %v4007 = vxor.u32 %v3825, 2147483648
        %v4008 = vxor.u32 %v3827, 2147483648
        %v4009 = vxor.u32 %v3937, 2147483648
        %v4010 = vxor.u32 %v3605, 2147483648
        %v4011 = vxor.u32 %v3607, 2147483648
        %v4012 = vxor.u32 %v3718, 2147483648
        %v4013 = vxor.u32 %v3720, 2147483648
        %v4014 = vxor.u32 %v3831, 2147483648
        %v4015 = vxor.u32 %v3833, 2147483648
        %v4016 = vxor.u32 %v3942, 2147483648
        %v4017 = vxor.u32 %v3609, 2147483648
        %v4018 = vxor.u32 %v3611, 2147483648
        %v4019 = vxor.u32 %v3722, 2147483648
        %v4020 = vxor.u32 %v3724, 2147483648
        %v4021 = vxor.u32 %v3835, 2147483648
        %v4022 = vxor.u32 %v3837, 2147483648
        %v4023 = vxor.u32 %v3945, 2147483648
        %v4024 = vxor.u32 %v3615, 2147483648
        %v4025 = vxor.u32 %v3617, 2147483648
        %v4026 = vxor.u32 %v3728, 2147483648
        %v4027 = vxor.u32 %v3730, 2147483648
        %v4028 = vxor.u32 %v3841, 2147483648
        %v4029 = vxor.u32 %v3843, 2147483648
        %v4030 = vxor.u32 %v3950, 2147483648
        %v4031 = vxor.u32 %v3619, 2147483648
        %v4032 = vxor.u32 %v3621, 2147483648
        %v4033 = vxor.u32 %v3732, 2147483648
        %v4034 = vxor.u32 %v3734, 2147483648
        %v4035 = vxor.u32 %v3845, 2147483648
        %v4036 = vxor.u32 %v3847, 2147483648
        %v4037 = vxor.u32 %v3953, 2147483648
        %v4038 = vxor.u32 %v3625, 2147483648
        %v4039 = vxor.u32 %v3627, 2147483648
        %v4040 = vxor.u32 %v3738, 2147483648
        %v4041 = vxor.u32 %v3740, 2147483648
        %v4042 = vxor.u32 %v3851, 2147483648
        %v4043 = vxor.u32 %v3853, 2147483648
        %v4044 = vxor.u32 %v3958, 2147483648
        %v4045 = vxor.u32 %v3629, 2147483648
        %v4046 = vxor.u32 %v3631, 2147483648
        %v4047 = vxor.u32 %v3742, 2147483648
        %v4048 = vxor.u32 %v3744, 2147483648
        %v4049 = vxor.u32 %v3855, 2147483648
        %v4050 = vxor.u32 %v3857, 2147483648
        %v4051 = vxor.u32 %v3961, 2147483648
        %v4052 = vxor.u32 %v3635, 2147483648
        %v4053 = vxor.u32 %v3637, 2147483648
        %v4054 = vxor.u32 %v3748, 2147483648
        %v4055 = vxor.u32 %v3750, 2147483648
        %v4056 = vxor.u32 %v3861, 2147483648
        %v4057 = vxor.u32 %v3863, 2147483648
        %v4058 = vxor.u32 %v3966, 2147483648
        %v4059 = vxor.u32 %v3639, 2147483648
        %v4060 = vxor.u32 %v3641, 2147483648
        %v4061 = vxor.u32 %v3752, 2147483648
        %v4062 = vxor.u32 %v3754, 2147483648
        %v4063 = vxor.u32 %v3865, 2147483648
        %v4064 = vxor.u32 %v3867, 2147483648
        %v4065 = vxor.u32 %v3969, 2147483648
        %v4066 = vxor.u32 %v3645, 2147483648
        %v4067 = vxor.u32 %v3647, 2147483648
        %v4068 = vxor.u32 %v3758, 2147483648
        %v4069 = vxor.u32 %v3760, 2147483648
        %v4070 = vxor.u32 %v3871, 2147483648
        %v4071 = vxor.u32 %v3873, 2147483648
        %v4072 = vxor.u32 %v3974, 2147483648
        %v4073 = vxor.u32 %v3649, 2147483648
        %v4074 = vxor.u32 %v3651, 2147483648
        %v4075 = vxor.u32 %v3762, 2147483648
        %v4076 = vxor.u32 %v3764, 2147483648
        %v4077 = vxor.u32 %v3875, 2147483648
        %v4078 = vxor.u32 %v3877, 2147483648
        %v4079 = vxor.u32 %v3977, 2147483648
        %v4080 = vxor.u32 %v3655, 2147483648
        %v4081 = vxor.u32 %v3657, 2147483648
        %v4082 = vxor.u32 %v3768, 2147483648
        %v4083 = vxor.u32 %v3770, 2147483648
        %v4084 = vxor.u32 %v3881, 2147483648
        %v4085 = vxor.u32 %v3883, 2147483648
        %v4086 = vxor.u32 %v3982, 2147483648
        %v4087 = vxor.u32 %v3659, 2147483648
        %v4088 = vxor.u32 %v3661, 2147483648
        %v4089 = vxor.u32 %v3772, 2147483648
        %v4090 = vxor.u32 %v3774, 2147483648
        %v4091 = vxor.u32 %v3885, 2147483648
        %v4092 = vxor.u32 %v3887, 2147483648
        %v4093 = vxor.u32 %v3985, 2147483648
        %v4094 = vxor.u32 %v3665, 2147483648
        %v4095 = vxor.u32 %v3667, 2147483648
        %v4096 = vxor.u32 %v3778, 2147483648
        %v4097 = vxor.u32 %v3780, 2147483648
        %v4098 = vxor.u32 %v3891, 2147483648
        %v4099 = vxor.u32 %v3893, 2147483648
        %v4100 = vxor.u32 %v3990, 2147483648
        %v4101 = vxor.u32 %v3669, 2147483648
        %v4102 = vxor.u32 %v3671, 2147483648
        %v4103 = vxor.u32 %v3782, 2147483648
        %v4104 = vxor.u32 %v3784, 2147483648
        %v4105 = vxor.u32 %v3895, 2147483648
        %v4106 = vxor.u32 %v3897, 2147483648
        %v4107 = vxor.u32 %v3993, 2147483648
        %v4108 = vmul.f32 %v3996, 1.442695
        %v4109 = vpow.pop %v4108
        %v4110 = vmul.f32 %v3997, 1.442695
        %v4111 = vpow.pop %v4110
        %v4112 = vmul.f32 %v3998, 1.442695
        %v4113 = vpow.pop %v4112
        %v4114 = vmul.f32 %v3999, 1.442695
        %v4115 = vpow.pop %v4114
        %v4116 = vmul.f32 %v4000, 1.442695
        %v4117 = vpow.pop %v4116
        %v4118 = vmul.f32 %v4001, 1.442695
        %v4119 = vpow.pop %v4118
        %v4120 = vmul.f32 %v4002, 1.442695
        %v4121 = vpow.pop %v4120
        %v4122 = vmul.f32 %v4003, 1.442695
        %v4123 = vpow.pop %v4122
        %v4124 = vmul.f32 %v4004, 1.442695
        %v4125 = vpow.pop %v4124
        %v4126 = vmul.f32 %v4005, 1.442695
        %v4127 = vpow.pop %v4126
        %v4128 = vmul.f32 %v4006, 1.442695
        %v4129 = vpow.pop %v4128
        %v4130 = vmul.f32 %v4007, 1.442695
        %v4131 = vpow.pop %v4130
        %v4132 = vmul.f32 %v4008, 1.442695
        %v4133 = vpow.pop %v4132
        %v4134 = vmul.f32 %v4009, 1.442695
        %v4135 = vpow.pop %v4134
        %v4136 = vmul.f32 %v4010, 1.442695
        %v4137 = vpow.pop %v4136
        %v4138 = vmul.f32 %v4011, 1.442695
        %v4139 = vpow.pop %v4138
        %v4140 = vmul.f32 %v4012, 1.442695
        %v4141 = vpow.pop %v4140
        %v4142 = vmul.f32 %v4013, 1.442695
        %v4143 = vpow.pop %v4142
        %v4144 = vmul.f32 %v4014, 1.442695
        %v4145 = vpow.pop %v4144
        %v4146 = vmul.f32 %v4015, 1.442695
        %v4147 = vpow.pop %v4146
        %v4148 = vmul.f32 %v4016, 1.442695
        %v4149 = vpow.pop %v4148
        %v4150 = vmul.f32 %v4017, 1.442695
        %v4151 = vpow.pop %v4150
        %v4152 = vmul.f32 %v4018, 1.442695
        %v4153 = vpow.pop %v4152
        %v4154 = vmul.f32 %v4019, 1.442695
        %v4155 = vpow.pop %v4154
        %v4156 = vmul.f32 %v4020, 1.442695
        %v4157 = vpow.pop %v4156
        %v4158 = vmul.f32 %v4021, 1.442695
        %v4159 = vpow.pop %v4158
        %v4160 = vmul.f32 %v4022, 1.442695
        %v4161 = vpow.pop %v4160
        %v4162 = vmul.f32 %v4023, 1.442695
        %v4163 = vpow.pop %v4162
        %v4164 = vmul.f32 %v4024, 1.442695
        %v4165 = vpow.pop %v4164
        %v4166 = vmul.f32 %v4025, 1.442695
        %v4167 = vpow.pop %v4166
        %v4168 = vmul.f32 %v4026, 1.442695
        %v4169 = vpow.pop %v4168
        %v4170 = vmul.f32 %v4027, 1.442695
        %v4171 = vpow.pop %v4170
        %v4172 = vmul.f32 %v4028, 1.442695
        %v4173 = vpow.pop %v4172
        %v4174 = vmul.f32 %v4029, 1.442695
        %v4175 = vpow.pop %v4174
        %v4176 = vmul.f32 %v4030, 1.442695
        %v4177 = vpow.pop %v4176
        %v4178 = vmul.f32 %v4031, 1.442695
        %v4179 = vpow.pop %v4178
        %v4180 = vmul.f32 %v4032, 1.442695
        %v4181 = vpow.pop %v4180
        %v4182 = vmul.f32 %v4033, 1.442695
        %v4183 = vpow.pop %v4182
        %v4184 = vmul.f32 %v4034, 1.442695
        %v4185 = vpow.pop %v4184
        %v4186 = vmul.f32 %v4035, 1.442695
        %v4187 = vpow.pop %v4186
        %v4188 = vmul.f32 %v4036, 1.442695
        %v4189 = vpow.pop %v4188
        %v4190 = vmul.f32 %v4037, 1.442695
        %v4191 = vpow.pop %v4190
        %v4192 = vmul.f32 %v4038, 1.442695
        %v4193 = vpow.pop %v4192
        %v4194 = vmul.f32 %v4039, 1.442695
        %v4195 = vpow.pop %v4194
        %v4196 = vmul.f32 %v4040, 1.442695
        %v4197 = vpow.pop %v4196
        %v4198 = vmul.f32 %v4041, 1.442695
        %v4199 = vpow.pop %v4198
        %v4200 = vmul.f32 %v4042, 1.442695
        %v4201 = vpow.pop %v4200
        %v4202 = vmul.f32 %v4043, 1.442695
        %v4203 = vpow.pop %v4202
        %v4204 = vmul.f32 %v4044, 1.442695
        %v4205 = vpow.pop %v4204
        %v4206 = vmul.f32 %v4045, 1.442695
        %v4207 = vpow.pop %v4206
        %v4208 = vmul.f32 %v4046, 1.442695
        %v4209 = vpow.pop %v4208
        %v4210 = vmul.f32 %v4047, 1.442695
        %v4211 = vpow.pop %v4210
        %v4212 = vmul.f32 %v4048, 1.442695
        %v4213 = vpow.pop %v4212
        %v4214 = vmul.f32 %v4049, 1.442695
        %v4215 = vpow.pop %v4214
        %v4216 = vmul.f32 %v4050, 1.442695
        %v4217 = vpow.pop %v4216
        %v4218 = vmul.f32 %v4051, 1.442695
        %v4219 = vpow.pop %v4218
        %v4220 = vmul.f32 %v4052, 1.442695
        %v4221 = vpow.pop %v4220
        %v4222 = vmul.f32 %v4053, 1.442695
        %v4223 = vpow.pop %v4222
        %v4224 = vmul.f32 %v4054, 1.442695
        %v4225 = vpow.pop %v4224
        %v4226 = vmul.f32 %v4055, 1.442695
        %v4227 = vpow.pop %v4226
        %v4228 = vmul.f32 %v4056, 1.442695
        %v4229 = vpow.pop %v4228
        %v4230 = vmul.f32 %v4057, 1.442695
        %v4231 = vpow.pop %v4230
        %v4232 = vmul.f32 %v4058, 1.442695
        %v4233 = vpow.pop %v4232
        %v4234 = vmul.f32 %v4059, 1.442695
        %v4235 = vpow.pop %v4234
        %v4236 = vmul.f32 %v4060, 1.442695
        %v4237 = vpow.pop %v4236
        %v4238 = vmul.f32 %v4061, 1.442695
        %v4239 = vpow.pop %v4238
        %v4240 = vmul.f32 %v4062, 1.442695
        %v4241 = vpow.pop %v4240
        %v4242 = vmul.f32 %v4063, 1.442695
        %v4243 = vpow.pop %v4242
        %v4244 = vmul.f32 %v4064, 1.442695
        %v4245 = vpow.pop %v4244
        %v4246 = vmul.f32 %v4065, 1.442695
        %v4247 = vpow.pop %v4246
        %v4248 = vmul.f32 %v4066, 1.442695
        %v4249 = vpow.pop %v4248
        %v4250 = vmul.f32 %v4067, 1.442695
        %v4251 = vpow.pop %v4250
        %v4252 = vmul.f32 %v4068, 1.442695
        %v4253 = vpow.pop %v4252
        %v4254 = vmul.f32 %v4069, 1.442695
        %v4255 = vpow.pop %v4254
        %v4256 = vmul.f32 %v4070, 1.442695
        %v4257 = vpow.pop %v4256
        %v4258 = vmul.f32 %v4071, 1.442695
        %v4259 = vpow.pop %v4258
        %v4260 = vmul.f32 %v4072, 1.442695
        %v4261 = vpow.pop %v4260
        %v4262 = vmul.f32 %v4073, 1.442695
        %v4263 = vpow.pop %v4262
        %v4264 = vmul.f32 %v4074, 1.442695
        %v4265 = vpow.pop %v4264
        %v4266 = vmul.f32 %v4075, 1.442695
        %v4267 = vpow.pop %v4266
        %v4268 = vmul.f32 %v4076, 1.442695
        %v4269 = vpow.pop %v4268
        %v4270 = vmul.f32 %v4077, 1.442695
        %v4271 = vpow.pop %v4270
        %v4272 = vmul.f32 %v4078, 1.442695
        %v4273 = vpow.pop %v4272
        %v4274 = vmul.f32 %v4079, 1.442695
        %v4275 = vpow.pop %v4274
        %v4276 = vmul.f32 %v4080, 1.442695
        %v4277 = vpow.pop %v4276
        %v4278 = vmul.f32 %v4081, 1.442695
        %v4279 = vpow.pop %v4278
        %v4280 = vmul.f32 %v4082, 1.442695
        %v4281 = vpow.pop %v4280
        %v4282 = vmul.f32 %v4083, 1.442695
        %v4283 = vpow.pop %v4282
        %v4284 = vmul.f32 %v4084, 1.442695
        %v4285 = vpow.pop %v4284
        %v4286 = vmul.f32 %v4085, 1.442695
        %v4287 = vpow.pop %v4286
        %v4288 = vmul.f32 %v4086, 1.442695
        %v4289 = vpow.pop %v4288
        %v4290 = vmul.f32 %v4087, 1.442695
        %v4291 = vpow.pop %v4290
        %v4292 = vmul.f32 %v4088, 1.442695
        %v4293 = vpow.pop %v4292
        %v4294 = vmul.f32 %v4089, 1.442695
        %v4295 = vpow.pop %v4294
        %v4296 = vmul.f32 %v4090, 1.442695
        %v4297 = vpow.pop %v4296
        %v4298 = vmul.f32 %v4091, 1.442695
        %v4299 = vpow.pop %v4298
        %v4300 = vmul.f32 %v4092, 1.442695
        %v4301 = vpow.pop %v4300
        %v4302 = vmul.f32 %v4093, 1.442695
        %v4303 = vpow.pop %v4302
        %v4304 = vmul.f32 %v4094, 1.442695
        %v4305 = vpow.pop %v4304
        %v4306 = vmul.f32 %v4095, 1.442695
        %v4307 = vpow.pop %v4306
        %v4308 = vmul.f32 %v4096, 1.442695
        %v4309 = vpow.pop %v4308
        %v4310 = vmul.f32 %v4097, 1.442695
        %v4311 = vpow.pop %v4310
        %v4312 = vmul.f32 %v4098, 1.442695
        %v4313 = vpow.pop %v4312
        %v4314 = vmul.f32 %v4099, 1.442695
        %v4315 = vpow.pop %v4314
        %v4316 = vmul.f32 %v4100, 1.442695
        %v4317 = vpow.pop %v4316
        %v4318 = vmul.f32 %v4101, 1.442695
        %v4319 = vpow.pop %v4318
        %v4320 = vmul.f32 %v4102, 1.442695
        %v4321 = vpow.pop %v4320
        %v4322 = vmul.f32 %v4103, 1.442695
        %v4323 = vpow.pop %v4322
        %v4324 = vmul.f32 %v4104, 1.442695
        %v4325 = vpow.pop %v4324
        %v4326 = vmul.f32 %v4105, 1.442695
        %v4327 = vpow.pop %v4326
        %v4328 = vmul.f32 %v4106, 1.442695
        %v4329 = vpow.pop %v4328
        %v4330 = vmul.f32 %v4107, 1.442695
        %v4331 = vpow.pop %v4330
        %v4332 = vadd.f32 %v4109, 1.0
        %v4333 = vadd.f32 %v4111, 1.0
        %v4334 = vadd.f32 %v4113, 1.0
        %v4335 = vadd.f32 %v4115, 1.0
        %v4336 = vadd.f32 %v4117, 1.0
        %v4337 = vadd.f32 %v4119, 1.0
        %v4338 = vadd.f32 %v4121, 1.0
        %v4339 = vadd.f32 %v4123, 1.0
        %v4340 = vadd.f32 %v4125, 1.0
        %v4341 = vadd.f32 %v4127, 1.0
        %v4342 = vadd.f32 %v4129, 1.0
        %v4343 = vadd.f32 %v4131, 1.0
        %v4344 = vadd.f32 %v4133, 1.0
        %v4345 = vadd.f32 %v4135, 1.0
        %v4346 = vadd.f32 %v4137, 1.0
        %v4347 = vadd.f32 %v4139, 1.0
        %v4348 = vadd.f32 %v4141, 1.0
        %v4349 = vadd.f32 %v4143, 1.0
        %v4350 = vadd.f32 %v4145, 1.0
        %v4351 = vadd.f32 %v4147, 1.0
        %v4352 = vadd.f32 %v4149, 1.0
        %v4353 = vadd.f32 %v4151, 1.0
        %v4354 = vadd.f32 %v4153, 1.0
        %v4355 = vadd.f32 %v4155, 1.0
        %v4356 = vadd.f32 %v4157, 1.0
        %v4357 = vadd.f32 %v4159, 1.0
        %v4358 = vadd.f32 %v4161, 1.0
        %v4359 = vadd.f32 %v4163, 1.0
        %v4360 = vadd.f32 %v4165, 1.0
        %v4361 = vadd.f32 %v4167, 1.0
        %v4362 = vadd.f32 %v4169, 1.0
        %v4363 = vadd.f32 %v4171, 1.0
        %v4364 = vadd.f32 %v4173, 1.0
        %v4365 = vadd.f32 %v4175, 1.0
        %v4366 = vadd.f32 %v4177, 1.0
        %v4367 = vadd.f32 %v4179, 1.0
        %v4368 = vadd.f32 %v4181, 1.0
        %v4369 = vadd.f32 %v4183, 1.0
        %v4370 = vadd.f32 %v4185, 1.0
        %v4371 = vadd.f32 %v4187, 1.0
        %v4372 = vadd.f32 %v4189, 1.0
        %v4373 = vadd.f32 %v4191, 1.0
        %v4374 = vadd.f32 %v4193, 1.0
        %v4375 = vadd.f32 %v4195, 1.0
        %v4376 = vadd.f32 %v4197, 1.0
        %v4377 = vadd.f32 %v4199, 1.0
        %v4378 = vadd.f32 %v4201, 1.0
        %v4379 = vadd.f32 %v4203, 1.0
        %v4380 = vadd.f32 %v4205, 1.0
        %v4381 = vadd.f32 %v4207, 1.0
        %v4382 = vadd.f32 %v4209, 1.0
        %v4383 = vadd.f32 %v4211, 1.0
        %v4384 = vadd.f32 %v4213, 1.0
        %v4385 = vadd.f32 %v4215, 1.0
        %v4386 = vadd.f32 %v4217, 1.0
        %v4387 = vadd.f32 %v4219, 1.0
        %v4388 = vadd.f32 %v4221, 1.0
        %v4389 = vadd.f32 %v4223, 1.0
        %v4390 = vadd.f32 %v4225, 1.0
        %v4391 = vadd.f32 %v4227, 1.0
        %v4392 = vadd.f32 %v4229, 1.0
        %v4393 = vadd.f32 %v4231, 1.0
        %v4394 = vadd.f32 %v4233, 1.0
        %v4395 = vadd.f32 %v4235, 1.0
        %v4396 = vadd.f32 %v4237, 1.0
        %v4397 = vadd.f32 %v4239, 1.0
        %v4398 = vadd.f32 %v4241, 1.0
        %v4399 = vadd.f32 %v4243, 1.0
        %v4400 = vadd.f32 %v4245, 1.0
        %v4401 = vadd.f32 %v4247, 1.0
        %v4402 = vadd.f32 %v4249, 1.0
        %v4403 = vadd.f32 %v4251, 1.0
        %v4404 = vadd.f32 %v4253, 1.0
        %v4405 = vadd.f32 %v4255, 1.0
        %v4406 = vadd.f32 %v4257, 1.0
        %v4407 = vadd.f32 %v4259, 1.0
        %v4408 = vadd.f32 %v4261, 1.0
        %v4409 = vadd.f32 %v4263, 1.0
        %v4410 = vadd.f32 %v4265, 1.0
        %v4411 = vadd.f32 %v4267, 1.0
        %v4412 = vadd.f32 %v4269, 1.0
        %v4413 = vadd.f32 %v4271, 1.0
        %v4414 = vadd.f32 %v4273, 1.0
        %v4415 = vadd.f32 %v4275, 1.0
        %v4416 = vadd.f32 %v4277, 1.0
        %v4417 = vadd.f32 %v4279, 1.0
        %v4418 = vadd.f32 %v4281, 1.0
        %v4419 = vadd.f32 %v4283, 1.0
        %v4420 = vadd.f32 %v4285, 1.0
        %v4421 = vadd.f32 %v4287, 1.0
        %v4422 = vadd.f32 %v4289, 1.0
        %v4423 = vadd.f32 %v4291, 1.0
        %v4424 = vadd.f32 %v4293, 1.0
        %v4425 = vadd.f32 %v4295, 1.0
        %v4426 = vadd.f32 %v4297, 1.0
        %v4427 = vadd.f32 %v4299, 1.0
        %v4428 = vadd.f32 %v4301, 1.0
        %v4429 = vadd.f32 %v4303, 1.0
        %v4430 = vadd.f32 %v4305, 1.0
        %v4431 = vadd.f32 %v4307, 1.0
        %v4432 = vadd.f32 %v4309, 1.0
        %v4433 = vadd.f32 %v4311, 1.0
        %v4434 = vadd.f32 %v4313, 1.0
        %v4435 = vadd.f32 %v4315, 1.0
        %v4436 = vadd.f32 %v4317, 1.0
        %v4437 = vadd.f32 %v4319, 1.0
        %v4438 = vadd.f32 %v4321, 1.0
        %v4439 = vadd.f32 %v4323, 1.0
        %v4440 = vadd.f32 %v4325, 1.0
        %v4441 = vadd.f32 %v4327, 1.0
        %v4442 = vadd.f32 %v4329, 1.0
        %v4443 = vadd.f32 %v4331, 1.0
        %v4444 = vrcp.pop %v4332
        %v4445 = vmul.f32 1.0, %v4444
        %v4446 = vrcp.pop %v4333
        %v4447 = vmul.f32 1.0, %v4446
        %v4448 = vrcp.pop %v4334
        %v4449 = vmul.f32 1.0, %v4448
        %v4450 = vrcp.pop %v4335
        %v4451 = vmul.f32 1.0, %v4450
        %v4452 = vrcp.pop %v4336
        %v4453 = vmul.f32 1.0, %v4452
        %v4454 = vrcp.pop %v4337
        %v4455 = vmul.f32 1.0, %v4454
        %v4456 = vrcp.pop %v4338
        %v4457 = vmul.f32 1.0, %v4456
        %v4458 = vrcp.pop %v4339
        %v4459 = vmul.f32 1.0, %v4458
        %v4460 = vrcp.pop %v4340
        %v4461 = vmul.f32 1.0, %v4460
        %v4462 = vrcp.pop %v4341
        %v4463 = vmul.f32 1.0, %v4462
        %v4464 = vrcp.pop %v4342
        %v4465 = vmul.f32 1.0, %v4464
        %v4466 = vrcp.pop %v4343
        %v4467 = vmul.f32 1.0, %v4466
        %v4468 = vrcp.pop %v4344
        %v4469 = vmul.f32 1.0, %v4468
        %v4470 = vrcp.pop %v4345
        %v4471 = vmul.f32 1.0, %v4470
        %v4472 = vrcp.pop %v4346
        %v4473 = vmul.f32 1.0, %v4472
        %v4474 = vrcp.pop %v4347
        %v4475 = vmul.f32 1.0, %v4474
        %v4476 = vrcp.pop %v4348
        %v4477 = vmul.f32 1.0, %v4476
        %v4478 = vrcp.pop %v4349
        %v4479 = vmul.f32 1.0, %v4478
        %v4480 = vrcp.pop %v4350
        %v4481 = vmul.f32 1.0, %v4480
        %v4482 = vrcp.pop %v4351
        %v4483 = vmul.f32 1.0, %v4482
        %v4484 = vrcp.pop %v4352
        %v4485 = vmul.f32 1.0, %v4484
        %v4486 = vrcp.pop %v4353
        %v4487 = vmul.f32 1.0, %v4486
        %v4488 = vrcp.pop %v4354
        %v4489 = vmul.f32 1.0, %v4488
        %v4490 = vrcp.pop %v4355
        %v4491 = vmul.f32 1.0, %v4490
        %v4492 = vrcp.pop %v4356
        %v4493 = vmul.f32 1.0, %v4492
        %v4494 = vrcp.pop %v4357
        %v4495 = vmul.f32 1.0, %v4494
        %v4496 = vrcp.pop %v4358
        %v4497 = vmul.f32 1.0, %v4496
        %v4498 = vrcp.pop %v4359
        %v4499 = vmul.f32 1.0, %v4498
        %v4500 = vrcp.pop %v4360
        %v4501 = vmul.f32 1.0, %v4500
        %v4502 = vrcp.pop %v4361
        %v4503 = vmul.f32 1.0, %v4502
        %v4504 = vrcp.pop %v4362
        %v4505 = vmul.f32 1.0, %v4504
        %v4506 = vrcp.pop %v4363
        %v4507 = vmul.f32 1.0, %v4506
        %v4508 = vrcp.pop %v4364
        %v4509 = vmul.f32 1.0, %v4508
        %v4510 = vrcp.pop %v4365
        %v4511 = vmul.f32 1.0, %v4510
        %v4512 = vrcp.pop %v4366
        %v4513 = vmul.f32 1.0, %v4512
        %v4514 = vrcp.pop %v4367
        %v4515 = vmul.f32 1.0, %v4514
        %v4516 = vrcp.pop %v4368
        %v4517 = vmul.f32 1.0, %v4516
        %v4518 = vrcp.pop %v4369
        %v4519 = vmul.f32 1.0, %v4518
        %v4520 = vrcp.pop %v4370
        %v4521 = vmul.f32 1.0, %v4520
        %v4522 = vrcp.pop %v4371
        %v4523 = vmul.f32 1.0, %v4522
        %v4524 = vrcp.pop %v4372
        %v4525 = vmul.f32 1.0, %v4524
        %v4526 = vrcp.pop %v4373
        %v4527 = vmul.f32 1.0, %v4526
        %v4528 = vrcp.pop %v4374
        %v4529 = vmul.f32 1.0, %v4528
        %v4530 = vrcp.pop %v4375
        %v4531 = vmul.f32 1.0, %v4530
        %v4532 = vrcp.pop %v4376
        %v4533 = vmul.f32 1.0, %v4532
        %v4534 = vrcp.pop %v4377
        %v4535 = vmul.f32 1.0, %v4534
        %v4536 = vrcp.pop %v4378
        %v4537 = vmul.f32 1.0, %v4536
        %v4538 = vrcp.pop %v4379
        %v4539 = vmul.f32 1.0, %v4538
        %v4540 = vrcp.pop %v4380
        %v4541 = vmul.f32 1.0, %v4540
        %v4542 = vrcp.pop %v4381
        %v4543 = vmul.f32 1.0, %v4542
        %v4544 = vrcp.pop %v4382
        %v4545 = vmul.f32 1.0, %v4544
        %v4546 = vrcp.pop %v4383
        %v4547 = vmul.f32 1.0, %v4546
        %v4548 = vrcp.pop %v4384
        %v4549 = vmul.f32 1.0, %v4548
        %v4550 = vrcp.pop %v4385
        %v4551 = vmul.f32 1.0, %v4550
        %v4552 = vrcp.pop %v4386
        %v4553 = vmul.f32 1.0, %v4552
        %v4554 = vrcp.pop %v4387
        %v4555 = vmul.f32 1.0, %v4554
        %v4556 = vrcp.pop %v4388
        %v4557 = vmul.f32 1.0, %v4556
        %v4558 = vrcp.pop %v4389
        %v4559 = vmul.f32 1.0, %v4558
        %v4560 = vrcp.pop %v4390
        %v4561 = vmul.f32 1.0, %v4560
        %v4562 = vrcp.pop %v4391
        %v4563 = vmul.f32 1.0, %v4562
        %v4564 = vrcp.pop %v4392
        %v4565 = vmul.f32 1.0, %v4564
        %v4566 = vrcp.pop %v4393
        %v4567 = vmul.f32 1.0, %v4566
        %v4568 = vrcp.pop %v4394
        %v4569 = vmul.f32 1.0, %v4568
        %v4570 = vrcp.pop %v4395
        %v4571 = vmul.f32 1.0, %v4570
        %v4572 = vrcp.pop %v4396
        %v4573 = vmul.f32 1.0, %v4572
        %v4574 = vrcp.pop %v4397
        %v4575 = vmul.f32 1.0, %v4574
        %v4576 = vrcp.pop %v4398
        %v4577 = vmul.f32 1.0, %v4576
        %v4578 = vrcp.pop %v4399
        %v4579 = vmul.f32 1.0, %v4578
        %v4580 = vrcp.pop %v4400
        %v4581 = vmul.f32 1.0, %v4580
        %v4582 = vrcp.pop %v4401
        %v4583 = vmul.f32 1.0, %v4582
        %v4584 = vrcp.pop %v4402
        %v4585 = vmul.f32 1.0, %v4584
        %v4586 = vrcp.pop %v4403
        %v4587 = vmul.f32 1.0, %v4586
        %v4588 = vrcp.pop %v4404
        %v4589 = vmul.f32 1.0, %v4588
        %v4590 = vrcp.pop %v4405
        %v4591 = vmul.f32 1.0, %v4590
        %v4592 = vrcp.pop %v4406
        %v4593 = vmul.f32 1.0, %v4592
        %v4594 = vrcp.pop %v4407
        %v4595 = vmul.f32 1.0, %v4594
        %v4596 = vrcp.pop %v4408
        %v4597 = vmul.f32 1.0, %v4596
        %v4598 = vrcp.pop %v4409
        %v4599 = vmul.f32 1.0, %v4598
        %v4600 = vrcp.pop %v4410
        %v4601 = vmul.f32 1.0, %v4600
        %v4602 = vrcp.pop %v4411
        %v4603 = vmul.f32 1.0, %v4602
        %v4604 = vrcp.pop %v4412
        %v4605 = vmul.f32 1.0, %v4604
        %v4606 = vrcp.pop %v4413
        %v4607 = vmul.f32 1.0, %v4606
        %v4608 = vrcp.pop %v4414
        %v4609 = vmul.f32 1.0, %v4608
        %v4610 = vrcp.pop %v4415
        %v4611 = vmul.f32 1.0, %v4610
        %v4612 = vrcp.pop %v4416
        %v4613 = vmul.f32 1.0, %v4612
        %v4614 = vrcp.pop %v4417
        %v4615 = vmul.f32 1.0, %v4614
        %v4616 = vrcp.pop %v4418
        %v4617 = vmul.f32 1.0, %v4616
        %v4618 = vrcp.pop %v4419
        %v4619 = vmul.f32 1.0, %v4618
        %v4620 = vrcp.pop %v4420
        %v4621 = vmul.f32 1.0, %v4620
        %v4622 = vrcp.pop %v4421
        %v4623 = vmul.f32 1.0, %v4622
        %v4624 = vrcp.pop %v4422
        %v4625 = vmul.f32 1.0, %v4624
        %v4626 = vrcp.pop %v4423
        %v4627 = vmul.f32 1.0, %v4626
        %v4628 = vrcp.pop %v4424
        %v4629 = vmul.f32 1.0, %v4628
        %v4630 = vrcp.pop %v4425
        %v4631 = vmul.f32 1.0, %v4630
        %v4632 = vrcp.pop %v4426
        %v4633 = vmul.f32 1.0, %v4632
        %v4634 = vrcp.pop %v4427
        %v4635 = vmul.f32 1.0, %v4634
        %v4636 = vrcp.pop %v4428
        %v4637 = vmul.f32 1.0, %v4636
        %v4638 = vrcp.pop %v4429
        %v4639 = vmul.f32 1.0, %v4638
        %v4640 = vrcp.pop %v4430
        %v4641 = vmul.f32 1.0, %v4640
        %v4642 = vrcp.pop %v4431
        %v4643 = vmul.f32 1.0, %v4642
        %v4644 = vrcp.pop %v4432
        %v4645 = vmul.f32 1.0, %v4644
        %v4646 = vrcp.pop %v4433
        %v4647 = vmul.f32 1.0, %v4646
        %v4648 = vrcp.pop %v4434
        %v4649 = vmul.f32 1.0, %v4648
        %v4650 = vrcp.pop %v4435
        %v4651 = vmul.f32 1.0, %v4650
        %v4652 = vrcp.pop %v4436
        %v4653 = vmul.f32 1.0, %v4652
        %v4654 = vrcp.pop %v4437
        %v4655 = vmul.f32 1.0, %v4654
        %v4656 = vrcp.pop %v4438
        %v4657 = vmul.f32 1.0, %v4656
        %v4658 = vrcp.pop %v4439
        %v4659 = vmul.f32 1.0, %v4658
        %v4660 = vrcp.pop %v4440
        %v4661 = vmul.f32 1.0, %v4660
        %v4662 = vrcp.pop %v4441
        %v4663 = vmul.f32 1.0, %v4662
        %v4664 = vrcp.pop %v4442
        %v4665 = vmul.f32 1.0, %v4664
        %v4666 = vrcp.pop %v4443
        %v4667 = vmul.f32 1.0, %v4666
        %v4668 = vpack.c.bf16 %v4459, %v4445
        %v4669 = vpack.c.bf16 %v4461, %v4447
        %v4670 = vpack.c.bf16 %v4463, %v4449
        %v4671 = vpack.c.bf16 %v4465, %v4451
        %v4672 = vpack.c.bf16 %v4467, %v4453
        %v4673 = vpack.c.bf16 %v4469, %v4455
        %v4674 = vpack.c.bf16 %v4471, %v4457
        %v4675 = vpack.c.bf16 %v4487, %v4473
        %v4676 = vpack.c.bf16 %v4489, %v4475
        %v4677 = vpack.c.bf16 %v4491, %v4477
        %v4678 = vpack.c.bf16 %v4493, %v4479
        %v4679 = vpack.c.bf16 %v4495, %v4481
        %v4680 = vpack.c.bf16 %v4497, %v4483
        %v4681 = vpack.c.bf16 %v4499, %v4485
        %v4682 = vpack.c.bf16 %v4515, %v4501
        %v4683 = vpack.c.bf16 %v4517, %v4503
        %v4684 = vpack.c.bf16 %v4519, %v4505
        %v4685 = vpack.c.bf16 %v4521, %v4507
        %v4686 = vpack.c.bf16 %v4523, %v4509
        %v4687 = vpack.c.bf16 %v4525, %v4511
        %v4688 = vpack.c.bf16 %v4527, %v4513
        %v4689 = vpack.c.bf16 %v4543, %v4529
        %v4690 = vpack.c.bf16 %v4545, %v4531
        %v4691 = vpack.c.bf16 %v4547, %v4533
        %v4692 = vpack.c.bf16 %v4549, %v4535
        %v4693 = vpack.c.bf16 %v4551, %v4537
        %v4694 = vpack.c.bf16 %v4553, %v4539
        %v4695 = vpack.c.bf16 %v4555, %v4541
        %v4696 = vpack.c.bf16 %v4571, %v4557
        %v4697 = vpack.c.bf16 %v4573, %v4559
        %v4698 = vpack.c.bf16 %v4575, %v4561
        %v4699 = vpack.c.bf16 %v4577, %v4563
        %v4700 = vpack.c.bf16 %v4579, %v4565
        %v4701 = vpack.c.bf16 %v4581, %v4567
        %v4702 = vpack.c.bf16 %v4583, %v4569
        %v4703 = vpack.c.bf16 %v4599, %v4585
        %v4704 = vpack.c.bf16 %v4601, %v4587
        %v4705 = vpack.c.bf16 %v4603, %v4589
        %v4706 = vpack.c.bf16 %v4605, %v4591
        %v4707 = vpack.c.bf16 %v4607, %v4593
        %v4708 = vpack.c.bf16 %v4609, %v4595
        %v4709 = vpack.c.bf16 %v4611, %v4597
        %v4710 = vpack.c.bf16 %v4627, %v4613
        %v4711 = vpack.c.bf16 %v4629, %v4615
        %v4712 = vpack.c.bf16 %v4631, %v4617
        %v4713 = vpack.c.bf16 %v4633, %v4619
        %v4714 = vpack.c.bf16 %v4635, %v4621
        %v4715 = vpack.c.bf16 %v4637, %v4623
        %v4716 = vpack.c.bf16 %v4639, %v4625
        %v4717 = vpack.c.bf16 %v4655, %v4641
        %v4718 = vpack.c.bf16 %v4657, %v4643
        %v4719 = vpack.c.bf16 %v4659, %v4645
        %v4720 = vpack.c.bf16 %v4661, %v4647
        %v4721 = vpack.c.bf16 %v4663, %v4649
        %v4722 = vpack.c.bf16 %v4665, %v4651
        %v4723 = vpack.c.bf16 %v4667, %v4653
        %v4780 = vunpack.c.l.b16 %v4668
        %v4781 = vunpack.c.l.b16 %v4669
        %v4782 = vunpack.c.l.b16 %v4670
        %v4783 = vunpack.c.l.b16 %v4671
        %v4784 = vunpack.c.l.b16 %v4672
        %v4785 = vunpack.c.l.b16 %v4673
        %v4786 = vunpack.c.l.b16 %v4674
        %v4787 = vunpack.c.h.b16 %v4668
        %v4788 = vunpack.c.h.b16 %v4669
        %v4789 = vunpack.c.h.b16 %v4670
        %v4790 = vunpack.c.h.b16 %v4671
        %v4791 = vunpack.c.h.b16 %v4672
        %v4792 = vunpack.c.h.b16 %v4673
        %v4793 = vunpack.c.h.b16 %v4674
        %v4794 = vunpack.c.l.b16 %v4675
        %v4795 = vunpack.c.l.b16 %v4676
        %v4796 = vunpack.c.l.b16 %v4677
        %v4797 = vunpack.c.l.b16 %v4678
        %v4798 = vunpack.c.l.b16 %v4679
        %v4799 = vunpack.c.l.b16 %v4680
        %v4800 = vunpack.c.l.b16 %v4681
        %v4801 = vunpack.c.h.b16 %v4675
        %v4802 = vunpack.c.h.b16 %v4676
        %v4803 = vunpack.c.h.b16 %v4677
        %v4804 = vunpack.c.h.b16 %v4678
        %v4805 = vunpack.c.h.b16 %v4679
        %v4806 = vunpack.c.h.b16 %v4680
        %v4807 = vunpack.c.h.b16 %v4681
        %v4808 = vunpack.c.l.b16 %v4682
        %v4809 = vunpack.c.l.b16 %v4683
        %v4810 = vunpack.c.l.b16 %v4684
        %v4811 = vunpack.c.l.b16 %v4685
        %v4812 = vunpack.c.l.b16 %v4686
        %v4813 = vunpack.c.l.b16 %v4687
        %v4814 = vunpack.c.l.b16 %v4688
        %v4815 = vunpack.c.h.b16 %v4682
        %v4816 = vunpack.c.h.b16 %v4683
        %v4817 = vunpack.c.h.b16 %v4684
        %v4818 = vunpack.c.h.b16 %v4685
        %v4819 = vunpack.c.h.b16 %v4686
        %v4820 = vunpack.c.h.b16 %v4687
        %v4821 = vunpack.c.h.b16 %v4688
        %v4822 = vunpack.c.l.b16 %v4689
        %v4823 = vunpack.c.l.b16 %v4690
        %v4824 = vunpack.c.l.b16 %v4691
        %v4825 = vunpack.c.l.b16 %v4692
        %v4826 = vunpack.c.l.b16 %v4693
        %v4827 = vunpack.c.l.b16 %v4694
        %v4828 = vunpack.c.l.b16 %v4695
        %v4829 = vunpack.c.h.b16 %v4689
        %v4830 = vunpack.c.h.b16 %v4690
        %v4831 = vunpack.c.h.b16 %v4691
        %v4832 = vunpack.c.h.b16 %v4692
        %v4833 = vunpack.c.h.b16 %v4693
        %v4834 = vunpack.c.h.b16 %v4694
        %v4835 = vunpack.c.h.b16 %v4695
        %v4836 = vunpack.c.l.b16 %v4696
        %v4837 = vunpack.c.l.b16 %v4697
        %v4838 = vunpack.c.l.b16 %v4698
        %v4839 = vunpack.c.l.b16 %v4699
        %v4840 = vunpack.c.l.b16 %v4700
        %v4841 = vunpack.c.l.b16 %v4701
        %v4842 = vunpack.c.l.b16 %v4702
        %v4843 = vunpack.c.h.b16 %v4696
        %v4844 = vunpack.c.h.b16 %v4697
        %v4845 = vunpack.c.h.b16 %v4698
        %v4846 = vunpack.c.h.b16 %v4699
        %v4847 = vunpack.c.h.b16 %v4700
        %v4848 = vunpack.c.h.b16 %v4701
        %v4849 = vunpack.c.h.b16 %v4702
        %v4850 = vunpack.c.l.b16 %v4703
        %v4851 = vunpack.c.l.b16 %v4704
        %v4852 = vunpack.c.l.b16 %v4705
        %v4853 = vunpack.c.l.b16 %v4706
        %v4854 = vunpack.c.l.b16 %v4707
        %v4855 = vunpack.c.l.b16 %v4708
        %v4856 = vunpack.c.l.b16 %v4709
        %v4857 = vunpack.c.h.b16 %v4703
        %v4858 = vunpack.c.h.b16 %v4704
        %v4859 = vunpack.c.h.b16 %v4705
        %v4860 = vunpack.c.h.b16 %v4706
        %v4861 = vunpack.c.h.b16 %v4707
        %v4862 = vunpack.c.h.b16 %v4708
        %v4863 = vunpack.c.h.b16 %v4709
        %v4864 = vunpack.c.l.b16 %v4710
        %v4865 = vunpack.c.l.b16 %v4711
        %v4866 = vunpack.c.l.b16 %v4712
        %v4867 = vunpack.c.l.b16 %v4713
        %v4868 = vunpack.c.l.b16 %v4714
        %v4869 = vunpack.c.l.b16 %v4715
        %v4870 = vunpack.c.l.b16 %v4716
        %v4871 = vunpack.c.h.b16 %v4710
        %v4872 = vunpack.c.h.b16 %v4711
        %v4873 = vunpack.c.h.b16 %v4712
        %v4874 = vunpack.c.h.b16 %v4713
        %v4875 = vunpack.c.h.b16 %v4714
        %v4876 = vunpack.c.h.b16 %v4715
        %v4877 = vunpack.c.h.b16 %v4716
        %v4878 = vunpack.c.l.b16 %v4717
        %v4879 = vunpack.c.l.b16 %v4718
        %v4880 = vunpack.c.l.b16 %v4719
        %v4881 = vunpack.c.l.b16 %v4720
        %v4882 = vunpack.c.l.b16 %v4721
        %v4883 = vunpack.c.l.b16 %v4722
        %v4884 = vunpack.c.l.b16 %v4723
        %v4885 = vunpack.c.h.b16 %v4717
        %v4886 = vunpack.c.h.b16 %v4718
        %v4887 = vunpack.c.h.b16 %v4719
        %v4888 = vunpack.c.h.b16 %v4720
        %v4889 = vunpack.c.h.b16 %v4721
        %v4890 = vunpack.c.h.b16 %v4722
        %v4891 = vunpack.c.h.b16 %v4723
        %v4892 = vpack.c.b16 %v4781, %v4780
        %v4893 = vpack.c.b16 %v4783, %v4782
        %v4894 = vpack.c.b16 %v4785, %v4784
        %v4895 = vpack.c.b16 %v4786, %v4786
        %v4896 = vpack.c.b16 %v4788, %v4787
        %v4897 = vpack.c.b16 %v4790, %v4789
        %v4898 = vpack.c.b16 %v4792, %v4791
        %v4899 = vpack.c.b16 %v4793, %v4793
        %v4900 = vpack.c.b16 %v4795, %v4794
        %v4901 = vpack.c.b16 %v4797, %v4796
        %v4902 = vpack.c.b16 %v4799, %v4798
        %v4903 = vpack.c.b16 %v4800, %v4800
        %v4904 = vpack.c.b16 %v4802, %v4801
        %v4905 = vpack.c.b16 %v4804, %v4803
        %v4906 = vpack.c.b16 %v4806, %v4805
        %v4907 = vpack.c.b16 %v4807, %v4807
        %v4908 = vpack.c.b16 %v4809, %v4808
        %v4909 = vpack.c.b16 %v4811, %v4810
        %v4910 = vpack.c.b16 %v4813, %v4812
        %v4911 = vpack.c.b16 %v4814, %v4814
        %v4912 = vpack.c.b16 %v4816, %v4815
        %v4913 = vpack.c.b16 %v4818, %v4817
        %v4914 = vpack.c.b16 %v4820, %v4819
        %v4915 = vpack.c.b16 %v4821, %v4821
        %v4916 = vpack.c.b16 %v4823, %v4822
        %v4917 = vpack.c.b16 %v4825, %v4824
        %v4918 = vpack.c.b16 %v4827, %v4826
        %v4919 = vpack.c.b16 %v4828, %v4828
        %v4920 = vpack.c.b16 %v4830, %v4829
        %v4921 = vpack.c.b16 %v4832, %v4831
        %v4922 = vpack.c.b16 %v4834, %v4833
        %v4923 = vpack.c.b16 %v4835, %v4835
        %v4924 = vpack.c.b16 %v4837, %v4836
        %v4925 = vpack.c.b16 %v4839, %v4838
        %v4926 = vpack.c.b16 %v4841, %v4840
        %v4927 = vpack.c.b16 %v4842, %v4842
        %v4928 = vpack.c.b16 %v4844, %v4843
        %v4929 = vpack.c.b16 %v4846, %v4845
        %v4930 = vpack.c.b16 %v4848, %v4847
        %v4931 = vpack.c.b16 %v4849, %v4849
        %v4932 = vpack.c.b16 %v4851, %v4850
        %v4933 = vpack.c.b16 %v4853, %v4852
        %v4934 = vpack.c.b16 %v4855, %v4854
        %v4935 = vpack.c.b16 %v4856, %v4856
        %v4936 = vpack.c.b16 %v4858, %v4857
        %v4937 = vpack.c.b16 %v4860, %v4859
        %v4938 = vpack.c.b16 %v4862, %v4861
        %v4939 = vpack.c.b16 %v4863, %v4863
        %v4940 = vpack.c.b16 %v4865, %v4864
        %v4941 = vpack.c.b16 %v4867, %v4866
        %v4942 = vpack.c.b16 %v4869, %v4868
        %v4943 = vpack.c.b16 %v4870, %v4870
        %v4944 = vpack.c.b16 %v4872, %v4871
        %v4945 = vpack.c.b16 %v4874, %v4873
        %v4946 = vpack.c.b16 %v4876, %v4875
        %v4947 = vpack.c.b16 %v4877, %v4877
        %v4948 = vpack.c.b16 %v4879, %v4878
        %v4949 = vpack.c.b16 %v4881, %v4880
        %v4950 = vpack.c.b16 %v4883, %v4882
        %v4951 = vpack.c.b16 %v4884, %v4884
        %v4952 = vpack.c.b16 %v4886, %v4885
        %v4953 = vpack.c.b16 %v4888, %v4887
        %v4954 = vpack.c.b16 %v4890, %v4889
        %v4955 = vpack.c.b16 %v4891, %v4891
        %5020 = vst [vmem:[%s650] sm:$0xff] %v4892
        %5021 = vst [vmem:[%s650 + $0x8] sm:$0xff] %v4893
        %5022 = vst [vmem:[%s650 + $0x10] sm:$0xff] %v4894
        %5023 = vst [vmem:[%s650 + $0x18] sm:$0xf] %v4895
        %5024 = vst [vmem:[%s650 + $0x1c] sm:$0xff] %v4896
        %5025 = vst [vmem:[%s650 + $0x24] sm:$0xff] %v4897
        %5026 = vst [vmem:[%s650 + $0x2c] sm:$0xff] %v4898
        %5027 = vst [vmem:[%s650 + $0x34] sm:$0xf] %v4899
        %5028 = vst [vmem:[%s650 + $0x38] sm:$0xff] %v4900
        %5029 = vst [vmem:[%s650 + $0x40] sm:$0xff] %v4901
        %5030 = vst [vmem:[%s650 + $0x48] sm:$0xff] %v4902
        %5031 = vst [vmem:[%s650 + $0x50] sm:$0xf] %v4903
        %5032 = vst [vmem:[%s650 + $0x54] sm:$0xff] %v4904
        %5033 = vst [vmem:[%s650 + $0x5c] sm:$0xff] %v4905
        %5034 = vst [vmem:[%s650 + $0x64] sm:$0xff] %v4906
        %5035 = vst [vmem:[%s650 + $0x6c] sm:$0xf] %v4907
        %5036 = vst [vmem:[%s650 + $0x70] sm:$0xff] %v4908
        %5037 = vst [vmem:[%s650 + $0x78] sm:$0xff] %v4909
        %5038 = vst [vmem:[%s650 + $0x80] sm:$0xff] %v4910
        %5039 = vst [vmem:[%s650 + $0x88] sm:$0xf] %v4911
        %5040 = vst [vmem:[%s650 + $0x8c] sm:$0xff] %v4912
        %5041 = vst [vmem:[%s650 + $0x94] sm:$0xff] %v4913
        %5042 = vst [vmem:[%s650 + $0x9c] sm:$0xff] %v4914
        %5043 = vst [vmem:[%s650 + $0xa4] sm:$0xf] %v4915
        %5044 = vst [vmem:[%s650 + $0xa8] sm:$0xff] %v4916
        %5045 = vst [vmem:[%s650 + $0xb0] sm:$0xff] %v4917
        %5046 = vst [vmem:[%s650 + $0xb8] sm:$0xff] %v4918
        %5047 = vst [vmem:[%s650 + $0xc0] sm:$0xf] %v4919
        %5048 = vst [vmem:[%s650 + $0xc4] sm:$0xff] %v4920
        %5049 = vst [vmem:[%s650 + $0xcc] sm:$0xff] %v4921
        %5050 = vst [vmem:[%s650 + $0xd4] sm:$0xff] %v4922
        %5051 = vst [vmem:[%s650 + $0xdc] sm:$0xf] %v4923
        %5052 = vst [vmem:[%s650 + $0xe0] sm:$0xff] %v4924
        %5053 = vst [vmem:[%s650 + $0xe8] sm:$0xff] %v4925
        %5054 = vst [vmem:[%s650 + $0xf0] sm:$0xff] %v4926
        %5055 = vst [vmem:[%s650 + $0xf8] sm:$0xf] %v4927
        %5056 = vst [vmem:[%s650 + $0xfc] sm:$0xff] %v4928
        %5057 = vst [vmem:[%s650 + $0x104] sm:$0xff] %v4929
        %5058 = vst [vmem:[%s650 + $0x10c] sm:$0xff] %v4930
        %5059 = vst [vmem:[%s650 + $0x114] sm:$0xf] %v4931
        %5060 = vst [vmem:[%s650 + $0x118] sm:$0xff] %v4932
        %5061 = vst [vmem:[%s650 + $0x120] sm:$0xff] %v4933
        %5062 = vst [vmem:[%s650 + $0x128] sm:$0xff] %v4934
        %5063 = vst [vmem:[%s650 + $0x130] sm:$0xf] %v4935
        %5064 = vst [vmem:[%s650 + $0x134] sm:$0xff] %v4936
        %5065 = vst [vmem:[%s650 + $0x13c] sm:$0xff] %v4937
        %5066 = vst [vmem:[%s650 + $0x144] sm:$0xff] %v4938
        %5067 = vst [vmem:[%s650 + $0x14c] sm:$0xf] %v4939
        %5068 = vst [vmem:[%s650 + $0x150] sm:$0xff] %v4940
        %5069 = vst [vmem:[%s650 + $0x158] sm:$0xff] %v4941
        %5070 = vst [vmem:[%s650 + $0x160] sm:$0xff] %v4942
        %5071 = vst [vmem:[%s650 + $0x168] sm:$0xf] %v4943
        %5072 = vst [vmem:[%s650 + $0x16c] sm:$0xff] %v4944
        %5073 = vst [vmem:[%s650 + $0x174] sm:$0xff] %v4945
        %5074 = vst [vmem:[%s650 + $0x17c] sm:$0xff] %v4946
        %5075 = vst [vmem:[%s650 + $0x184] sm:$0xf] %v4947
        %5076 = vst [vmem:[%s650 + $0x188] sm:$0xff] %v4948
        %5077 = vst [vmem:[%s650 + $0x190] sm:$0xff] %v4949
        %5078 = vst [vmem:[%s650 + $0x198] sm:$0xff] %v4950
        %5079 = vst [vmem:[%s650 + $0x1a0] sm:$0xf] %v4951
        %5080 = vst [vmem:[%s650 + $0x1a4] sm:$0xff] %v4952
        %5081 = vst [vmem:[%s650 + $0x1ac] sm:$0xff] %v4953
        %5082 = vst [vmem:[%s650 + $0x1b4] sm:$0xff] %v4954
        %5083 = vst [vmem:[%s650 + $0x1bc] sm:$0xf] %v4955
        %s5084 = sand.u32 %s449, 1
        %s5085 = scalar_lea.sflag [#allocation4], %s5084
        %s5086 = sand.u32 %s449, 1
        %s5087 = smul.addr %s5086, 448
        %s5088 = scalar_lea.vmem [#allocation8], %s5087
        // Predicated region
        $region109: #{tpu_custom_call.1} parent=95 // pred_check
          %p5089 = pneg %p459
        $region110: #{tpu_custom_call.1} parent=95 // pred_check_branch
          %5091 = sbr.rel (%p5089) target = $region112
        $region111: #{tpu_custom_call.1} parent=95 // pred_region
          %s5092 = smul.u32 16, %s37
          %s5094 = ssub.s32 7168, 7168
          %5095 = vsyncadd %s5085, %s5094
          %s5096 = smul.addr %s5092, 7
          %s5097 = smul.addr %s5096, 64
          %s5098 = scalar_lea.hbm %s19, %s5097
          %s5099 = sshll.u32 %s5088, 4
          %s5100 = int_to_ptr.vmem [resolvable:$true] %s5099
          %5105 = dma.vmem_to_hbm [thread:$0]  %s5100, 7168, %s5098, %s5085, 448, 448, 28
        $region112: #{tpu_custom_call.1} parent=95 // pred_fallthru
          _
      $region96: #{tpu_custom_call.1} parent=5 // pred_fallthru
        _
      %p5106 = scmp.le.s32.totalorder 2, %s32
      // Predicated region
      $region113: #{tpu_custom_call.1} parent=5 // pred_check
        %p5107 = pneg %p5106
      $region114: #{tpu_custom_call.1} parent=5 // pred_check_branch
        %5109 = sbr.rel (%p5107) target = $region116
      $region115: #{tpu_custom_call.1} parent=5 // pred_region
        %s5110 = ssub.s32 %s32, 2
        // Predicated region
        $region117: #{tpu_custom_call.1} parent=115 // pred_check
          %p5111 = pneg %p465
        $region118: #{tpu_custom_call.1} parent=115 // pred_check_branch
          %5113 = sbr.rel (%p5111) target = $region120
        $region119: #{tpu_custom_call.1} parent=115 // pred_region
          %s5114 = sand.u32 %s450, 1
          %s5115 = scalar_lea.sflag [#allocation4], %s5114
          %s5116 = sand.u32 %s450, 1
          %s5117 = smul.addr %s5116, 448
          %s5118 = scalar_lea.vmem [#allocation8], %s5117
          %5119 = dma.done %s5115, 7168
        $region120: #{tpu_custom_call.1} parent=115 // pred_fallthru
          _
      $region116: #{tpu_custom_call.1} parent=5 // pred_fallthru
        _
    $region6: #{tpu_custom_call.1} parent=1 // loop_footer
      %s36 = sadd.s32 1, %s32
    $region7: #{tpu_custom_call.1} parent=1 // loop_footer_branch
      %31 = sbr.rel target = $region3
    $region8: #{tpu_custom_call.1} parent=1 // loop_exit
      _
    %5120 = vsyncpa [#allocation3], 1
    %s5121 = scalar_lea.sflag [#allocation3], 1
    %5122 = vsyncpa %s5121, 1
    %5123 = vsyncpa [#allocation6], 1
    %5124 = vsyncpa [#allocation4], 1
    %s5125 = scalar_lea.sflag [#allocation4], 1
    %5126 = vsyncpa %s5125, 1

</llo_original>
